<compile_context>
chip_gen: v5e
topology: v5e:2x2
jax: 0.10.0
libtpu: 0.0.40
codegen_flags: <defaults>
</compile_context>

<pallas_src>
import jax
import jax.numpy as jnp
from jax import lax
from jax.experimental import pallas as pl
from jax.experimental.pallas import tpu as pltpu

# ---- constants from the PyTorch file ----
C_POS = 40.0
DIM_H = 50                 # per-direction LSTM hidden size
L_HOPS = 2
CLASS_NUM = 3
DIM_W = 300
NK = 50                    # conv output channels
KS = 3                     # conv kernel size "s"
D = 2 * DIM_H              # 100: bi-LSTM feature width (PyTorch layout)
G = 4 * DIM_H              # 200: raw gate rows per direction

# ---- packed / padded TPU layout ----
HP = 64                    # DIM_H padded to 64 -> aligned gate slices
DP = 2 * HP                # 128: packed bi-feature width (one full lane tile)
GF = 4 * HP                # 256: padded gates per direction
NG = 2 * GF                # 512: both directions, lane-dense projection width


def _round_up(x, m):
    return ((x + m - 1) // m) * m


# ============================================================================
# Kernel 1: tiled matmul with fused bias (LSTM input projections, both
# directions / all gates at once).  bf16 operands, f32 accumulation + bias.
# ============================================================================
def _proj_kernel(x_ref, w_ref, b_ref, o_ref):
    o_ref[...] = (jnp.dot(x_ref[...], w_ref[...],
                          preferred_element_type=jnp.float32) + b_ref[...])


def matmul_bias(x, w, b, *, tm=512):
    M, K = x.shape
    N = w.shape[1]
    if M <= tm:
        Mp = _round_up(M, 8)
        tm = Mp
    else:
        Mp = _round_up(M, tm)
    if Mp != M:
        x = jnp.pad(x, ((0, Mp - M), (0, 0)))
    out = pl.pallas_call(
        _proj_kernel,
        out_shape=jax.ShapeDtypeStruct((Mp, N), jnp.float32),
        grid=(Mp // tm,),
        in_specs=[pl.BlockSpec((tm, K), lambda i: (i, 0)),
                  pl.BlockSpec((K, N), lambda i: (0, 0)),
                  pl.BlockSpec((1, N), lambda i: (0, 0))],
        out_specs=pl.BlockSpec((tm, N), lambda i: (i, 0)),
        compiler_params=pltpu.CompilerParams(
            dimension_semantics=("parallel",)),
    )(x, w, b)
    return out[:M] if Mp != M else out


# ============================================================================
# Kernel 2: fused fwd+bwd LSTM recurrence.  grid=(1,); time loop lives inside
# the kernel (fori_loop), h/c carried as values, ONE (B,128)@(128,512) bf16
# matmul per step.  Output (T, B, 128) packed as [h_f (0:64) | h_b (64:128)].
# ============================================================================
def _bilstm_kernel(x_ref, whh_ref, o_ref):
    T, B, _ = x_ref.shape

    def cell(g, c):
        i = jax.nn.sigmoid(g[:, 0:HP])
        f = jax.nn.sigmoid(g[:, HP:2 * HP])
        gg = jnp.tanh(g[:, 2 * HP:3 * HP])
        o = jax.nn.sigmoid(g[:, 3 * HP:4 * HP])
        c_new = f * c + i * gg
        return o * jnp.tanh(c_new), c_new

    def step(t, carry):
        h_f, c_f, h_b, c_b = carry
        h_cat = jnp.concatenate([h_f, h_b], axis=-1).astype(jnp.bfloat16)  # (B, 128)
        rec = jnp.dot(h_cat, whh_ref[...],
                      preferred_element_type=jnp.float32)                   # (B, 512)
        g_f = x_ref[t, :, 0:GF] + rec[:, 0:GF]
        g_b = x_ref[T - 1 - t, :, GF:NG] + rec[:, GF:NG]
        h_f, c_f = cell(g_f, c_f)
        h_b, c_b = cell(g_b, c_b)
        o_ref[t, :, 0:HP] = h_f
        o_ref[T - 1 - t, :, HP:DP] = h_b
        return h_f, c_f, h_b, c_b

    z = jnp.zeros((B, HP), jnp.float32)
    lax.fori_loop(0, T, step, (z, z, z, z))


def lstm_recurrence(x_gates, whh):
    # x_gates: (T, B, 512) f32 pre-projected gates (biases folded), whh: (128, 512) bf16
    T, B, _ = x_gates.shape
    return pl.pallas_call(
        _bilstm_kernel,
        out_shape=jax.ShapeDtypeStruct((T, B, DP), jnp.float32),
        grid=(1,),
        in_specs=[pl.BlockSpec((T, B, NG), lambda i: (0, 0, 0)),
                  pl.BlockSpec((DP, NG), lambda i: (0, 0))],
        out_specs=pl.BlockSpec((T, B, DP), lambda i: (0, 0, 0)),
        compiler_params=pltpu.CompilerParams(
            dimension_semantics=("arbitrary",)),
    )(x_gates, whh)


def bilstm(tokens, embedding, lp):
    """tokens: (B, T) int32 -> packed bi-LSTM states (B, T, 128) f32."""
    B, T = tokens.shape
    # TODO(synk): embedding row-gather stays in XLA (no clean Pallas gather here).
    emb_t = jnp.take(embedding, tokens.T, axis=0)              # (T, B, dim_w) bf16
    gates = matmul_bias(emb_t.reshape(T * B, DIM_W), lp["w_cat"], lp["b_cat"])
    h = lstm_recurrence(gates.reshape(T, B, NG), lp["whh"])    # (T, B, 128)
    return jnp.transpose(h, (1, 0, 2))                         # (B, T, 128)


# ============================================================================
# Kernel 3 (fused): L-hop CPT transform + position weighting + conv1d(k=3,
# pad=1) + global max-pool + final linear.  One batch block per grid step.
# ============================================================================
def _core_conv_pred_kernel(sent_ref, asp_ref, aidx_ref, alen_ref, slen_ref,
                           wt_w1_ref, wt_w2_ref, wt_b_ref,
                           wtr_w_ref, wtr_b_ref,
                           conv_w_ref, conv_b_ref,
                           pred_w_ref, pred_b_ref,
                           out_ref, sent_sl, ri_sl):
    bblk, n, _ = sent_ref.shape
    rows = bblk * n
    dn = (((1,), (1,)), ((), ()))                 # contract last dims: x @ y.T

    # working slab (flattened, lane-dense) kept in VMEM across hops
    sent_sl[...] = sent_ref[...].reshape(rows, DP)

    # position weights (Convolution_Feature_Extractor), computed once per block
    i_pos = lax.broadcasted_iota(jnp.int32, (bblk, n, 1), 1).astype(jnp.float32)
    a_idx = aidx_ref[...]
    a_end = a_idx + alen_ref[...]
    s_len = slen_ref[...]
    pos = jnp.where(i_pos < a_end, 1.0 - (a_end - i_pos) / C_POS,
                    jnp.where(i_pos < s_len, 1.0 - (i_pos - a_idx) / C_POS, 0.0))

    wt_w1 = wt_w1_ref[...]                        # bf16 (128, 128)
    wt_w2 = wt_w2_ref[...]                        # bf16 (128, 128)
    wt_b = wt_b_ref[...]                          # f32  (1, 128)
    wtr_w = wtr_w_ref[...]                        # f32  (1, 128)
    wtr_b = wtr_b_ref[...]                        # f32  (1, 1)

    for _ in range(L_HOPS):
        # ---- per-batch attention (only scores + softmax + ri stay in the loop) ----
        @pl.loop(0, bblk)
        def _(bl):
            start = bl * n
            if n % 8 == 0:
                start = pl.multiple_of(start, 8)
            sent_b = sent_sl[pl.ds(start, n), :].astype(jnp.bfloat16)   # (n, 128)
            asp_b = asp_ref[bl].astype(jnp.bfloat16)                    # (m, 128)
            scores = lax.dot_general(sent_b, asp_b, dn,
                                     preferred_element_type=jnp.float32)  # (n, m)
            scores = scores - jnp.max(scores, axis=-1, keepdims=True)
            e = jnp.exp(scores)
            f = e * pl.reciprocal(jnp.sum(e, axis=-1, keepdims=True), approx=True)
            ri = jnp.dot(f.astype(jnp.bfloat16), asp_b,
                         preferred_element_type=jnp.float32)               # (n, 128)
            ri_sl[pl.ds(start, n), :] = ri

        # ---- hoisted shared-weight math on the whole (rows, 128) slab ----
        sent2d = sent_sl[...]
        s_bf = sent2d.astype(jnp.bfloat16)
        hi = jnp.maximum(
            jnp.dot(s_bf, wt_w1, preferred_element_type=jnp.float32)
            + jnp.dot(ri_sl[...].astype(jnp.bfloat16), wt_w2,
                      preferred_element_type=jnp.float32)
            + wt_b, 0.0)
        ti = jax.nn.sigmoid(jnp.sum(sent2d * wtr_w, axis=-1, keepdims=True) + wtr_b)
        new_sent = sent2d * (1.0 - ti) + hi * ti
        new_sent = (new_sent.reshape(bblk, n, DP) * pos).reshape(rows, DP)
        sent_sl[...] = new_sent

    # ---- conv1d(k=3, pad=1) as 3 per-tap matmuls + XLU rolls + max-pool + predict ----
    s_bf = sent_sl[...].astype(jnp.bfloat16)
    y0 = jnp.dot(s_bf, conv_w_ref[0], preferred_element_type=jnp.float32)  # tap -> x[n-1]
    y1 = jnp.dot(s_bf, conv_w_ref[1], preferred_element_type=jnp.float32)  # tap -> x[n]
    y2 = jnp.dot(s_bf, conv_w_ref[2], preferred_element_type=jnp.float32)  # tap -> x[n+1]
    tpos = lax.broadcasted_iota(jnp.int32, (bblk, n, 1), 1)
    keep0 = jnp.where(tpos == 0, 0.0, 1.0).reshape(rows, 1)      # zero wrapped/boundary rows
    keep2 = jnp.where(tpos == n - 1, 0.0, 1.0).reshape(rows, 1)
    conv = (pltpu.roll(y0, 1, 0) * keep0 + y1
            + pltpu.roll(y2, rows - 1, 0) * keep2 + conv_b_ref[...])       # (rows, 128)
    pooled = jnp.max(conv.reshape(bblk, n, DP), axis=1)                    # (bblk, 128)
    pred = jnp.dot(pooled.astype(jnp.bfloat16), pred_w_ref[...],
                   preferred_element_type=jnp.float32) + pred_b_ref[...]
    out_ref[...] = pred                                                    # one dense store


def core_conv_predict(sent, asp, aidx, alen, slen, prep):
    B, N, _ = sent.shape
    M = asp.shape[1]
    bblk = B if B <= 8 else 8
    Bp = _round_up(B, bblk)
    if Bp != B:
        pad = Bp - B
        sent = jnp.pad(sent, ((0, pad), (0, 0), (0, 0)))
        asp = jnp.pad(asp, ((0, pad), (0, 0), (0, 0)))
        aidx = jnp.pad(aidx, (0, pad))
        alen = jnp.pad(alen, (0, pad))
        slen = jnp.pad(slen, (0, pad))
    aidx = aidx.reshape(Bp, 1, 1)
    alen = alen.reshape(Bp, 1, 1)
    slen = slen.reshape(Bp, 1, 1)
    out = pl.pallas_call(
        _core_conv_pred_kernel,
        out_shape=jax.ShapeDtypeStruct((Bp, DP), jnp.float32),
        grid=(Bp // bblk,),
        in_specs=[
            pl.BlockSpec((bblk, N, DP), lambda b: (b, 0, 0)),
            pl.BlockSpec((bblk, M, DP), lambda b: (b, 0, 0)),
            pl.BlockSpec((bblk, 1, 1), lambda b: (b, 0, 0)),
            pl.BlockSpec((bblk, 1, 1), lambda b: (b, 0, 0)),
            pl.BlockSpec((bblk, 1, 1), lambda b: (b, 0, 0)),
            pl.BlockSpec((DP, DP), lambda b: (0, 0)),
            pl.BlockSpec((DP, DP), lambda b: (0, 0)),
            pl.BlockSpec((1, DP), lambda b: (0, 0)),
            pl.BlockSpec((1, DP), lambda b: (0, 0)),
            pl.BlockSpec((1, 1), lambda b: (0, 0)),
            pl.BlockSpec((KS, DP, DP), lambda b: (0, 0, 0)),
            pl.BlockSpec((1, DP), lambda b: (0, 0)),
            pl.BlockSpec((DP, DP), lambda b: (0, 0)),
            pl.BlockSpec((1, DP), lambda b: (0, 0)),
        ],
        out_specs=pl.BlockSpec((bblk, DP), lambda b: (b, 0)),
        scratch_shapes=[pltpu.VMEM((bblk * N, DP), jnp.float32),
                        pltpu.VMEM((bblk * N, DP), jnp.float32)],
        compiler_params=pltpu.CompilerParams(
            dimension_semantics=("parallel",)),
    )(sent, asp, aidx, alen, slen,
      prep["wt_w1"], prep["wt_w2"], prep["wt_b"], prep["wtr_w"], prep["wtr_b"],
      prep["conv_w"], prep["conv_b"], prep["pred_w"], prep["pred_b"])
    return out[:B, :CLASS_NUM]


# ============================================================================
# Full forward pass
# ============================================================================
def tnet_as_forward(prep, sents, aspect, aspect_index):
    sents_len = jnp.sum(sents != 0, axis=-1).astype(jnp.float32)
    aspect_len = jnp.sum(aspect != 0, axis=-1).astype(jnp.float32)

    sent_feat = bilstm(sents, prep["embedding"], prep["lstm1"])    # (B, N, 128) packed
    asp_feat = bilstm(aspect, prep["embedding"], prep["lstm2"])    # (B, M, 128) packed
    # dropout layers run in eval mode (identity)

    return core_conv_predict(sent_feat, asp_feat,
                             aspect_index.astype(jnp.float32),
                             aspect_len, sents_len, prep)          # (B, class_num)


# ============================================================================
# Parameters: synthetic init (shapes from TNet_AS.__init__) + one-time prep
# (gate fusing, block-diagonal recurrent weight, packed 128-lane feature rows,
# bf16 casts for all MXU operands).
# ============================================================================
def init_params(key, vocab_size):
    keys = jax.random.split(key, 4)
    bound = 1.0 / (DIM_H ** 0.5)

    def u(k, shape):
        return jax.random.uniform(k, shape, jnp.float32, -bound, bound)

    emb = 0.1 * jax.random.normal(keys[0], (vocab_size, DIM_W), jnp.float32)
    emb = emb.at[0].set(0.0)   # padding row

    def lstm_params(k):
        ks = jax.random.split(k, 8)
        return {
            "w_ih_f": u(ks[0], (G, DIM_W)), "w_hh_f": u(ks[1], (G, DIM_H)),
            "b_ih_f": u(ks[2], (G,)),       "b_hh_f": u(ks[3], (G,)),
            "w_ih_b": u(ks[4], (G, DIM_W)), "w_hh_b": u(ks[5], (G, DIM_H)),
            "b_ih_b": u(ks[6], (G,)),       "b_hh_b": u(ks[7], (G,)),
        }

    ks = jax.random.split(keys[3], 8)
    return {
        "embedding": emb,
        "lstm1": lstm_params(keys[1]),
        "lstm2": lstm_params(keys[2]),
        "wt_w": u(ks[0], (D, 2 * D)),          # Linear(4*dim_h, 2*dim_h)
        "wt_b": u(ks[1], (D,)),
        "wtr_w": u(ks[2], (1, D)),             # Linear(2*dim_h, 1)
        "wtr_b": u(ks[3], (1,)),
        "conv_w": u(ks[4], (KS, NK, D)),       # conv taps: [k, out_ch, in_ch]
        "conv_b": u(ks[5], (NK,)),
        "pred_w": u(ks[6], (CLASS_NUM, NK)),   # Linear(nk, class_num)
        "pred_b": u(ks[7], (CLASS_NUM,)),
    }


def prepare_params(p):
    def prep_lstm(lp):
        # fused, lane-dense projection weight (dim_w, 512); gate columns per
        # direction d at d*256 + g*64 (+0:50 real, rest zero); biases folded.
        w_cat = jnp.zeros((DIM_W, NG), jnp.float32)
        b_cat = jnp.zeros((1, NG), jnp.float32)
        whh = jnp.zeros((DP, NG), jnp.float32)     # block-diagonal recurrent weight
        for d, sfx in enumerate(("f", "b")):
            w_ih = lp["w_ih_" + sfx]               # (4H, dim_w), gate order i,f,g,o
            w_hh = lp["w_hh_" + sfx]               # (4H, H)
            bias = lp["b_ih_" + sfx] + lp["b_hh_" + sfx]
            for g in range(4):
                col = d * GF + g * HP
                rows = slice(g * DIM_H, (g + 1) * DIM_H)
                w_cat = w_cat.at[:, col:col + DIM_H].set(w_ih[rows, :].T)
                b_cat = b_cat.at[0, col:col + DIM_H].set(bias[rows])
                whh = whh.at[d * HP:d * HP + DIM_H, col:col + DIM_H].set(w_hh[rows, :].T)
        return {"w_cat": w_cat.astype(jnp.bfloat16), "b_cat": b_cat,
                "whh": whh.astype(jnp.bfloat16)}

    # packed 128-lane feature layout: feature j<50 -> lane j, feature 50+j -> lane 64+j
    def pack_rows(w):        # (2*dim_h, C) feature rows -> (128, C)
        out = jnp.zeros((DP, w.shape[1]), jnp.float32)
        out = out.at[0:DIM_H].set(w[0:DIM_H])
        out = out.at[HP:HP + DIM_H].set(w[DIM_H:])
        return out

    def pack_cols(w):        # (R, 2*dim_h) feature cols -> (R, 128)
        out = jnp.zeros((w.shape[0], DP), jnp.float32)
        out = out.at[:, 0:DIM_H].set(w[:, 0:DIM_H])
        out = out.at[:, HP:HP + DIM_H].set(w[:, DIM_H:])
        return out

    wt_w1 = pack_rows(pack_cols(p["wt_w"][:, :D].T))      # sent half of Wt, packed in/out
    wt_w2 = pack_rows(pack_cols(p["wt_w"][:, D:].T))      # ri half of Wt
    wt_b = pack_cols(p["wt_b"].reshape(1, D))
    wtr_w = pack_cols(p["wtr_w"])                          # (1, 128), stays f32 (VPU path)
    wtr_b = p["wtr_b"].reshape(1, 1).astype(jnp.float32)
    conv_w = jnp.zeros((KS, DP, DP), jnp.float32)
    for k in range(KS):
        conv_w = conv_w.at[k, :, :NK].set(pack_rows(p["conv_w"][k].T))
    conv_b = jnp.zeros((1, DP), jnp.float32).at[0, :NK].set(p["conv_b"])
    pred_w = jnp.zeros((DP, DP), jnp.float32).at[:NK, :CLASS_NUM].set(p["pred_w"].T)
    pred_b = jnp.zeros((1, DP), jnp.float32).at[0, :CLASS_NUM].set(p["pred_b"])

    return {
        "embedding": p["embedding"].astype(jnp.bfloat16),
        "lstm1": prep_lstm(p["lstm1"]),
        "lstm2": prep_lstm(p["lstm2"]),
        "wt_w1": wt_w1.astype(jnp.bfloat16),
        "wt_w2": wt_w2.astype(jnp.bfloat16),
        "wt_b": wt_b,
        "wtr_w": wtr_w, "wtr_b": wtr_b,
        "conv_w": conv_w.astype(jnp.bfloat16),
        "conv_b": conv_b,
        "pred_w": pred_w.astype(jnp.bfloat16),
        "pred_b": pred_b,
    }


if __name__ == "__main__":
    key = jax.random.PRNGKey(0)
    B, N, M = 2, 16, 8
    VOCAB = 64

    k_param, k_sent, k_asp = jax.random.split(key, 3)
    params = init_params(k_param, VOCAB)
    prep = prepare_params(params)

    sents = jax.random.randint(k_sent, (B, N), 1, VOCAB, dtype=jnp.int32)
    sents = jnp.where(jnp.arange(N)[None, :] < jnp.array([13, 10])[:, None], sents, 0)
    aspect = jax.random.randint(k_asp, (B, M), 1, VOCAB, dtype=jnp.int32)
    aspect = jnp.where(jnp.arange(M)[None, :] < jnp.array([2, 3])[:, None], aspect, 0)
    aspect_index = jnp.array([4, 6], dtype=jnp.int32)

    pred = jax.jit(tnet_as_forward)(prep, sents, aspect, aspect_index)
    jax.block_until_ready(pred)
    assert pred.shape == (B, CLASS_NUM)
    print("KERNEL_OK")
</pallas_src>

<mosaic_0001>
module attributes {stable_mosaic.version = 11 : i64} {
  func.func @_bilstm_kernel(%arg0: i32, %arg1: memref<16x2x512xf32, #tpu.memory_space<vmem>>, %arg2: memref<128x512xbf16, #tpu.memory_space<vmem>>, %arg3: memref<16x2x128xf32, #tpu.memory_space<vmem>>) attributes {dimension_semantics = [#tpu.dimension_semantics<arbitrary>], iteration_bounds = array<i64: 1>, scalar_prefetch = 0 : i64, scratch_operands = 0 : i64, tpu.core_type = #tpu.core_type<tc>, window_params = [{pipeline_mode = #tpu.pipeline_mode<synchronous>, transform_indices = @transform_0, window_bounds = array<i64: 16, 2, 512>}, {pipeline_mode = #tpu.pipeline_mode<synchronous>, transform_indices = @transform_1, window_bounds = array<i64: 128, 512>}, {pipeline_mode = #tpu.pipeline_mode<synchronous>, transform_indices = @transform_2, window_bounds = array<i64: 16, 2, 128>}]} {
    %cst = arith.constant 0.000000e+00 : f32
    %0 = vector.broadcast %cst : f32 to vector<2x64xf32>
    %c0_i32 = arith.constant 0 : i32
    %c16_i32 = arith.constant 16 : i32
    %1 = arith.addi %c0_i32, %c16_i32 : i32
    %c1_i32 = arith.constant 1 : i32
    %2:4 = scf.for %arg4 = %c0_i32 to %1 step %c1_i32 iter_args(%arg5 = %0, %arg6 = %0, %arg7 = %0, %arg8 = %0) -> (vector<2x64xf32>, vector<2x64xf32>, vector<2x64xf32>, vector<2x64xf32>)  : i32 {
      %3 = tpu.concatenate %arg5, %arg7 in 1 : vector<2x64xf32>, vector<2x64xf32> -> vector<2x128xf32>
      %4 = arith.truncf %3 : vector<2x128xf32> to vector<2x128xbf16>
      %c0 = arith.constant 0 : index
      %c0_1 = arith.constant 0 : index
      %5 = vector.load %arg2[%c0, %c0_1] : memref<128x512xbf16, #tpu.memory_space<vmem>>, vector<128x512xbf16>
      %cst_2 = arith.constant dense<0.000000e+00> : vector<2x512xf32>
      %6 = tpu.matmul %4, %5, %cst_2 {dimension_numbers = #tpu.dot_dimension_numbers<[1], [0], [0], [1], [0, 0, 1, 1], [], []>} : vector<2x128xbf16>, vector<128x512xbf16>, vector<2x512xf32> -> vector<2x512xf32>
      %7 = arith.index_cast %arg4 : i32 to index
      %c0_3 = arith.constant 0 : index
      %c0_4 = arith.constant 0 : index
      %8 = vector.load %arg1[%7, %c0_3, %c0_4] : memref<16x2x512xf32, #tpu.memory_space<vmem>>, vector<1x2x256xf32>
      %9 = vector.shape_cast %8 : vector<1x2x256xf32> to vector<2x256xf32>
      %10 = vector.extract_strided_slice %6 {offsets = [0, 0], sizes = [2, 256], strides = [1, 1]} : vector<2x512xf32> to vector<2x256xf32>
      %11 = arith.addf %9, %10 : vector<2x256xf32>
      %c15_i32 = arith.constant 15 : i32
      %12 = arith.subi %c15_i32, %arg4 : i32
      %13 = arith.index_cast %12 : i32 to index
      %c0_5 = arith.constant 0 : index
      %c256 = arith.constant 256 : index
      %14 = vector.load %arg1[%13, %c0_5, %c256] : memref<16x2x512xf32, #tpu.memory_space<vmem>>, vector<1x2x256xf32>
      %15 = vector.shape_cast %14 : vector<1x2x256xf32> to vector<2x256xf32>
      %16 = vector.extract_strided_slice %6 {offsets = [0, 256], sizes = [2, 256], strides = [1, 1]} : vector<2x512xf32> to vector<2x256xf32>
      %17 = arith.addf %15, %16 : vector<2x256xf32>
      %18 = vector.extract_strided_slice %11 {offsets = [0, 0], sizes = [2, 64], strides = [1, 1]} : vector<2x256xf32> to vector<2x64xf32>
      %19 = arith.negf %18 : vector<2x64xf32>
      %20 = math.exp %19 : vector<2x64xf32>
      %cst_6 = arith.constant 1.000000e+00 : f32
      %21 = vector.broadcast %cst_6 : f32 to vector<2x64xf32>
      %22 = arith.addf %21, %20 : vector<2x64xf32>
      %23 = arith.divf %21, %22 : vector<2x64xf32>
      %24 = vector.extract_strided_slice %11 {offsets = [0, 64], sizes = [2, 64], strides = [1, 1]} : vector<2x256xf32> to vector<2x64xf32>
      %25 = arith.negf %24 : vector<2x64xf32>
      %26 = math.exp %25 : vector<2x64xf32>
      %cst_7 = arith.constant 1.000000e+00 : f32
      %27 = vector.broadcast %cst_7 : f32 to vector<2x64xf32>
      %28 = arith.addf %27, %26 : vector<2x64xf32>
      %29 = arith.divf %27, %28 : vector<2x64xf32>
      %30 = vector.extract_strided_slice %11 {offsets = [0, 128], sizes = [2, 64], strides = [1, 1]} : vector<2x256xf32> to vector<2x64xf32>
      %31 = math.tanh %30 : vector<2x64xf32>
      %32 = vector.extract_strided_slice %11 {offsets = [0, 192], sizes = [2, 64], strides = [1, 1]} : vector<2x256xf32> to vector<2x64xf32>
      %33 = arith.negf %32 : vector<2x64xf32>
      %34 = math.exp %33 : vector<2x64xf32>
      %cst_8 = arith.constant 1.000000e+00 : f32
      %35 = vector.broadcast %cst_8 : f32 to vector<2x64xf32>
      %36 = arith.addf %35, %34 : vector<2x64xf32>
      %37 = arith.divf %35, %36 : vector<2x64xf32>
      %38 = arith.mulf %29, %arg6 : vector<2x64xf32>
      %39 = arith.mulf %23, %31 : vector<2x64xf32>
      %40 = arith.addf %38, %39 : vector<2x64xf32>
      %41 = math.tanh %40 : vector<2x64xf32>
      %42 = arith.mulf %37, %41 : vector<2x64xf32>
      %43 = vector.extract_strided_slice %17 {offsets = [0, 0], sizes = [2, 64], strides = [1, 1]} : vector<2x256xf32> to vector<2x64xf32>
      %44 = arith.negf %43 : vector<2x64xf32>
      %45 = math.exp %44 : vector<2x64xf32>
      %cst_9 = arith.constant 1.000000e+00 : f32
      %46 = vector.broadcast %cst_9 : f32 to vector<2x64xf32>
      %47 = arith.addf %46, %45 : vector<2x64xf32>
      %48 = arith.divf %46, %47 : vector<2x64xf32>
      %49 = vector.extract_strided_slice %17 {offsets = [0, 64], sizes = [2, 64], strides = [1, 1]} : vector<2x256xf32> to vector<2x64xf32>
      %50 = arith.negf %49 : vector<2x64xf32>
      %51 = math.exp %50 : vector<2x64xf32>
      %cst_10 = arith.constant 1.000000e+00 : f32
      %52 = vector.broadcast %cst_10 : f32 to vector<2x64xf32>
      %53 = arith.addf %52, %51 : vector<2x64xf32>
      %54 = arith.divf %52, %53 : vector<2x64xf32>
      %55 = vector.extract_strided_slice %17 {offsets = [0, 128], sizes = [2, 64], strides = [1, 1]} : vector<2x256xf32> to vector<2x64xf32>
      %56 = math.tanh %55 : vector<2x64xf32>
      %57 = vector.extract_strided_slice %17 {offsets = [0, 192], sizes = [2, 64], strides = [1, 1]} : vector<2x256xf32> to vector<2x64xf32>
      %58 = arith.negf %57 : vector<2x64xf32>
      %59 = math.exp %58 : vector<2x64xf32>
      %cst_11 = arith.constant 1.000000e+00 : f32
      %60 = vector.broadcast %cst_11 : f32 to vector<2x64xf32>
      %61 = arith.addf %60, %59 : vector<2x64xf32>
      %62 = arith.divf %60, %61 : vector<2x64xf32>
      %63 = arith.mulf %54, %arg8 : vector<2x64xf32>
      %64 = arith.mulf %48, %56 : vector<2x64xf32>
      %65 = arith.addf %63, %64 : vector<2x64xf32>
      %66 = math.tanh %65 : vector<2x64xf32>
      %67 = arith.mulf %62, %66 : vector<2x64xf32>
      %68 = arith.index_cast %arg4 : i32 to index
      %c0_12 = arith.constant 0 : index
      %c0_13 = arith.constant 0 : index
      %69 = vector.load %arg3[%68, %c0_12, %c0_13] : memref<16x2x128xf32, #tpu.memory_space<vmem>>, vector<1x2x64xf32>
      %70 = vector.shape_cast %69 : vector<1x2x64xf32> to vector<2x64xf32>
      %71 = vector.shape_cast %42 : vector<2x64xf32> to vector<1x2x64xf32>
      tpu.vector_store %arg3[%68, %c0_12, %c0_13], %71 {strides = array<i32>} : memref<16x2x128xf32, #tpu.memory_space<vmem>>, vector<1x2x64xf32>,
      %c15_i32_14 = arith.constant 15 : i32
      %72 = arith.subi %c15_i32_14, %arg4 : i32
      %73 = arith.index_cast %72 : i32 to index
      %c0_15 = arith.constant 0 : index
      %c64 = arith.constant 64 : index
      %74 = vector.load %arg3[%73, %c0_15, %c64] : memref<16x2x128xf32, #tpu.memory_space<vmem>>, vector<1x2x64xf32>
      %75 = vector.shape_cast %74 : vector<1x2x64xf32> to vector<2x64xf32>
      %76 = vector.shape_cast %67 : vector<2x64xf32> to vector<1x2x64xf32>
      tpu.vector_store %arg3[%73, %c0_15, %c64], %76 {strides = array<i32>} : memref<16x2x128xf32, #tpu.memory_space<vmem>>, vector<1x2x64xf32>,
      scf.yield %42, %40, %67, %65 : vector<2x64xf32>, vector<2x64xf32>, vector<2x64xf32>, vector<2x64xf32>
    }
    %c16_i32_0 = arith.constant 16 : i32
    return
  }
  func.func @transform_0(%arg0: i32) -> (i32, i32, i32) {
    %c0_i32 = arith.constant 0 : i32
    %c0_i32_0 = arith.constant 0 : i32
    %c0_i32_1 = arith.constant 0 : i32
    %c0_i32_2 = arith.constant 0 : i32
    return %c0_i32, %c0_i32_0, %c0_i32_1 : i32, i32, i32
  }
  func.func @transform_1(%arg0: i32) -> (i32, i32) {
    %c0_i32 = arith.constant 0 : i32
    %c0_i32_0 = arith.constant 0 : i32
    %c0_i32_1 = arith.constant 0 : i32
    return %c0_i32, %c0_i32_0 : i32, i32
  }
  func.func @transform_2(%arg0: i32) -> (i32, i32, i32) {
    %c0_i32 = arith.constant 0 : i32
    %c0_i32_0 = arith.constant 0 : i32
    %c0_i32_1 = arith.constant 0 : i32
    %c0_i32_2 = arith.constant 0 : i32
    return %c0_i32, %c0_i32_0, %c0_i32_1 : i32, i32, i32
  }
}

module attributes {stable_mosaic.version = 11 : i64} {
  func.func @_proj_kernel(%arg0: i32, %arg1: memref<32x300xbf16, #tpu.memory_space<vmem>>, %arg2: memref<300x512xbf16, #tpu.memory_space<vmem>>, %arg3: memref<1x512xf32, #tpu.memory_space<vmem>>, %arg4: memref<32x512xf32, #tpu.memory_space<vmem>>) attributes {dimension_semantics = [#tpu.dimension_semantics<parallel>], iteration_bounds = array<i64: 1>, scalar_prefetch = 0 : i64, scratch_operands = 0 : i64, tpu.core_type = #tpu.core_type<tc>, window_params = [{transform_indices = @transform_0, window_bounds = array<i64: 32, 300>}, {pipeline_mode = #tpu.pipeline_mode<synchronous>, transform_indices = @transform_1, window_bounds = array<i64: 300, 512>}, {pipeline_mode = #tpu.pipeline_mode<synchronous>, transform_indices = @transform_2, window_bounds = array<i64: 1, 512>}, {transform_indices = @transform_3, window_bounds = array<i64: 32, 512>}]} {
    %c0 = arith.constant 0 : index
    %c0_0 = arith.constant 0 : index
    %0 = vector.load %arg1[%c0, %c0_0] : memref<32x300xbf16, #tpu.memory_space<vmem>>, vector<32x300xbf16>
    %c0_1 = arith.constant 0 : index
    %c0_2 = arith.constant 0 : index
    %1 = vector.load %arg2[%c0_1, %c0_2] : memref<300x512xbf16, #tpu.memory_space<vmem>>, vector<300x512xbf16>
    %cst = arith.constant dense<0.000000e+00> : vector<32x512xf32>
    %2 = tpu.matmul %0, %1, %cst {dimension_numbers = #tpu.dot_dimension_numbers<[1], [0], [0], [1], [0, 0, 1, 1], [], []>} : vector<32x300xbf16>, vector<300x512xbf16>, vector<32x512xf32> -> vector<32x512xf32>
    %c0_3 = arith.constant 0 : index
    %c0_4 = arith.constant 0 : index
    %3 = vector.load %arg3[%c0_3, %c0_4] : memref<1x512xf32, #tpu.memory_space<vmem>>, vector<1x512xf32>
    %4 = vector.broadcast %3 : vector<1x512xf32> to vector<32x512xf32>
    %5 = arith.addf %2, %4 : vector<32x512xf32>
    %c0_5 = arith.constant 0 : index
    %c0_6 = arith.constant 0 : index
    %6 = vector.load %arg4[%c0_5, %c0_6] : memref<32x512xf32, #tpu.memory_space<vmem>>, vector<32x512xf32>
    tpu.vector_store %arg4[%c0_5, %c0_6], %5 {strides = array<i32>} : memref<32x512xf32, #tpu.memory_space<vmem>>, vector<32x512xf32>,
    return
  }
  func.func @transform_0(%arg0: i32) -> (i32, i32) {
    %c0_i32 = arith.constant 0 : i32
    %c0_i32_0 = arith.constant 0 : i32
    return %arg0, %c0_i32 : i32, i32
  }
  func.func @transform_1(%arg0: i32) -> (i32, i32) {
    %c0_i32 = arith.constant 0 : i32
    %c0_i32_0 = arith.constant 0 : i32
    %c0_i32_1 = arith.constant 0 : i32
    return %c0_i32, %c0_i32_0 : i32, i32
  }
  func.func @transform_2(%arg0: i32) -> (i32, i32) {
    %c0_i32 = arith.constant 0 : i32
    %c0_i32_0 = arith.constant 0 : i32
    %c0_i32_1 = arith.constant 0 : i32
    return %c0_i32, %c0_i32_0 : i32, i32
  }
  func.func @transform_3(%arg0: i32) -> (i32, i32) {
    %c0_i32 = arith.constant 0 : i32
    %c0_i32_0 = arith.constant 0 : i32
    return %arg0, %c0_i32 : i32, i32
  }
}

module attributes {stable_mosaic.version = 11 : i64} {
  func.func @_proj_kernel(%arg0: i32, %arg1: memref<16x300xbf16, #tpu.memory_space<vmem>>, %arg2: memref<300x512xbf16, #tpu.memory_space<vmem>>, %arg3: memref<1x512xf32, #tpu.memory_space<vmem>>, %arg4: memref<16x512xf32, #tpu.memory_space<vmem>>) attributes {dimension_semantics = [#tpu.dimension_semantics<parallel>], iteration_bounds = array<i64: 1>, scalar_prefetch = 0 : i64, scratch_operands = 0 : i64, tpu.core_type = #tpu.core_type<tc>, window_params = [{transform_indices = @transform_0, window_bounds = array<i64: 16, 300>}, {pipeline_mode = #tpu.pipeline_mode<synchronous>, transform_indices = @transform_1, window_bounds = array<i64: 300, 512>}, {pipeline_mode = #tpu.pipeline_mode<synchronous>, transform_indices = @transform_2, window_bounds = array<i64: 1, 512>}, {transform_indices = @transform_3, window_bounds = array<i64: 16, 512>}]} {
    %c0 = arith.constant 0 : index
    %c0_0 = arith.constant 0 : index
    %0 = vector.load %arg1[%c0, %c0_0] : memref<16x300xbf16, #tpu.memory_space<vmem>>, vector<16x300xbf16>
    %c0_1 = arith.constant 0 : index
    %c0_2 = arith.constant 0 : index
    %1 = vector.load %arg2[%c0_1, %c0_2] : memref<300x512xbf16, #tpu.memory_space<vmem>>, vector<300x512xbf16>
    %cst = arith.constant dense<0.000000e+00> : vector<16x512xf32>
    %2 = tpu.matmul %0, %1, %cst {dimension_numbers = #tpu.dot_dimension_numbers<[1], [0], [0], [1], [0, 0, 1, 1], [], []>} : vector<16x300xbf16>, vector<300x512xbf16>, vector<16x512xf32> -> vector<16x512xf32>
    %c0_3 = arith.constant 0 : index
    %c0_4 = arith.constant 0 : index
    %3 = vector.load %arg3[%c0_3, %c0_4] : memref<1x512xf32, #tpu.memory_space<vmem>>, vector<1x512xf32>
    %4 = vector.broadcast %3 : vector<1x512xf32> to vector<16x512xf32>
    %5 = arith.addf %2, %4 : vector<16x512xf32>
    %c0_5 = arith.constant 0 : index
    %c0_6 = arith.constant 0 : index
    %6 = vector.load %arg4[%c0_5, %c0_6] : memref<16x512xf32, #tpu.memory_space<vmem>>, vector<16x512xf32>
    tpu.vector_store %arg4[%c0_5, %c0_6], %5 {strides = array<i32>} : memref<16x512xf32, #tpu.memory_space<vmem>>, vector<16x512xf32>,
    return
  }
  func.func @transform_0(%arg0: i32) -> (i32, i32) {
    %c0_i32 = arith.constant 0 : i32
    %c0_i32_0 = arith.constant 0 : i32
    return %arg0, %c0_i32 : i32, i32
  }
  func.func @transform_1(%arg0: i32) -> (i32, i32) {
    %c0_i32 = arith.constant 0 : i32
    %c0_i32_0 = arith.constant 0 : i32
    %c0_i32_1 = arith.constant 0 : i32
    return %c0_i32, %c0_i32_0 : i32, i32
  }
  func.func @transform_2(%arg0: i32) -> (i32, i32) {
    %c0_i32 = arith.constant 0 : i32
    %c0_i32_0 = arith.constant 0 : i32
    %c0_i32_1 = arith.constant 0 : i32
    return %c0_i32, %c0_i32_0 : i32, i32
  }
  func.func @transform_3(%arg0: i32) -> (i32, i32) {
    %c0_i32 = arith.constant 0 : i32
    %c0_i32_0 = arith.constant 0 : i32
    return %arg0, %c0_i32 : i32, i32
  }
}

module attributes {stable_mosaic.version = 11 : i64} {
  func.func @_bilstm_kernel(%arg0: i32, %arg1: memref<8x2x512xf32, #tpu.memory_space<vmem>>, %arg2: memref<128x512xbf16, #tpu.memory_space<vmem>>, %arg3: memref<8x2x128xf32, #tpu.memory_space<vmem>>) attributes {dimension_semantics = [#tpu.dimension_semantics<arbitrary>], iteration_bounds = array<i64: 1>, scalar_prefetch = 0 : i64, scratch_operands = 0 : i64, tpu.core_type = #tpu.core_type<tc>, window_params = [{pipeline_mode = #tpu.pipeline_mode<synchronous>, transform_indices = @transform_0, window_bounds = array<i64: 8, 2, 512>}, {pipeline_mode = #tpu.pipeline_mode<synchronous>, transform_indices = @transform_1, window_bounds = array<i64: 128, 512>}, {pipeline_mode = #tpu.pipeline_mode<synchronous>, transform_indices = @transform_2, window_bounds = array<i64: 8, 2, 128>}]} {
    %cst = arith.constant 0.000000e+00 : f32
    %0 = vector.broadcast %cst : f32 to vector<2x64xf32>
    %c0_i32 = arith.constant 0 : i32
    %c8_i32 = arith.constant 8 : i32
    %1 = arith.addi %c0_i32, %c8_i32 : i32
    %c1_i32 = arith.constant 1 : i32
    %2:4 = scf.for %arg4 = %c0_i32 to %1 step %c1_i32 iter_args(%arg5 = %0, %arg6 = %0, %arg7 = %0, %arg8 = %0) -> (vector<2x64xf32>, vector<2x64xf32>, vector<2x64xf32>, vector<2x64xf32>)  : i32 {
      %3 = tpu.concatenate %arg5, %arg7 in 1 : vector<2x64xf32>, vector<2x64xf32> -> vector<2x128xf32>
      %4 = arith.truncf %3 : vector<2x128xf32> to vector<2x128xbf16>
      %c0 = arith.constant 0 : index
      %c0_1 = arith.constant 0 : index
      %5 = vector.load %arg2[%c0, %c0_1] : memref<128x512xbf16, #tpu.memory_space<vmem>>, vector<128x512xbf16>
      %cst_2 = arith.constant dense<0.000000e+00> : vector<2x512xf32>
      %6 = tpu.matmul %4, %5, %cst_2 {dimension_numbers = #tpu.dot_dimension_numbers<[1], [0], [0], [1], [0, 0, 1, 1], [], []>} : vector<2x128xbf16>, vector<128x512xbf16>, vector<2x512xf32> -> vector<2x512xf32>
      %7 = arith.index_cast %arg4 : i32 to index
      %c0_3 = arith.constant 0 : index
      %c0_4 = arith.constant 0 : index
      %8 = vector.load %arg1[%7, %c0_3, %c0_4] : memref<8x2x512xf32, #tpu.memory_space<vmem>>, vector<1x2x256xf32>
      %9 = vector.shape_cast %8 : vector<1x2x256xf32> to vector<2x256xf32>
      %10 = vector.extract_strided_slice %6 {offsets = [0, 0], sizes = [2, 256], strides = [1, 1]} : vector<2x512xf32> to vector<2x256xf32>
      %11 = arith.addf %9, %10 : vector<2x256xf32>
      %c7_i32 = arith.constant 7 : i32
      %12 = arith.subi %c7_i32, %arg4 : i32
      %13 = arith.index_cast %12 : i32 to index
      %c0_5 = arith.constant 0 : index
      %c256 = arith.constant 256 : index
      %14 = vector.load %arg1[%13, %c0_5, %c256] : memref<8x2x512xf32, #tpu.memory_space<vmem>>, vector<1x2x256xf32>
      %15 = vector.shape_cast %14 : vector<1x2x256xf32> to vector<2x256xf32>
      %16 = vector.extract_strided_slice %6 {offsets = [0, 256], sizes = [2, 256], strides = [1, 1]} : vector<2x512xf32> to vector<2x256xf32>
      %17 = arith.addf %15, %16 : vector<2x256xf32>
      %18 = vector.extract_strided_slice %11 {offsets = [0, 0], sizes = [2, 64], strides = [1, 1]} : vector<2x256xf32> to vector<2x64xf32>
      %19 = arith.negf %18 : vector<2x64xf32>
      %20 = math.exp %19 : vector<2x64xf32>
      %cst_6 = arith.constant 1.000000e+00 : f32
      %21 = vector.broadcast %cst_6 : f32 to vector<2x64xf32>
      %22 = arith.addf %21, %20 : vector<2x64xf32>
      %23 = arith.divf %21, %22 : vector<2x64xf32>
      %24 = vector.extract_strided_slice %11 {offsets = [0, 64], sizes = [2, 64], strides = [1, 1]} : vector<2x256xf32> to vector<2x64xf32>
      %25 = arith.negf %24 : vector<2x64xf32>
      %26 = math.exp %25 : vector<2x64xf32>
      %cst_7 = arith.constant 1.000000e+00 : f32
      %27 = vector.broadcast %cst_7 : f32 to vector<2x64xf32>
      %28 = arith.addf %27, %26 : vector<2x64xf32>
      %29 = arith.divf %27, %28 : vector<2x64xf32>
      %30 = vector.extract_strided_slice %11 {offsets = [0, 128], sizes = [2, 64], strides = [1, 1]} : vector<2x256xf32> to vector<2x64xf32>
      %31 = math.tanh %30 : vector<2x64xf32>
      %32 = vector.extract_strided_slice %11 {offsets = [0, 192], sizes = [2, 64], strides = [1, 1]} : vector<2x256xf32> to vector<2x64xf32>
      %33 = arith.negf %32 : vector<2x64xf32>
      %34 = math.exp %33 : vector<2x64xf32>
      %cst_8 = arith.constant 1.000000e+00 : f32
      %35 = vector.broadcast %cst_8 : f32 to vector<2x64xf32>
      %36 = arith.addf %35, %34 : vector<2x64xf32>
      %37 = arith.divf %35, %36 : vector<2x64xf32>
      %38 = arith.mulf %29, %arg6 : vector<2x64xf32>
      %39 = arith.mulf %23, %31 : vector<2x64xf32>
      %40 = arith.addf %38, %39 : vector<2x64xf32>
      %41 = math.tanh %40 : vector<2x64xf32>
      %42 = arith.mulf %37, %41 : vector<2x64xf32>
      %43 = vector.extract_strided_slice %17 {offsets = [0, 0], sizes = [2, 64], strides = [1, 1]} : vector<2x256xf32> to vector<2x64xf32>
      %44 = arith.negf %43 : vector<2x64xf32>
      %45 = math.exp %44 : vector<2x64xf32>
      %cst_9 = arith.constant 1.000000e+00 : f32
      %46 = vector.broadcast %cst_9 : f32 to vector<2x64xf32>
      %47 = arith.addf %46, %45 : vector<2x64xf32>
      %48 = arith.divf %46, %47 : vector<2x64xf32>
      %49 = vector.extract_strided_slice %17 {offsets = [0, 64], sizes = [2, 64], strides = [1, 1]} : vector<2x256xf32> to vector<2x64xf32>
      %50 = arith.negf %49 : vector<2x64xf32>
      %51 = math.exp %50 : vector<2x64xf32>
      %cst_10 = arith.constant 1.000000e+00 : f32
      %52 = vector.broadcast %cst_10 : f32 to vector<2x64xf32>
      %53 = arith.addf %52, %51 : vector<2x64xf32>
      %54 = arith.divf %52, %53 : vector<2x64xf32>
      %55 = vector.extract_strided_slice %17 {offsets = [0, 128], sizes = [2, 64], strides = [1, 1]} : vector<2x256xf32> to vector<2x64xf32>
      %56 = math.tanh %55 : vector<2x64xf32>
      %57 = vector.extract_strided_slice %17 {offsets = [0, 192], sizes = [2, 64], strides = [1, 1]} : vector<2x256xf32> to vector<2x64xf32>
      %58 = arith.negf %57 : vector<2x64xf32>
      %59 = math.exp %58 : vector<2x64xf32>
      %cst_11 = arith.constant 1.000000e+00 : f32
      %60 = vector.broadcast %cst_11 : f32 to vector<2x64xf32>
      %61 = arith.addf %60, %59 : vector<2x64xf32>
      %62 = arith.divf %60, %61 : vector<2x64xf32>
      %63 = arith.mulf %54, %arg8 : vector<2x64xf32>
      %64 = arith.mulf %48, %56 : vector<2x64xf32>
      %65 = arith.addf %63, %64 : vector<2x64xf32>
      %66 = math.tanh %65 : vector<2x64xf32>
      %67 = arith.mulf %62, %66 : vector<2x64xf32>
      %68 = arith.index_cast %arg4 : i32 to index
      %c0_12 = arith.constant 0 : index
      %c0_13 = arith.constant 0 : index
      %69 = vector.load %arg3[%68, %c0_12, %c0_13] : memref<8x2x128xf32, #tpu.memory_space<vmem>>, vector<1x2x64xf32>
      %70 = vector.shape_cast %69 : vector<1x2x64xf32> to vector<2x64xf32>
      %71 = vector.shape_cast %42 : vector<2x64xf32> to vector<1x2x64xf32>
      tpu.vector_store %arg3[%68, %c0_12, %c0_13], %71 {strides = array<i32>} : memref<8x2x128xf32, #tpu.memory_space<vmem>>, vector<1x2x64xf32>,
      %c7_i32_14 = arith.constant 7 : i32
      %72 = arith.subi %c7_i32_14, %arg4 : i32
      %73 = arith.index_cast %72 : i32 to index
      %c0_15 = arith.constant 0 : index
      %c64 = arith.constant 64 : index
      %74 = vector.load %arg3[%73, %c0_15, %c64] : memref<8x2x128xf32, #tpu.memory_space<vmem>>, vector<1x2x64xf32>
      %75 = vector.shape_cast %74 : vector<1x2x64xf32> to vector<2x64xf32>
      %76 = vector.shape_cast %67 : vector<2x64xf32> to vector<1x2x64xf32>
      tpu.vector_store %arg3[%73, %c0_15, %c64], %76 {strides = array<i32>} : memref<8x2x128xf32, #tpu.memory_space<vmem>>, vector<1x2x64xf32>,
      scf.yield %42, %40, %67, %65 : vector<2x64xf32>, vector<2x64xf32>, vector<2x64xf32>, vector<2x64xf32>
    }
    %c8_i32_0 = arith.constant 8 : i32
    return
  }
  func.func @transform_0(%arg0: i32) -> (i32, i32, i32) {
    %c0_i32 = arith.constant 0 : i32
    %c0_i32_0 = arith.constant 0 : i32
    %c0_i32_1 = arith.constant 0 : i32
    %c0_i32_2 = arith.constant 0 : i32
    return %c0_i32, %c0_i32_0, %c0_i32_1 : i32, i32, i32
  }
  func.func @transform_1(%arg0: i32) -> (i32, i32) {
    %c0_i32 = arith.constant 0 : i32
    %c0_i32_0 = arith.constant 0 : i32
    %c0_i32_1 = arith.constant 0 : i32
    return %c0_i32, %c0_i32_0 : i32, i32
  }
  func.func @transform_2(%arg0: i32) -> (i32, i32, i32) {
    %c0_i32 = arith.constant 0 : i32
    %c0_i32_0 = arith.constant 0 : i32
    %c0_i32_1 = arith.constant 0 : i32
    %c0_i32_2 = arith.constant 0 : i32
    return %c0_i32, %c0_i32_0, %c0_i32_1 : i32, i32, i32
  }
}

module attributes {stable_mosaic.version = 11 : i64} {
  func.func @_core_conv_pred_kernel(%arg0: i32, %arg1: memref<2x16x128xf32, #tpu.memory_space<vmem>>, %arg2: memref<2x8x128xf32, #tpu.memory_space<vmem>>, %arg3: memref<2x1x1xf32, #tpu.memory_space<vmem>>, %arg4: memref<2x1x1xf32, #tpu.memory_space<vmem>>, %arg5: memref<2x1x1xf32, #tpu.memory_space<vmem>>, %arg6: memref<128x128xbf16, #tpu.memory_space<vmem>>, %arg7: memref<128x128xbf16, #tpu.memory_space<vmem>>, %arg8: memref<1x128xf32, #tpu.memory_space<vmem>>, %arg9: memref<1x128xf32, #tpu.memory_space<vmem>>, %arg10: memref<1x1xf32, #tpu.memory_space<vmem>>, %arg11: memref<3x128x128xbf16, #tpu.memory_space<vmem>>, %arg12: memref<1x128xf32, #tpu.memory_space<vmem>>, %arg13: memref<128x128xbf16, #tpu.memory_space<vmem>>, %arg14: memref<1x128xf32, #tpu.memory_space<vmem>>, %arg15: memref<2x128xf32, #tpu.memory_space<vmem>>, %arg16: memref<32x128xf32, #tpu.memory_space<vmem>>, %arg17: memref<32x128xf32, #tpu.memory_space<vmem>>) attributes {dimension_semantics = [#tpu.dimension_semantics<parallel>], iteration_bounds = array<i64: 1>, scalar_prefetch = 0 : i64, scratch_operands = 2 : i64, tpu.core_type = #tpu.core_type<tc>, window_params = [{transform_indices = @transform_0, window_bounds = array<i64: 2, 16, 128>}, {transform_indices = @transform_1, window_bounds = array<i64: 2, 8, 128>}, {transform_indices = @transform_2, window_bounds = array<i64: 2, 1, 1>}, {transform_indices = @transform_3, window_bounds = array<i64: 2, 1, 1>}, {transform_indices = @transform_4, window_bounds = array<i64: 2, 1, 1>}, {pipeline_mode = #tpu.pipeline_mode<synchronous>, transform_indices = @transform_5, window_bounds = array<i64: 128, 128>}, {pipeline_mode = #tpu.pipeline_mode<synchronous>, transform_indices = @transform_6, window_bounds = array<i64: 128, 128>}, {pipeline_mode = #tpu.pipeline_mode<synchronous>, transform_indices = @transform_7, window_bounds = array<i64: 1, 128>}, {pipeline_mode = #tpu.pipeline_mode<synchronous>, transform_indices = @transform_8, window_bounds = array<i64: 1, 128>}, {pipeline_mode = #tpu.pipeline_mode<synchronous>, transform_indices = @transform_9, window_bounds = array<i64: 1, 1>}, {pipeline_mode = #tpu.pipeline_mode<synchronous>, transform_indices = @transform_10, window_bounds = array<i64: 3, 128, 128>}, {pipeline_mode = #tpu.pipeline_mode<synchronous>, transform_indices = @transform_11, window_bounds = array<i64: 1, 128>}, {pipeline_mode = #tpu.pipeline_mode<synchronous>, transform_indices = @transform_12, window_bounds = array<i64: 128, 128>}, {pipeline_mode = #tpu.pipeline_mode<synchronous>, transform_indices = @transform_13, window_bounds = array<i64: 1, 128>}, {transform_indices = @transform_14, window_bounds = array<i64: 2, 128>}]} {
    %c0 = arith.constant 0 : index
    %c0_0 = arith.constant 0 : index
    %c0_1 = arith.constant 0 : index
    %0 = vector.load %arg1[%c0, %c0_0, %c0_1] : memref<2x16x128xf32, #tpu.memory_space<vmem>>, vector<2x16x128xf32>
    %1 = vector.shape_cast %0 : vector<2x16x128xf32> to vector<32x128xf32>
    %c0_2 = arith.constant 0 : index
    %c0_3 = arith.constant 0 : index
    %2 = vector.load %arg16[%c0_2, %c0_3] : memref<32x128xf32, #tpu.memory_space<vmem>>, vector<32x128xf32>
    tpu.vector_store %arg16[%c0_2, %c0_3], %1 {strides = array<i32>} : memref<32x128xf32, #tpu.memory_space<vmem>>, vector<32x128xf32>,
    %3 = tpu.iota {dimensions = array<i32: 1>} : vector<2x16x1xi32>
    %4 = arith.sitofp %3 : vector<2x16x1xi32> to vector<2x16x1xf32>
    %c0_4 = arith.constant 0 : index
    %c0_5 = arith.constant 0 : index
    %c0_6 = arith.constant 0 : index
    %5 = vector.load %arg3[%c0_4, %c0_5, %c0_6] : memref<2x1x1xf32, #tpu.memory_space<vmem>>, vector<2x1x1xf32>
    %c0_7 = arith.constant 0 : index
    %c0_8 = arith.constant 0 : index
    %c0_9 = arith.constant 0 : index
    %6 = vector.load %arg4[%c0_7, %c0_8, %c0_9] : memref<2x1x1xf32, #tpu.memory_space<vmem>>, vector<2x1x1xf32>
    %7 = arith.addf %5, %6 : vector<2x1x1xf32>
    %c0_10 = arith.constant 0 : index
    %c0_11 = arith.constant 0 : index
    %c0_12 = arith.constant 0 : index
    %8 = vector.load %arg5[%c0_10, %c0_11, %c0_12] : memref<2x1x1xf32, #tpu.memory_space<vmem>>, vector<2x1x1xf32>
    %9 = vector.broadcast %7 : vector<2x1x1xf32> to vector<2x16x1xf32>
    %10 = arith.cmpf olt, %4, %9 : vector<2x16x1xf32>
    %11 = vector.broadcast %7 : vector<2x1x1xf32> to vector<2x16x1xf32>
    %12 = arith.subf %11, %4 : vector<2x16x1xf32>
    %cst = arith.constant 4.000000e+01 : f32
    %13 = vector.broadcast %cst : f32 to vector<2x16x1xf32>
    %14 = arith.divf %12, %13 : vector<2x16x1xf32>
    %cst_13 = arith.constant 1.000000e+00 : f32
    %15 = vector.broadcast %cst_13 : f32 to vector<2x16x1xf32>
    %16 = arith.subf %15, %14 : vector<2x16x1xf32>
    %17 = vector.broadcast %8 : vector<2x1x1xf32> to vector<2x16x1xf32>
    %18 = arith.cmpf olt, %4, %17 : vector<2x16x1xf32>
    %19 = vector.broadcast %5 : vector<2x1x1xf32> to vector<2x16x1xf32>
    %20 = arith.subf %4, %19 : vector<2x16x1xf32>
    %cst_14 = arith.constant 4.000000e+01 : f32
    %21 = vector.broadcast %cst_14 : f32 to vector<2x16x1xf32>
    %22 = arith.divf %20, %21 : vector<2x16x1xf32>
    %cst_15 = arith.constant 1.000000e+00 : f32
    %23 = vector.broadcast %cst_15 : f32 to vector<2x16x1xf32>
    %24 = arith.subf %23, %22 : vector<2x16x1xf32>
    %cst_16 = arith.constant 0.000000e+00 : f32
    %25 = vector.broadcast %cst_16 : f32 to vector<2x16x1xf32>
    %26 = arith.select %18, %24, %25 : vector<2x16x1xi1>, vector<2x16x1xf32>
    %27 = arith.select %10, %16, %26 : vector<2x16x1xi1>, vector<2x16x1xf32>
    %c0_17 = arith.constant 0 : index
    %c0_18 = arith.constant 0 : index
    %28 = vector.load %arg6[%c0_17, %c0_18] : memref<128x128xbf16, #tpu.memory_space<vmem>>, vector<128x128xbf16>
    %c0_19 = arith.constant 0 : index
    %c0_20 = arith.constant 0 : index
    %29 = vector.load %arg7[%c0_19, %c0_20] : memref<128x128xbf16, #tpu.memory_space<vmem>>, vector<128x128xbf16>
    %c0_21 = arith.constant 0 : index
    %c0_22 = arith.constant 0 : index
    %30 = vector.load %arg8[%c0_21, %c0_22] : memref<1x128xf32, #tpu.memory_space<vmem>>, vector<1x128xf32>
    %c0_23 = arith.constant 0 : index
    %c0_24 = arith.constant 0 : index
    %31 = vector.load %arg9[%c0_23, %c0_24] : memref<1x128xf32, #tpu.memory_space<vmem>>, vector<1x128xf32>
    %c0_25 = arith.constant 0 : index
    %c0_26 = arith.constant 0 : index
    %32 = vector.load %arg10[%c0_25, %c0_26] : memref<1x1xf32, #tpu.memory_space<vmem>>, vector<1x1xf32>
    %c0_i32 = arith.constant 0 : i32
    %c2_i32 = arith.constant 2 : i32
    %33 = arith.addi %c0_i32, %c2_i32 : i32
    %c1_i32 = arith.constant 1 : i32
    scf.for %arg18 = %c0_i32 to %33 step %c1_i32  : i32 {
      %c1_i32_84 = arith.constant 1 : i32
      %147 = arith.muli %arg18, %c1_i32_84 : i32
      %c0_i32_85 = arith.constant 0 : i32
      %148 = arith.addi %c0_i32_85, %147 : i32
      %c16_i32 = arith.constant 16 : i32
      %149 = arith.muli %148, %c16_i32 : i32
      %150 = tpu.assume_multiple %149, 8 : i32
      %151 = arith.index_cast %150 : i32 to index
      %c0_86 = arith.constant 0 : index
      %152 = vector.load %arg16[%151, %c0_86] : memref<32x128xf32, #tpu.memory_space<vmem>>, vector<16x128xf32>
      %153 = arith.truncf %152 : vector<16x128xf32> to vector<16x128xbf16>
      %154 = arith.index_cast %148 : i32 to index
      %c0_87 = arith.constant 0 : index
      %c0_88 = arith.constant 0 : index
      %155 = vector.load %arg2[%154, %c0_87, %c0_88] : memref<2x8x128xf32, #tpu.memory_space<vmem>>, vector<1x8x128xf32>
      %156 = vector.shape_cast %155 : vector<1x8x128xf32> to vector<8x128xf32>
      %157 = arith.truncf %156 : vector<8x128xf32> to vector<8x128xbf16>
      %cst_89 = arith.constant dense<0.000000e+00> : vector<16x8xf32>
      %158 = tpu.matmul %153, %157, %cst_89 {dimension_numbers = #tpu.dot_dimension_numbers<[1], [1], [0], [0], [0, 0, 1, 0], [], []>} : vector<16x128xbf16>, vector<8x128xbf16>, vector<16x8xf32> -> vector<16x8xf32>
      %cst_90 = arith.constant dense<0xFF800000> : vector<16xf32>
      %159 = vector.multi_reduction <maximumf>, %158, %cst_90 [1] : vector<16x8xf32> to vector<16xf32>
      %160 = vector.shape_cast %159 : vector<16xf32> to vector<16x1xf32>
      %161 = vector.broadcast %160 : vector<16x1xf32> to vector<16x8xf32>
      %162 = arith.subf %158, %161 : vector<16x8xf32>
      %163 = math.exp %162 : vector<16x8xf32>
      %cst_91 = arith.constant dense<0.000000e+00> : vector<16xf32>
      %164 = vector.multi_reduction <add>, %163, %cst_91 [1] : vector<16x8xf32> to vector<16xf32>
      %165 = vector.shape_cast %164 : vector<16xf32> to vector<16x1xf32>
      %166 = tpu.reciprocal %165 {approx = true} : vector<16x1xf32> -> vector<16x1xf32>
      %167 = vector.broadcast %166 : vector<16x1xf32> to vector<16x8xf32>
      %168 = arith.mulf %163, %167 : vector<16x8xf32>
      %169 = arith.truncf %168 : vector<16x8xf32> to vector<16x8xbf16>
      %cst_92 = arith.constant dense<0.000000e+00> : vector<16x128xf32>
      %170 = tpu.matmul %169, %157, %cst_92 {dimension_numbers = #tpu.dot_dimension_numbers<[1], [0], [0], [1], [0, 0, 1, 1], [], []>} : vector<16x8xbf16>, vector<8x128xbf16>, vector<16x128xf32> -> vector<16x128xf32>
      %171 = arith.index_cast %150 : i32 to index
      %c0_93 = arith.constant 0 : index
      %172 = vector.load %arg17[%171, %c0_93] : memref<32x128xf32, #tpu.memory_space<vmem>>, vector<16x128xf32>
      tpu.vector_store %arg17[%171, %c0_93], %170 {strides = array<i32>} : memref<32x128xf32, #tpu.memory_space<vmem>>, vector<16x128xf32>,
    }
    %c2_i32_27 = arith.constant 2 : i32
    %c0_28 = arith.constant 0 : index
    %c0_29 = arith.constant 0 : index
    %34 = vector.load %arg16[%c0_28, %c0_29] : memref<32x128xf32, #tpu.memory_space<vmem>>, vector<32x128xf32>
    %35 = arith.truncf %34 : vector<32x128xf32> to vector<32x128xbf16>
    %cst_30 = arith.constant dense<0.000000e+00> : vector<32x128xf32>
    %36 = tpu.matmul %35, %28, %cst_30 {dimension_numbers = #tpu.dot_dimension_numbers<[1], [0], [0], [1], [0, 0, 1, 1], [], []>} : vector<32x128xbf16>, vector<128x128xbf16>, vector<32x128xf32> -> vector<32x128xf32>
    %c0_31 = arith.constant 0 : index
    %c0_32 = arith.constant 0 : index
    %37 = vector.load %arg17[%c0_31, %c0_32] : memref<32x128xf32, #tpu.memory_space<vmem>>, vector<32x128xf32>
    %38 = arith.truncf %37 : vector<32x128xf32> to vector<32x128xbf16>
    %cst_33 = arith.constant dense<0.000000e+00> : vector<32x128xf32>
    %39 = tpu.matmul %38, %29, %cst_33 {dimension_numbers = #tpu.dot_dimension_numbers<[1], [0], [0], [1], [0, 0, 1, 1], [], []>} : vector<32x128xbf16>, vector<128x128xbf16>, vector<32x128xf32> -> vector<32x128xf32>
    %40 = arith.addf %36, %39 : vector<32x128xf32>
    %41 = vector.broadcast %30 : vector<1x128xf32> to vector<32x128xf32>
    %42 = arith.addf %40, %41 : vector<32x128xf32>
    %cst_34 = arith.constant 0.000000e+00 : f32
    %43 = vector.broadcast %cst_34 : f32 to vector<32x128xf32>
    %44 = arith.maximumf %42, %43 : vector<32x128xf32>
    %45 = vector.broadcast %31 : vector<1x128xf32> to vector<32x128xf32>
    %46 = arith.mulf %34, %45 : vector<32x128xf32>
    %cst_35 = arith.constant dense<0.000000e+00> : vector<32xf32>
    %47 = vector.multi_reduction <add>, %46, %cst_35 [1] : vector<32x128xf32> to vector<32xf32>
    %48 = vector.shape_cast %47 : vector<32xf32> to vector<32x1xf32>
    %49 = vector.broadcast %32 : vector<1x1xf32> to vector<32x1xf32>
    %50 = arith.addf %48, %49 : vector<32x1xf32>
    %51 = arith.negf %50 : vector<32x1xf32>
    %52 = math.exp %51 : vector<32x1xf32>
    %cst_36 = arith.constant 1.000000e+00 : f32
    %53 = vector.broadcast %cst_36 : f32 to vector<32x1xf32>
    %54 = arith.addf %53, %52 : vector<32x1xf32>
    %55 = arith.divf %53, %54 : vector<32x1xf32>
    %cst_37 = arith.constant 1.000000e+00 : f32
    %56 = vector.broadcast %cst_37 : f32 to vector<32x1xf32>
    %57 = arith.subf %56, %55 : vector<32x1xf32>
    %58 = vector.broadcast %57 : vector<32x1xf32> to vector<32x128xf32>
    %59 = arith.mulf %34, %58 : vector<32x128xf32>
    %60 = vector.broadcast %55 : vector<32x1xf32> to vector<32x128xf32>
    %61 = arith.mulf %44, %60 : vector<32x128xf32>
    %62 = arith.addf %59, %61 : vector<32x128xf32>
    %63 = vector.shape_cast %62 : vector<32x128xf32> to vector<2x16x128xf32>
    %64 = vector.broadcast %27 : vector<2x16x1xf32> to vector<2x16x128xf32>
    %65 = arith.mulf %63, %64 : vector<2x16x128xf32>
    %66 = vector.shape_cast %65 : vector<2x16x128xf32> to vector<32x128xf32>
    %c0_38 = arith.constant 0 : index
    %c0_39 = arith.constant 0 : index
    %67 = vector.load %arg16[%c0_38, %c0_39] : memref<32x128xf32, #tpu.memory_space<vmem>>, vector<32x128xf32>
    tpu.vector_store %arg16[%c0_38, %c0_39], %66 {strides = array<i32>} : memref<32x128xf32, #tpu.memory_space<vmem>>, vector<32x128xf32>,
    %c0_i32_40 = arith.constant 0 : i32
    %c2_i32_41 = arith.constant 2 : i32
    %68 = arith.addi %c0_i32_40, %c2_i32_41 : i32
    %c1_i32_42 = arith.constant 1 : i32
    scf.for %arg18 = %c0_i32_40 to %68 step %c1_i32_42  : i32 {
      %c1_i32_84 = arith.constant 1 : i32
      %147 = arith.muli %arg18, %c1_i32_84 : i32
      %c0_i32_85 = arith.constant 0 : i32
      %148 = arith.addi %c0_i32_85, %147 : i32
      %c16_i32 = arith.constant 16 : i32
      %149 = arith.muli %148, %c16_i32 : i32
      %150 = tpu.assume_multiple %149, 8 : i32
      %151 = arith.index_cast %150 : i32 to index
      %c0_86 = arith.constant 0 : index
      %152 = vector.load %arg16[%151, %c0_86] : memref<32x128xf32, #tpu.memory_space<vmem>>, vector<16x128xf32>
      %153 = arith.truncf %152 : vector<16x128xf32> to vector<16x128xbf16>
      %154 = arith.index_cast %148 : i32 to index
      %c0_87 = arith.constant 0 : index
      %c0_88 = arith.constant 0 : index
      %155 = vector.load %arg2[%154, %c0_87, %c0_88] : memref<2x8x128xf32, #tpu.memory_space<vmem>>, vector<1x8x128xf32>
      %156 = vector.shape_cast %155 : vector<1x8x128xf32> to vector<8x128xf32>
      %157 = arith.truncf %156 : vector<8x128xf32> to vector<8x128xbf16>
      %cst_89 = arith.constant dense<0.000000e+00> : vector<16x8xf32>
      %158 = tpu.matmul %153, %157, %cst_89 {dimension_numbers = #tpu.dot_dimension_numbers<[1], [1], [0], [0], [0, 0, 1, 0], [], []>} : vector<16x128xbf16>, vector<8x128xbf16>, vector<16x8xf32> -> vector<16x8xf32>
      %cst_90 = arith.constant dense<0xFF800000> : vector<16xf32>
      %159 = vector.multi_reduction <maximumf>, %158, %cst_90 [1] : vector<16x8xf32> to vector<16xf32>
      %160 = vector.shape_cast %159 : vector<16xf32> to vector<16x1xf32>
      %161 = vector.broadcast %160 : vector<16x1xf32> to vector<16x8xf32>
      %162 = arith.subf %158, %161 : vector<16x8xf32>
      %163 = math.exp %162 : vector<16x8xf32>
      %cst_91 = arith.constant dense<0.000000e+00> : vector<16xf32>
      %164 = vector.multi_reduction <add>, %163, %cst_91 [1] : vector<16x8xf32> to vector<16xf32>
      %165 = vector.shape_cast %164 : vector<16xf32> to vector<16x1xf32>
      %166 = tpu.reciprocal %165 {approx = true} : vector<16x1xf32> -> vector<16x1xf32>
      %167 = vector.broadcast %166 : vector<16x1xf32> to vector<16x8xf32>
      %168 = arith.mulf %163, %167 : vector<16x8xf32>
      %169 = arith.truncf %168 : vector<16x8xf32> to vector<16x8xbf16>
      %cst_92 = arith.constant dense<0.000000e+00> : vector<16x128xf32>
      %170 = tpu.matmul %169, %157, %cst_92 {dimension_numbers = #tpu.dot_dimension_numbers<[1], [0], [0], [1], [0, 0, 1, 1], [], []>} : vector<16x8xbf16>, vector<8x128xbf16>, vector<16x128xf32> -> vector<16x128xf32>
      %171 = arith.index_cast %150 : i32 to index
      %c0_93 = arith.constant 0 : index
      %172 = vector.load %arg17[%171, %c0_93] : memref<32x128xf32, #tpu.memory_space<vmem>>, vector<16x128xf32>
      tpu.vector_store %arg17[%171, %c0_93], %170 {strides = array<i32>} : memref<32x128xf32, #tpu.memory_space<vmem>>, vector<16x128xf32>,
    }
    %c2_i32_43 = arith.constant 2 : i32
    %c0_44 = arith.constant 0 : index
    %c0_45 = arith.constant 0 : index
    %69 = vector.load %arg16[%c0_44, %c0_45] : memref<32x128xf32, #tpu.memory_space<vmem>>, vector<32x128xf32>
    %70 = arith.truncf %69 : vector<32x128xf32> to vector<32x128xbf16>
    %cst_46 = arith.constant dense<0.000000e+00> : vector<32x128xf32>
    %71 = tpu.matmul %70, %28, %cst_46 {dimension_numbers = #tpu.dot_dimension_numbers<[1], [0], [0], [1], [0, 0, 1, 1], [], []>} : vector<32x128xbf16>, vector<128x128xbf16>, vector<32x128xf32> -> vector<32x128xf32>
    %c0_47 = arith.constant 0 : index
    %c0_48 = arith.constant 0 : index
    %72 = vector.load %arg17[%c0_47, %c0_48] : memref<32x128xf32, #tpu.memory_space<vmem>>, vector<32x128xf32>
    %73 = arith.truncf %72 : vector<32x128xf32> to vector<32x128xbf16>
    %cst_49 = arith.constant dense<0.000000e+00> : vector<32x128xf32>
    %74 = tpu.matmul %73, %29, %cst_49 {dimension_numbers = #tpu.dot_dimension_numbers<[1], [0], [0], [1], [0, 0, 1, 1], [], []>} : vector<32x128xbf16>, vector<128x128xbf16>, vector<32x128xf32> -> vector<32x128xf32>
    %75 = arith.addf %71, %74 : vector<32x128xf32>
    %76 = vector.broadcast %30 : vector<1x128xf32> to vector<32x128xf32>
    %77 = arith.addf %75, %76 : vector<32x128xf32>
    %cst_50 = arith.constant 0.000000e+00 : f32
    %78 = vector.broadcast %cst_50 : f32 to vector<32x128xf32>
    %79 = arith.maximumf %77, %78 : vector<32x128xf32>
    %80 = vector.broadcast %31 : vector<1x128xf32> to vector<32x128xf32>
    %81 = arith.mulf %69, %80 : vector<32x128xf32>
    %cst_51 = arith.constant dense<0.000000e+00> : vector<32xf32>
    %82 = vector.multi_reduction <add>, %81, %cst_51 [1] : vector<32x128xf32> to vector<32xf32>
    %83 = vector.shape_cast %82 : vector<32xf32> to vector<32x1xf32>
    %84 = vector.broadcast %32 : vector<1x1xf32> to vector<32x1xf32>
    %85 = arith.addf %83, %84 : vector<32x1xf32>
    %86 = arith.negf %85 : vector<32x1xf32>
    %87 = math.exp %86 : vector<32x1xf32>
    %cst_52 = arith.constant 1.000000e+00 : f32
    %88 = vector.broadcast %cst_52 : f32 to vector<32x1xf32>
    %89 = arith.addf %88, %87 : vector<32x1xf32>
    %90 = arith.divf %88, %89 : vector<32x1xf32>
    %cst_53 = arith.constant 1.000000e+00 : f32
    %91 = vector.broadcast %cst_53 : f32 to vector<32x1xf32>
    %92 = arith.subf %91, %90 : vector<32x1xf32>
    %93 = vector.broadcast %92 : vector<32x1xf32> to vector<32x128xf32>
    %94 = arith.mulf %69, %93 : vector<32x128xf32>
    %95 = vector.broadcast %90 : vector<32x1xf32> to vector<32x128xf32>
    %96 = arith.mulf %79, %95 : vector<32x128xf32>
    %97 = arith.addf %94, %96 : vector<32x128xf32>
    %98 = vector.shape_cast %97 : vector<32x128xf32> to vector<2x16x128xf32>
    %99 = vector.broadcast %27 : vector<2x16x1xf32> to vector<2x16x128xf32>
    %100 = arith.mulf %98, %99 : vector<2x16x128xf32>
    %101 = vector.shape_cast %100 : vector<2x16x128xf32> to vector<32x128xf32>
    %c0_54 = arith.constant 0 : index
    %c0_55 = arith.constant 0 : index
    %102 = vector.load %arg16[%c0_54, %c0_55] : memref<32x128xf32, #tpu.memory_space<vmem>>, vector<32x128xf32>
    tpu.vector_store %arg16[%c0_54, %c0_55], %101 {strides = array<i32>} : memref<32x128xf32, #tpu.memory_space<vmem>>, vector<32x128xf32>,
    %c0_56 = arith.constant 0 : index
    %c0_57 = arith.constant 0 : index
    %103 = vector.load %arg16[%c0_56, %c0_57] : memref<32x128xf32, #tpu.memory_space<vmem>>, vector<32x128xf32>
    %104 = arith.truncf %103 : vector<32x128xf32> to vector<32x128xbf16>
    %c0_58 = arith.constant 0 : index
    %c0_59 = arith.constant 0 : index
    %c0_60 = arith.constant 0 : index
    %105 = vector.load %arg11[%c0_58, %c0_59, %c0_60] : memref<3x128x128xbf16, #tpu.memory_space<vmem>>, vector<1x128x128xbf16>
    %106 = vector.shape_cast %105 : vector<1x128x128xbf16> to vector<128x128xbf16>
    %cst_61 = arith.constant dense<0.000000e+00> : vector<32x128xf32>
    %107 = tpu.matmul %104, %106, %cst_61 {dimension_numbers = #tpu.dot_dimension_numbers<[1], [0], [0], [1], [0, 0, 1, 1], [], []>} : vector<32x128xbf16>, vector<128x128xbf16>, vector<32x128xf32> -> vector<32x128xf32>
    %c1 = arith.constant 1 : index
    %c0_62 = arith.constant 0 : index
    %c0_63 = arith.constant 0 : index
    %108 = vector.load %arg11[%c1, %c0_62, %c0_63] : memref<3x128x128xbf16, #tpu.memory_space<vmem>>, vector<1x128x128xbf16>
    %109 = vector.shape_cast %108 : vector<1x128x128xbf16> to vector<128x128xbf16>
    %cst_64 = arith.constant dense<0.000000e+00> : vector<32x128xf32>
    %110 = tpu.matmul %104, %109, %cst_64 {dimension_numbers = #tpu.dot_dimension_numbers<[1], [0], [0], [1], [0, 0, 1, 1], [], []>} : vector<32x128xbf16>, vector<128x128xbf16>, vector<32x128xf32> -> vector<32x128xf32>
    %c2 = arith.constant 2 : index
    %c0_65 = arith.constant 0 : index
    %c0_66 = arith.constant 0 : index
    %111 = vector.load %arg11[%c2, %c0_65, %c0_66] : memref<3x128x128xbf16, #tpu.memory_space<vmem>>, vector<1x128x128xbf16>
    %112 = vector.shape_cast %111 : vector<1x128x128xbf16> to vector<128x128xbf16>
    %cst_67 = arith.constant dense<0.000000e+00> : vector<32x128xf32>
    %113 = tpu.matmul %104, %112, %cst_67 {dimension_numbers = #tpu.dot_dimension_numbers<[1], [0], [0], [1], [0, 0, 1, 1], [], []>} : vector<32x128xbf16>, vector<128x128xbf16>, vector<32x128xf32> -> vector<32x128xf32>
    %114 = tpu.iota {dimensions = array<i32: 1>} : vector<2x16x1xi32>
    %c0_i32_68 = arith.constant 0 : i32
    %115 = vector.broadcast %c0_i32_68 : i32 to vector<2x16x1xi32>
    %116 = arith.cmpi eq, %114, %115 : vector<2x16x1xi32>
    %cst_69 = arith.constant 0.000000e+00 : f32
    %cst_70 = arith.constant 1.000000e+00 : f32
    %117 = vector.broadcast %cst_69 : f32 to vector<2x16x1xf32>
    %118 = vector.broadcast %cst_70 : f32 to vector<2x16x1xf32>
    %119 = arith.select %116, %117, %118 : vector<2x16x1xi1>, vector<2x16x1xf32>
    %120 = vector.shape_cast %119 : vector<2x16x1xf32> to vector<32x1xf32>
    %c15_i32 = arith.constant 15 : i32
    %121 = vector.broadcast %c15_i32 : i32 to vector<2x16x1xi32>
    %122 = arith.cmpi eq, %114, %121 : vector<2x16x1xi32>
    %cst_71 = arith.constant 0.000000e+00 : f32
    %cst_72 = arith.constant 1.000000e+00 : f32
    %123 = vector.broadcast %cst_71 : f32 to vector<2x16x1xf32>
    %124 = vector.broadcast %cst_72 : f32 to vector<2x16x1xf32>
    %125 = arith.select %122, %123, %124 : vector<2x16x1xi1>, vector<2x16x1xf32>
    %126 = vector.shape_cast %125 : vector<2x16x1xf32> to vector<32x1xf32>
    %c1_i32_73 = arith.constant 1 : i32
    %127 = tpu.dynamic_rotate %107 by %c1_i32_73 dim 0 : vector<32x128xf32>, i32 -> vector<32x128xf32>
    %128 = vector.broadcast %120 : vector<32x1xf32> to vector<32x128xf32>
    %129 = arith.mulf %127, %128 : vector<32x128xf32>
    %130 = arith.addf %129, %110 : vector<32x128xf32>
    %c31_i32 = arith.constant 31 : i32
    %131 = tpu.dynamic_rotate %113 by %c31_i32 dim 0 : vector<32x128xf32>, i32 -> vector<32x128xf32>
    %132 = vector.broadcast %126 : vector<32x1xf32> to vector<32x128xf32>
    %133 = arith.mulf %131, %132 : vector<32x128xf32>
    %134 = arith.addf %130, %133 : vector<32x128xf32>
    %c0_74 = arith.constant 0 : index
    %c0_75 = arith.constant 0 : index
    %135 = vector.load %arg12[%c0_74, %c0_75] : memref<1x128xf32, #tpu.memory_space<vmem>>, vector<1x128xf32>
    %136 = vector.broadcast %135 : vector<1x128xf32> to vector<32x128xf32>
    %137 = arith.addf %134, %136 : vector<32x128xf32>
    %138 = vector.shape_cast %137 : vector<32x128xf32> to vector<2x16x128xf32>
    %cst_76 = arith.constant dense<0xFF800000> : vector<2x128xf32>
    %139 = vector.multi_reduction <maximumf>, %138, %cst_76 [1] : vector<2x16x128xf32> to vector<2x128xf32>
    %140 = arith.truncf %139 : vector<2x128xf32> to vector<2x128xbf16>
    %c0_77 = arith.constant 0 : index
    %c0_78 = arith.constant 0 : index
    %141 = vector.load %arg13[%c0_77, %c0_78] : memref<128x128xbf16, #tpu.memory_space<vmem>>, vector<128x128xbf16>
    %cst_79 = arith.constant dense<0.000000e+00> : vector<2x128xf32>
    %142 = tpu.matmul %140, %141, %cst_79 {dimension_numbers = #tpu.dot_dimension_numbers<[1], [0], [0], [1], [0, 0, 1, 1], [], []>} : vector<2x128xbf16>, vector<128x128xbf16>, vector<2x128xf32> -> vector<2x128xf32>
    %c0_80 = arith.constant 0 : index
    %c0_81 = arith.constant 0 : index
    %143 = vector.load %arg14[%c0_80, %c0_81] : memref<1x128xf32, #tpu.memory_space<vmem>>, vector<1x128xf32>
    %144 = vector.broadcast %143 : vector<1x128xf32> to vector<2x128xf32>
    %145 = arith.addf %142, %144 : vector<2x128xf32>
    %c0_82 = arith.constant 0 : index
    %c0_83 = arith.constant 0 : index
    %146 = vector.load %arg15[%c0_82, %c0_83] : memref<2x128xf32, #tpu.memory_space<vmem>>, vector<2x128xf32>
    tpu.vector_store %arg15[%c0_82, %c0_83], %145 {strides = array<i32>} : memref<2x128xf32, #tpu.memory_space<vmem>>, vector<2x128xf32>,
    return
  }
  func.func @transform_0(%arg0: i32) -> (i32, i32, i32) {
    %c0_i32 = arith.constant 0 : i32
    %c0_i32_0 = arith.constant 0 : i32
    %c0_i32_1 = arith.constant 0 : i32
    return %arg0, %c0_i32, %c0_i32_0 : i32, i32, i32
  }
  func.func @transform_1(%arg0: i32) -> (i32, i32, i32) {
    %c0_i32 = arith.constant 0 : i32
    %c0_i32_0 = arith.constant 0 : i32
    %c0_i32_1 = arith.constant 0 : i32
    return %arg0, %c0_i32, %c0_i32_0 : i32, i32, i32
  }
  func.func @transform_2(%arg0: i32) -> (i32, i32, i32) {
    %c0_i32 = arith.constant 0 : i32
    %c0_i32_0 = arith.constant 0 : i32
    %c0_i32_1 = arith.constant 0 : i32
    return %arg0, %c0_i32, %c0_i32_0 : i32, i32, i32
  }
  func.func @transform_3(%arg0: i32) -> (i32, i32, i32) {
    %c0_i32 = arith.constant 0 : i32
    %c0_i32_0 = arith.constant 0 : i32
    %c0_i32_1 = arith.constant 0 : i32
    return %arg0, %c0_i32, %c0_i32_0 : i32, i32, i32
  }
  func.func @transform_4(%arg0: i32) -> (i32, i32, i32) {
    %c0_i32 = arith.constant 0 : i32
    %c0_i32_0 = arith.constant 0 : i32
    %c0_i32_1 = arith.constant 0 : i32
    return %arg0, %c0_i32, %c0_i32_0 : i32, i32, i32
  }
  func.func @transform_5(%arg0: i32) -> (i32, i32) {
    %c0_i32 = arith.constant 0 : i32
    %c0_i32_0 = arith.constant 0 : i32
    %c0_i32_1 = arith.constant 0 : i32
    return %c0_i32, %c0_i32_0 : i32, i32
  }
  func.func @transform_6(%arg0: i32) -> (i32, i32) {
    %c0_i32 = arith.constant 0 : i32
    %c0_i32_0 = arith.constant 0 : i32
    %c0_i32_1 = arith.constant 0 : i32
    return %c0_i32, %c0_i32_0 : i32, i32
  }
  func.func @transform_7(%arg0: i32) -> (i32, i32) {
    %c0_i32 = arith.constant 0 : i32
    %c0_i32_0 = arith.constant 0 : i32
    %c0_i32_1 = arith.constant 0 : i32
    return %c0_i32, %c0_i32_0 : i32, i32
  }
  func.func @transform_8(%arg0: i32) -> (i32, i32) {
    %c0_i32 = arith.constant 0 : i32
    %c0_i32_0 = arith.constant 0 : i32
    %c0_i32_1 = arith.constant 0 : i32
    return %c0_i32, %c0_i32_0 : i32, i32
  }
  func.func @transform_9(%arg0: i32) -> (i32, i32) {
    %c0_i32 = arith.constant 0 : i32
    %c0_i32_0 = arith.constant 0 : i32
    %c0_i32_1 = arith.constant 0 : i32
    return %c0_i32, %c0_i32_0 : i32, i32
  }
  func.func @transform_10(%arg0: i32) -> (i32, i32, i32) {
    %c0_i32 = arith.constant 0 : i32
    %c0_i32_0 = arith.constant 0 : i32
    %c0_i32_1 = arith.constant 0 : i32
    %c0_i32_2 = arith.constant 0 : i32
    return %c0_i32, %c0_i32_0, %c0_i32_1 : i32, i32, i32
  }
  func.func @transform_11(%arg0: i32) -> (i32, i32) {
    %c0_i32 = arith.constant 0 : i32
    %c0_i32_0 = arith.constant 0 : i32
    %c0_i32_1 = arith.constant 0 : i32
    return %c0_i32, %c0_i32_0 : i32, i32
  }
  func.func @transform_12(%arg0: i32) -> (i32, i32) {
    %c0_i32 = arith.constant 0 : i32
    %c0_i32_0 = arith.constant 0 : i32
    %c0_i32_1 = arith.constant 0 : i32
    return %c0_i32, %c0_i32_0 : i32, i32
  }
  func.func @transform_13(%arg0: i32) -> (i32, i32) {
    %c0_i32 = arith.constant 0 : i32
    %c0_i32_0 = arith.constant 0 : i32
    %c0_i32_1 = arith.constant 0 : i32
    return %c0_i32, %c0_i32_0 : i32, i32
  }
  func.func @transform_14(%arg0: i32) -> (i32, i32) {
    %c0_i32 = arith.constant 0 : i32
    %c0_i32_0 = arith.constant 0 : i32
    return %arg0, %c0_i32 : i32, i32
  }
}

</mosaic_0001>

<llo_original>
// kernel: tnet_as_forward.6
$region0: #{tnet_as_forward.6}
  #allocation0 [shape = 'u32[]', space=smem, size = 0x4, offset = 0x4, fixed_abs, tag = 'smem constant byte address 0x4 - core index']
  #allocation1 [shape = 'u32[72,128]{1,0:T(1,128)}', space=vmem, size = 0x9000, scoped, tag = 'internal scratch']
  %s0 = inlined_call_operand.vmem [shape: f32[16,2,512], index: 0, kind: input, shape index: {}]
  %s1 = inlined_call_operand.vmem [shape: bf16[128,512], index: 1, kind: input, shape index: {}]
  %s2 = inlined_call_operand.vmem [shape: f32[16,2,128], index: 2, kind: output, shape index: {}]
  %s3 = sld [smem:[#allocation0]]
  $region25: #{tnet_as_forward.6} parent=0
    _
  %s5 = ssub.s32 1, %s3
  %s6 = scalar_select 0, %s5, %s3
  // Predicated region
  $region2: #{tnet_as_forward.6} parent=0 // pred_check
    _
  $region3: #{tnet_as_forward.6} parent=0 // pred_check_branch
    %8 = sbr.rel (0) target = $region5
  $region4: #{tnet_as_forward.6} parent=0 // pred_region
    _
  $region5: #{tnet_as_forward.6} parent=0 // pred_fallthru
    _
  // Predicated region
  $region6: #{tnet_as_forward.6} parent=0 // pred_check
    _
  $region7: #{tnet_as_forward.6} parent=0 // pred_check_branch
    %10 = sbr.rel (0) target = $region9
  $region8: #{tnet_as_forward.6} parent=0 // pred_region
    _
  $region9: #{tnet_as_forward.6} parent=0 // pred_fallthru
    _
  loop: start=0, step=1, limit=16
  $region10: #{tnet_as_forward.6} parent=0 // loop_pre_header
    _
  $region11: #{tnet_as_forward.6} parent=0 // loop_header
    %s12 = sphi 0, %s16
    %p13 = scmp.ge.s32.totalorder %s12, 16
    %v17 = vphi 0.0, %v354
    %v18 = vphi 0.0, %v348
    %v19 = vphi 0.0, %v413
    %v20 = vphi 0.0, %v407
  $region12: #{tnet_as_forward.6} parent=0 // loop_header_branch
    %15 = sbr.rel (%p13) target = $region16
  $region13: #{tnet_as_forward.6} parent=0 // loop_body
    %22 = vst [vmem:[#allocation1] ss:$4 sm:$0xff] %v19
    %v23 = vld.sshfl [vmem:[#allocation1] sm:$0xff pattern:$0x73625140]
    %24 = vrot.lane.b32.xlu0 %v23, 64
    %v25 = vpop.permute.xlu0 %24
    %vm27 = vcmask 523264
    %v28 = vsel %vm27, %v17, %v25
    %v29 = vpack.c.bf16 %v28, %v28
    %v30 = vld [vmem:[%s1] sm:$0xff]
    %v31 = vld [vmem:[%s1 + $0x8] sm:$0xff]
    %v32 = vld [vmem:[%s1 + $0x10] sm:$0xff]
    %v33 = vld [vmem:[%s1 + $0x18] sm:$0xff]
    %v34 = vld [vmem:[%s1 + $0x20] sm:$0xff]
    %v35 = vld [vmem:[%s1 + $0x28] sm:$0xff]
    %v36 = vld [vmem:[%s1 + $0x30] sm:$0xff]
    %v37 = vld [vmem:[%s1 + $0x38] sm:$0xff]
    %v38 = vld [vmem:[%s1 + $0x40] sm:$0xff]
    %v39 = vld [vmem:[%s1 + $0x48] sm:$0xff]
    %v40 = vld [vmem:[%s1 + $0x50] sm:$0xff]
    %v41 = vld [vmem:[%s1 + $0x58] sm:$0xff]
    %v42 = vld [vmem:[%s1 + $0x60] sm:$0xff]
    %v43 = vld [vmem:[%s1 + $0x68] sm:$0xff]
    %v44 = vld [vmem:[%s1 + $0x70] sm:$0xff]
    %v45 = vld [vmem:[%s1 + $0x78] sm:$0xff]
    %v46 = vld [vmem:[%s1 + $0x80] sm:$0xff]
    %v47 = vld [vmem:[%s1 + $0x88] sm:$0xff]
    %v48 = vld [vmem:[%s1 + $0x90] sm:$0xff]
    %v49 = vld [vmem:[%s1 + $0x98] sm:$0xff]
    %v50 = vld [vmem:[%s1 + $0xa0] sm:$0xff]
    %v51 = vld [vmem:[%s1 + $0xa8] sm:$0xff]
    %v52 = vld [vmem:[%s1 + $0xb0] sm:$0xff]
    %v53 = vld [vmem:[%s1 + $0xb8] sm:$0xff]
    %v54 = vld [vmem:[%s1 + $0xc0] sm:$0xff]
    %v55 = vld [vmem:[%s1 + $0xc8] sm:$0xff]
    %v56 = vld [vmem:[%s1 + $0xd0] sm:$0xff]
    %v57 = vld [vmem:[%s1 + $0xd8] sm:$0xff]
    %v58 = vld [vmem:[%s1 + $0xe0] sm:$0xff]
    %v59 = vld [vmem:[%s1 + $0xe8] sm:$0xff]
    %v60 = vld [vmem:[%s1 + $0xf0] sm:$0xff]
    %v61 = vld [vmem:[%s1 + $0xf8] sm:$0xff]
    %v94 = vunpack.c.l.b16 %v30
    %v95 = vunpack.c.h.b16 %v30
    %v96 = vunpack.c.l.b16 %v31
    %v97 = vunpack.c.h.b16 %v31
    %v98 = vunpack.c.l.b16 %v32
    %v99 = vunpack.c.h.b16 %v32
    %v100 = vunpack.c.l.b16 %v33
    %v101 = vunpack.c.h.b16 %v33
    %v102 = vunpack.c.l.b16 %v34
    %v103 = vunpack.c.h.b16 %v34
    %v104 = vunpack.c.l.b16 %v35
    %v105 = vunpack.c.h.b16 %v35
    %v106 = vunpack.c.l.b16 %v36
    %v107 = vunpack.c.h.b16 %v36
    %v108 = vunpack.c.l.b16 %v37
    %v109 = vunpack.c.h.b16 %v37
    %v110 = vunpack.c.l.b16 %v38
    %v111 = vunpack.c.h.b16 %v38
    %v112 = vunpack.c.l.b16 %v39
    %v113 = vunpack.c.h.b16 %v39
    %v114 = vunpack.c.l.b16 %v40
    %v115 = vunpack.c.h.b16 %v40
    %v116 = vunpack.c.l.b16 %v41
    %v117 = vunpack.c.h.b16 %v41
    %v118 = vunpack.c.l.b16 %v42
    %v119 = vunpack.c.h.b16 %v42
    %v120 = vunpack.c.l.b16 %v43
    %v121 = vunpack.c.h.b16 %v43
    %v122 = vunpack.c.l.b16 %v44
    %v123 = vunpack.c.h.b16 %v44
    %v124 = vunpack.c.l.b16 %v45
    %v125 = vunpack.c.h.b16 %v45
    %v126 = vunpack.c.l.b16 %v46
    %v127 = vunpack.c.h.b16 %v46
    %v128 = vunpack.c.l.b16 %v47
    %v129 = vunpack.c.h.b16 %v47
    %v130 = vunpack.c.l.b16 %v48
    %v131 = vunpack.c.h.b16 %v48
    %v132 = vunpack.c.l.b16 %v49
    %v133 = vunpack.c.h.b16 %v49
    %v134 = vunpack.c.l.b16 %v50
    %v135 = vunpack.c.h.b16 %v50
    %v136 = vunpack.c.l.b16 %v51
    %v137 = vunpack.c.h.b16 %v51
    %v138 = vunpack.c.l.b16 %v52
    %v139 = vunpack.c.h.b16 %v52
    %v140 = vunpack.c.l.b16 %v53
    %v141 = vunpack.c.h.b16 %v53
    %v142 = vunpack.c.l.b16 %v54
    %v143 = vunpack.c.h.b16 %v54
    %v144 = vunpack.c.l.b16 %v55
    %v145 = vunpack.c.h.b16 %v55
    %v146 = vunpack.c.l.b16 %v56
    %v147 = vunpack.c.h.b16 %v56
    %v148 = vunpack.c.l.b16 %v57
    %v149 = vunpack.c.h.b16 %v57
    %v150 = vunpack.c.l.b16 %v58
    %v151 = vunpack.c.h.b16 %v58
    %v152 = vunpack.c.l.b16 %v59
    %v153 = vunpack.c.h.b16 %v59
    %v154 = vunpack.c.l.b16 %v60
    %v155 = vunpack.c.h.b16 %v60
    %v156 = vunpack.c.l.b16 %v61
    %v157 = vunpack.c.h.b16 %v61
    %v158 = vpack.c.b16 %v98, %v94
    %v159 = vpack.c.b16 %v99, %v95
    %v160 = vpack.c.b16 %v100, %v96
    %v161 = vpack.c.b16 %v101, %v97
    %v162 = vpack.c.b16 %v106, %v102
    %v163 = vpack.c.b16 %v107, %v103
    %v164 = vpack.c.b16 %v108, %v104
    %v165 = vpack.c.b16 %v109, %v105
    %v166 = vpack.c.b16 %v114, %v110
    %v167 = vpack.c.b16 %v115, %v111
    %v168 = vpack.c.b16 %v116, %v112
    %v169 = vpack.c.b16 %v117, %v113
    %v170 = vpack.c.b16 %v122, %v118
    %v171 = vpack.c.b16 %v123, %v119
    %v172 = vpack.c.b16 %v124, %v120
    %v173 = vpack.c.b16 %v125, %v121
    %v174 = vpack.c.b16 %v130, %v126
    %v175 = vpack.c.b16 %v131, %v127
    %v176 = vpack.c.b16 %v132, %v128
    %v177 = vpack.c.b16 %v133, %v129
    %v178 = vpack.c.b16 %v138, %v134
    %v179 = vpack.c.b16 %v139, %v135
    %v180 = vpack.c.b16 %v140, %v136
    %v181 = vpack.c.b16 %v141, %v137
    %v182 = vpack.c.b16 %v146, %v142
    %v183 = vpack.c.b16 %v147, %v143
    %v184 = vpack.c.b16 %v148, %v144
    %v185 = vpack.c.b16 %v149, %v145
    %v186 = vpack.c.b16 %v154, %v150
    %v187 = vpack.c.b16 %v155, %v151
    %v188 = vpack.c.b16 %v156, %v152
    %v189 = vpack.c.b16 %v157, %v153
    %222 = vmatpush.bf16.msra.mxu0 %v186
    %223 = vmatpush.bf16.msra.mxu0 %v182
    %224 = vmatpush.bf16.msra.mxu0 %v178
    %225 = vmatpush.bf16.msra.mxu0 %v174
    %226 = vmatpush.bf16.msra.mxu0 %v170
    %227 = vmatpush.bf16.msra.mxu0 %v166
    %228 = vmatpush.bf16.msra.mxu0 %v162
    %229 = vmatpush.bf16.msra.mxu0 %v158
    %230 = vmatmul.bf16.gmra.mxu0 %v29
    %v231 = vpop.f32.mrf.mxu0
    %v232 = vadd.f32 0.0, %v231
    %v233 = vpop.f32.mrf.mxu0
    %234 = vdwg.mxu0
    %235 = vmatpush.bf16.msra.mxu0 %v187
    %236 = vmatpush.bf16.msra.mxu0 %v183
    %237 = vmatpush.bf16.msra.mxu0 %v179
    %238 = vmatpush.bf16.msra.mxu0 %v175
    %239 = vmatpush.bf16.msra.mxu0 %v171
    %240 = vmatpush.bf16.msra.mxu0 %v167
    %241 = vmatpush.bf16.msra.mxu0 %v163
    %242 = vmatpush.bf16.msra.mxu0 %v159
    %243 = vmatmul.bf16.gmra.mxu0 %v29
    %v244 = vpop.f32.mrf.mxu0
    %v245 = vadd.f32 0.0, %v244
    %v246 = vpop.f32.mrf.mxu0
    %247 = vdwg.mxu0
    %248 = vmatpush.bf16.msra.mxu0 %v188
    %249 = vmatpush.bf16.msra.mxu0 %v184
    %250 = vmatpush.bf16.msra.mxu0 %v180
    %251 = vmatpush.bf16.msra.mxu0 %v176
    %252 = vmatpush.bf16.msra.mxu0 %v172
    %253 = vmatpush.bf16.msra.mxu0 %v168
    %254 = vmatpush.bf16.msra.mxu0 %v164
    %255 = vmatpush.bf16.msra.mxu0 %v160
    %256 = vmatmul.bf16.gmra.mxu0 %v29
    %v257 = vpop.f32.mrf.mxu0
    %v258 = vadd.f32 0.0, %v257
    %v259 = vpop.f32.mrf.mxu0
    %260 = vdwg.mxu0
    %261 = vmatpush.bf16.msra.mxu0 %v189
    %262 = vmatpush.bf16.msra.mxu0 %v185
    %263 = vmatpush.bf16.msra.mxu0 %v181
    %264 = vmatpush.bf16.msra.mxu0 %v177
    %265 = vmatpush.bf16.msra.mxu0 %v173
    %266 = vmatpush.bf16.msra.mxu0 %v169
    %267 = vmatpush.bf16.msra.mxu0 %v165
    %268 = vmatpush.bf16.msra.mxu0 %v161
    %269 = vmatmul.bf16.gmra.mxu0 %v29
    %v270 = vpop.f32.mrf.mxu0
    %v271 = vadd.f32 0.0, %v270
    %v272 = vpop.f32.mrf.mxu0
    %273 = vdwg.mxu0
    %s274 = smul.u32 %s12, 4
    %s275 = smul.addr %s274, 2
    %s276 = scalar_lea.vmem %s0, %s275
    %v277 = vld [vmem:[%s276] sm:$0xf]
    %v280 = vrot.slane %v245, 6
    %vm281 = vcmask 1041408
    %v282 = vsel %vm281, %v232, %v280
    %v284 = vadd.f32 %v277, %v282
    %s285 = ssub.s32 15, %s12
    %s286 = smul.u32 %s285, 4
    %s287 = smul.addr %s286, 2
    %s288 = scalar_lea.vmem %s0, %s287
    %v289 = vld [vmem:[%s288 + $0x4] sm:$0xf]
    %v292 = vrot.slane %v271, 6
    %v293 = vsel %vm281, %v258, %v292
    %v295 = vadd.f32 %v289, %v293
    %v296 = vxor.u32 %v284, 2147483648
    %v297 = vmul.f32 %v296, 1.442695
    %v298 = vpow.pop %v297
    %v299 = vadd.f32 %v298, 1.0
    %v300 = vrcp.pop %v299
    %v301 = vmul.f32 %v299, %v300
    %v302 = vsub.f32 1.0, %v301
    %v303 = vmul.f32 %v300, %v302
    %v304 = vadd.f32 %v300, %v303
    %vm305 = vweird.f32 %v299
    %vm306 = vweird.f32 %v300
    %vm307 = vmor %vm305, %vm306
    %v308 = vsel %vm307, %v300, %v304
    %v309 = vand.u32 2147483647, %v299
    %vm310 = vcmp.eq.f32.partialorder %v309, 8.507059e+37
    %v311 = vand.u32 %v299, 2147483648
    %v312 = vor.u32 1.1754944e-38, %v311
    %v313 = vsel %vm310, %v312, %v308
    %v314 = vmul.f32 1.0, %v313
    %v316 = vrot.slane %v284, 2
    %v318 = vtanh.pop %v316
    %319 = vrot.lane.b32.xlu0 %v284, 64
    %v320 = vpop.permute.xlu0 %319
    %v321 = vrot.slane %v320, 2
    %v323 = vxor.u32 %v321, 2147483648
    %v324 = vmul.f32 %v323, 1.442695
    %v325 = vpow.pop %v324
    %v326 = vadd.f32 %v325, 1.0
    %v327 = vrcp.pop %v326
    %v328 = vmul.f32 %v326, %v327
    %v329 = vsub.f32 1.0, %v328
    %v330 = vmul.f32 %v327, %v329
    %v331 = vadd.f32 %v327, %v330
    %vm332 = vweird.f32 %v326
    %vm333 = vweird.f32 %v327
    %vm334 = vmor %vm332, %vm333
    %v335 = vsel %vm334, %v327, %v331
    %v336 = vand.u32 2147483647, %v326
    %vm337 = vcmp.eq.f32.partialorder %v336, 8.507059e+37
    %v338 = vand.u32 %v326, 2147483648
    %v339 = vor.u32 1.1754944e-38, %v338
    %v340 = vsel %vm337, %v339, %v335
    %v341 = vmul.f32 1.0, %v340
    %v342 = vmul.f32 %v314, %v18
    %v343 = vmul.f32 %v314, %v318
    %345 = vrot.lane.b32.xlu0 %v343, 64
    %v346 = vpop.permute.xlu0 %345
    %v348 = vadd.f32 %v342, %v346
    %v349 = vtanh.pop %v348
    %351 = vrot.lane.b32.xlu0 %v349, 64
    %v352 = vpop.permute.xlu0 %351
    %v354 = vmul.f32 %v341, %v352
    %v355 = vxor.u32 %v295, 2147483648
    %v356 = vmul.f32 %v355, 1.442695
    %v357 = vpow.pop %v356
    %v358 = vadd.f32 %v357, 1.0
    %v359 = vrcp.pop %v358
    %v360 = vmul.f32 %v358, %v359
    %v361 = vsub.f32 1.0, %v360
    %v362 = vmul.f32 %v359, %v361
    %v363 = vadd.f32 %v359, %v362
    %vm364 = vweird.f32 %v358
    %vm365 = vweird.f32 %v359
    %vm366 = vmor %vm364, %vm365
    %v367 = vsel %vm366, %v359, %v363
    %v368 = vand.u32 2147483647, %v358
    %vm369 = vcmp.eq.f32.partialorder %v368, 8.507059e+37
    %v370 = vand.u32 %v358, 2147483648
    %v371 = vor.u32 1.1754944e-38, %v370
    %v372 = vsel %vm369, %v371, %v367
    %v373 = vmul.f32 1.0, %v372
    %v375 = vrot.slane %v295, 2
    %v377 = vtanh.pop %v375
    %378 = vrot.lane.b32.xlu0 %v295, 64
    %v379 = vpop.permute.xlu0 %378
    %v380 = vrot.slane %v379, 2
    %v382 = vxor.u32 %v380, 2147483648
    %v383 = vmul.f32 %v382, 1.442695
    %v384 = vpow.pop %v383
    %v385 = vadd.f32 %v384, 1.0
    %v386 = vrcp.pop %v385
    %v387 = vmul.f32 %v385, %v386
    %v388 = vsub.f32 1.0, %v387
    %v389 = vmul.f32 %v386, %v388
    %v390 = vadd.f32 %v386, %v389
    %vm391 = vweird.f32 %v385
    %vm392 = vweird.f32 %v386
    %vm393 = vmor %vm391, %vm392
    %v394 = vsel %vm393, %v386, %v390
    %v395 = vand.u32 2147483647, %v385
    %vm396 = vcmp.eq.f32.partialorder %v395, 8.507059e+37
    %v397 = vand.u32 %v385, 2147483648
    %v398 = vor.u32 1.1754944e-38, %v397
    %v399 = vsel %vm396, %v398, %v394
    %v400 = vmul.f32 1.0, %v399
    %v401 = vmul.f32 %v373, %v20
    %v402 = vmul.f32 %v373, %v377
    %404 = vrot.lane.b32.xlu0 %v402, 64
    %v405 = vpop.permute.xlu0 %404
    %v407 = vadd.f32 %v401, %v405
    %v408 = vtanh.pop %v407
    %410 = vrot.lane.b32.xlu0 %v408, 64
    %v411 = vpop.permute.xlu0 %410
    %v413 = vmul.f32 %v400, %v411
    %s414 = smul.u32 %s12, 2
    %s415 = scalar_lea.vmem %s2, %s414
    %vm416 = vcmask 517120
    %417 = vst.msk [vmem:[%s415] sm:$0x3] %vm416, %v354
    %419 = vst [vmem:[#allocation1] ss:$4 sm:$0xff] %v413
    %v420 = vld.sshfl [vmem:[#allocation1] sm:$0xff pattern:$0x73625140]
    %421 = vrot.lane.b32.xlu0 %v420, 64
    %v422 = vpop.permute.xlu0 %421
    %s424 = smul.u32 %s285, 2
    %s425 = scalar_lea.vmem %s2, %s424
    %vm426 = vcmask 1041920
    %427 = vst.msk [vmem:[%s425] sm:$0x3] %vm426, %v422
  $region14: #{tnet_as_forward.6} parent=0 // loop_footer
    %s16 = sadd.s32 1, %s12
  $region15: #{tnet_as_forward.6} parent=0 // loop_footer_branch
    %11 = sbr.rel target = $region11
  $region16: #{tnet_as_forward.6} parent=0 // loop_exit
    _
  // Predicated region
  $region17: #{tnet_as_forward.6} parent=0 // pred_check
    _
  $region18: #{tnet_as_forward.6} parent=0 // pred_check_branch
    %429 = sbr.rel (0) target = $region20
  $region19: #{tnet_as_forward.6} parent=0 // pred_region
    _
  $region20: #{tnet_as_forward.6} parent=0 // pred_fallthru
    _
  // Predicated region
  $region21: #{tnet_as_forward.6} parent=0 // pred_check
    _
  $region22: #{tnet_as_forward.6} parent=0 // pred_check_branch
    %431 = sbr.rel (0) target = $region24
  $region23: #{tnet_as_forward.6} parent=0 // pred_region
    _
  $region24: #{tnet_as_forward.6} parent=0 // pred_fallthru
    _

// kernel: tnet_as_forward.5
$region0: #{tnet_as_forward.5}
  #allocation0 [shape = 'u32[]', space=smem, size = 0x4, offset = 0x4, fixed_abs, tag = 'smem constant byte address 0x4 - core index']
  #allocation1 [shape = 'u32[72,128]{1,0:T(1,128)}', space=vmem, size = 0x9000, scoped, tag = 'internal scratch']
  %s0 = inlined_call_operand.vmem [shape: bf16[32,300], index: 0, kind: input, shape index: {}]
  %s1 = inlined_call_operand.hbm [shape: bf16[300,512], index: 1, kind: input, shape index: {}]
  %s2 = inlined_call_operand.vmem [shape: f32[1,512], index: 2, kind: input, shape index: {}]
  %s3 = inlined_call_operand.vmem [shape: f32[32,512], index: 3, kind: output, shape index: {}]
  %s4 = sld [smem:[#allocation0]]
  $region26: #{tnet_as_forward.5} parent=0
    _
  %s6 = ssub.s32 1, %s4
  %s7 = scalar_select 0, %s6, %s4
  $region1: #{tnet_as_forward.5} parent=0
    #allocation2 [shape = 'u8[311296]{0}', space=vmem, size = 0x4c000, scoped, tag = 'input window, operand 1, single buffered']
    #allocation3 [shape = 's32[1]{0}', space=sflag, size = 0x4, scoped, tag = 'scoped memory for tnet_as_forward.5']
    %8 = vsyncpa [#allocation3], 0
    // Predicated region
    $region2: #{tnet_as_forward.5} parent=1 // pred_check
      _
    $region3: #{tnet_as_forward.5} parent=1 // pred_check_branch
      %10 = sbr.rel (0) target = $region5
    $region4: #{tnet_as_forward.5} parent=1 // pred_region
      _
    $region5: #{tnet_as_forward.5} parent=1 // pred_fallthru
      _
    // Predicated region
    $region6: #{tnet_as_forward.5} parent=1 // pred_check
      _
    $region7: #{tnet_as_forward.5} parent=1 // pred_check_branch
      %12 = sbr.rel (0) target = $region9
    $region8: #{tnet_as_forward.5} parent=1 // pred_region
      %14 = vsyncadd [#allocation3], 0
      %s15 = sshll.u32 %s1, 4
      %s16 = int_to_ptr.hbm [resolvable:$true] %s15
      %s17 = sshll.u32 [#allocation2], 4
      %s18 = int_to_ptr.vmem [resolvable:$true] %s17
      %23 = dma.hbm_to_vmem [thread:$0]  %s16, 9728, %s18, [#allocation3], 256, 256, 16
    $region9: #{tnet_as_forward.5} parent=1 // pred_fallthru
      _
    // Predicated region
    $region10: #{tnet_as_forward.5} parent=1 // pred_check
      _
    $region11: #{tnet_as_forward.5} parent=1 // pred_check_branch
      %25 = sbr.rel (0) target = $region13
    $region12: #{tnet_as_forward.5} parent=1 // pred_region
      _
    $region13: #{tnet_as_forward.5} parent=1 // pred_fallthru
      _
    // Predicated region
    $region14: #{tnet_as_forward.5} parent=1 // pred_check
      _
    $region15: #{tnet_as_forward.5} parent=1 // pred_check_branch
      %27 = sbr.rel (0) target = $region17
    $region16: #{tnet_as_forward.5} parent=1 // pred_region
      %29 = dma.done [#allocation3], 9728
    $region17: #{tnet_as_forward.5} parent=1 // pred_fallthru
      _
    %v31 = vld [vmem:[%s0] sm:$0xff]
    %v32 = vld [vmem:[%s0 + $0x8] sm:$0xf]
    %v33 = vld [vmem:[%s0 + $0xc] sm:$0xff]
    %v34 = vld [vmem:[%s0 + $0x14] sm:$0xf]
    %v35 = vld [vmem:[%s0 + $0x18] sm:$0xff]
    %v36 = vld [vmem:[%s0 + $0x20] sm:$0xf]
    %v37 = vld [vmem:[%s0 + $0x24] sm:$0xff]
    %v38 = vld [vmem:[%s0 + $0x2c] sm:$0xf]
    %v39 = vld [vmem:[#allocation2] sm:$0xff]
    %v40 = vld [vmem:[#allocation2 + $0x8] sm:$0xff]
    %v41 = vld [vmem:[#allocation2 + $0x10] sm:$0xff]
    %v42 = vld [vmem:[#allocation2 + $0x18] sm:$0xff]
    %v43 = vld [vmem:[#allocation2 + $0x20] sm:$0xff]
    %v44 = vld [vmem:[#allocation2 + $0x28] sm:$0xff]
    %v45 = vld [vmem:[#allocation2 + $0x30] sm:$0xff]
    %v46 = vld [vmem:[#allocation2 + $0x38] sm:$0xff]
    %v47 = vld [vmem:[#allocation2 + $0x40] sm:$0xff]
    %v48 = vld [vmem:[#allocation2 + $0x48] sm:$0xff]
    %v49 = vld [vmem:[#allocation2 + $0x50] sm:$0xff]
    %v50 = vld [vmem:[#allocation2 + $0x58] sm:$0xff]
    %v51 = vld [vmem:[#allocation2 + $0x60] sm:$0xff]
    %v52 = vld [vmem:[#allocation2 + $0x68] sm:$0xff]
    %v53 = vld [vmem:[#allocation2 + $0x70] sm:$0xff]
    %v54 = vld [vmem:[#allocation2 + $0x78] sm:$0xff]
    %v55 = vld [vmem:[#allocation2 + $0x80] sm:$0xff]
    %v56 = vld [vmem:[#allocation2 + $0x88] sm:$0xff]
    %v57 = vld [vmem:[#allocation2 + $0x90] sm:$0xff]
    %v58 = vld [vmem:[#allocation2 + $0x98] sm:$0xff]
    %v59 = vld [vmem:[#allocation2 + $0xa0] sm:$0xff]
    %v60 = vld [vmem:[#allocation2 + $0xa8] sm:$0xff]
    %v61 = vld [vmem:[#allocation2 + $0xb0] sm:$0xff]
    %v62 = vld [vmem:[#allocation2 + $0xb8] sm:$0xff]
    %v63 = vld [vmem:[#allocation2 + $0xc0] sm:$0xff]
    %v64 = vld [vmem:[#allocation2 + $0xc8] sm:$0xff]
    %v65 = vld [vmem:[#allocation2 + $0xd0] sm:$0xff]
    %v66 = vld [vmem:[#allocation2 + $0xd8] sm:$0xff]
    %v67 = vld [vmem:[#allocation2 + $0xe0] sm:$0xff]
    %v68 = vld [vmem:[#allocation2 + $0xe8] sm:$0xff]
    %v69 = vld [vmem:[#allocation2 + $0xf0] sm:$0xff]
    %v70 = vld [vmem:[#allocation2 + $0xf8] sm:$0xff]
    %v71 = vld [vmem:[#allocation2 + $0x100] sm:$0xff]
    %v72 = vld [vmem:[#allocation2 + $0x108] sm:$0xff]
    %v73 = vld [vmem:[#allocation2 + $0x110] sm:$0xff]
    %v74 = vld [vmem:[#allocation2 + $0x118] sm:$0xff]
    %v75 = vld [vmem:[#allocation2 + $0x120] sm:$0xff]
    %v76 = vld [vmem:[#allocation2 + $0x128] sm:$0xff]
    %v77 = vld [vmem:[#allocation2 + $0x130] sm:$0xff]
    %v78 = vld [vmem:[#allocation2 + $0x138] sm:$0xff]
    %v79 = vld [vmem:[#allocation2 + $0x140] sm:$0xff]
    %v80 = vld [vmem:[#allocation2 + $0x148] sm:$0xff]
    %v81 = vld [vmem:[#allocation2 + $0x150] sm:$0xff]
    %v82 = vld [vmem:[#allocation2 + $0x158] sm:$0xff]
    %v83 = vld [vmem:[#allocation2 + $0x160] sm:$0xff]
    %v84 = vld [vmem:[#allocation2 + $0x168] sm:$0xff]
    %v85 = vld [vmem:[#allocation2 + $0x170] sm:$0xff]
    %v86 = vld [vmem:[#allocation2 + $0x178] sm:$0xff]
    %v87 = vld [vmem:[#allocation2 + $0x180] sm:$0xff]
    %v88 = vld [vmem:[#allocation2 + $0x188] sm:$0xff]
    %v89 = vld [vmem:[#allocation2 + $0x190] sm:$0xff]
    %v90 = vld [vmem:[#allocation2 + $0x198] sm:$0xff]
    %v91 = vld [vmem:[#allocation2 + $0x1a0] sm:$0xff]
    %v92 = vld [vmem:[#allocation2 + $0x1a8] sm:$0xff]
    %v93 = vld [vmem:[#allocation2 + $0x1b0] sm:$0xff]
    %v94 = vld [vmem:[#allocation2 + $0x1b8] sm:$0xff]
    %v95 = vld [vmem:[#allocation2 + $0x1c0] sm:$0xff]
    %v96 = vld [vmem:[#allocation2 + $0x1c8] sm:$0xff]
    %v97 = vld [vmem:[#allocation2 + $0x1d0] sm:$0xff]
    %v98 = vld [vmem:[#allocation2 + $0x1d8] sm:$0xff]
    %v99 = vld [vmem:[#allocation2 + $0x1e0] sm:$0xff]
    %v100 = vld [vmem:[#allocation2 + $0x1e8] sm:$0xff]
    %v101 = vld [vmem:[#allocation2 + $0x1f0] sm:$0xff]
    %v102 = vld [vmem:[#allocation2 + $0x1f8] sm:$0xff]
    %v103 = vld [vmem:[#allocation2 + $0x200] sm:$0xff]
    %v104 = vld [vmem:[#allocation2 + $0x208] sm:$0xff]
    %v105 = vld [vmem:[#allocation2 + $0x210] sm:$0xff]
    %v106 = vld [vmem:[#allocation2 + $0x218] sm:$0xff]
    %v107 = vld [vmem:[#allocation2 + $0x220] sm:$0xff]
    %v108 = vld [vmem:[#allocation2 + $0x228] sm:$0xff]
    %v109 = vld [vmem:[#allocation2 + $0x230] sm:$0xff]
    %v110 = vld [vmem:[#allocation2 + $0x238] sm:$0xff]
    %v111 = vld [vmem:[#allocation2 + $0x240] sm:$0xff]
    %v112 = vld [vmem:[#allocation2 + $0x248] sm:$0xff]
    %v113 = vld [vmem:[#allocation2 + $0x250] sm:$0x33]
    %v114 = vld [vmem:[#allocation2 + $0x258] sm:$0x33]
    %v115 = vld [vmem:[%s2] sm:$0xf]
    %v117 = vperm.slane %v115, 0
    %v118 = vperm.slane %v115, 1
    %v119 = vperm.slane %v115, 2
    %v120 = vperm.slane %v115, 3
    %v133 = vunpack.c.l.b16 %v31
    %v134 = vunpack.c.h.b16 %v31
    %v135 = vunpack.c.l.b16 %v32
    %v136 = vunpack.c.l.b16 %v33
    %v137 = vunpack.c.h.b16 %v33
    %v138 = vunpack.c.l.b16 %v34
    %v139 = vunpack.c.l.b16 %v35
    %v140 = vunpack.c.h.b16 %v35
    %v141 = vunpack.c.l.b16 %v36
    %v142 = vunpack.c.l.b16 %v37
    %v143 = vunpack.c.h.b16 %v37
    %v144 = vunpack.c.l.b16 %v38
    %v145 = vpack.c.b16 %v136, %v133
    %v146 = vpack.c.b16 %v137, %v134
    %v147 = vpack.c.b16 %v138, %v135
    %v148 = vpack.c.b16 %v142, %v139
    %v149 = vpack.c.b16 %v143, %v140
    %v150 = vpack.c.b16 %v144, %v141
    %v231 = vunpack.c.l.b16 %v39
    %v232 = vunpack.c.h.b16 %v39
    %v233 = vunpack.c.l.b16 %v40
    %v234 = vunpack.c.h.b16 %v40
    %v235 = vunpack.c.l.b16 %v41
    %v236 = vunpack.c.h.b16 %v41
    %v237 = vunpack.c.l.b16 %v42
    %v238 = vunpack.c.h.b16 %v42
    %v239 = vunpack.c.l.b16 %v43
    %v240 = vunpack.c.h.b16 %v43
    %v241 = vunpack.c.l.b16 %v44
    %v242 = vunpack.c.h.b16 %v44
    %v243 = vunpack.c.l.b16 %v45
    %v244 = vunpack.c.h.b16 %v45
    %v245 = vunpack.c.l.b16 %v46
    %v246 = vunpack.c.h.b16 %v46
    %v247 = vunpack.c.l.b16 %v47
    %v248 = vunpack.c.h.b16 %v47
    %v249 = vunpack.c.l.b16 %v48
    %v250 = vunpack.c.h.b16 %v48
    %v251 = vunpack.c.l.b16 %v49
    %v252 = vunpack.c.h.b16 %v49
    %v253 = vunpack.c.l.b16 %v50
    %v254 = vunpack.c.h.b16 %v50
    %v255 = vunpack.c.l.b16 %v51
    %v256 = vunpack.c.h.b16 %v51
    %v257 = vunpack.c.l.b16 %v52
    %v258 = vunpack.c.h.b16 %v52
    %v259 = vunpack.c.l.b16 %v53
    %v260 = vunpack.c.h.b16 %v53
    %v261 = vunpack.c.l.b16 %v54
    %v262 = vunpack.c.h.b16 %v54
    %v263 = vunpack.c.l.b16 %v55
    %v264 = vunpack.c.h.b16 %v55
    %v265 = vunpack.c.l.b16 %v56
    %v266 = vunpack.c.h.b16 %v56
    %v267 = vunpack.c.l.b16 %v57
    %v268 = vunpack.c.h.b16 %v57
    %v269 = vunpack.c.l.b16 %v58
    %v270 = vunpack.c.h.b16 %v58
    %v271 = vunpack.c.l.b16 %v59
    %v272 = vunpack.c.h.b16 %v59
    %v273 = vunpack.c.l.b16 %v60
    %v274 = vunpack.c.h.b16 %v60
    %v275 = vunpack.c.l.b16 %v61
    %v276 = vunpack.c.h.b16 %v61
    %v277 = vunpack.c.l.b16 %v62
    %v278 = vunpack.c.h.b16 %v62
    %v279 = vunpack.c.l.b16 %v63
    %v280 = vunpack.c.h.b16 %v63
    %v281 = vunpack.c.l.b16 %v64
    %v282 = vunpack.c.h.b16 %v64
    %v283 = vunpack.c.l.b16 %v65
    %v284 = vunpack.c.h.b16 %v65
    %v285 = vunpack.c.l.b16 %v66
    %v286 = vunpack.c.h.b16 %v66
    %v287 = vunpack.c.l.b16 %v67
    %v288 = vunpack.c.h.b16 %v67
    %v289 = vunpack.c.l.b16 %v68
    %v290 = vunpack.c.h.b16 %v68
    %v291 = vunpack.c.l.b16 %v69
    %v292 = vunpack.c.h.b16 %v69
    %v293 = vunpack.c.l.b16 %v70
    %v294 = vunpack.c.h.b16 %v70
    %v295 = vunpack.c.l.b16 %v71
    %v296 = vunpack.c.h.b16 %v71
    %v297 = vunpack.c.l.b16 %v72
    %v298 = vunpack.c.h.b16 %v72
    %v299 = vunpack.c.l.b16 %v73
    %v300 = vunpack.c.h.b16 %v73
    %v301 = vunpack.c.l.b16 %v74
    %v302 = vunpack.c.h.b16 %v74
    %v303 = vunpack.c.l.b16 %v75
    %v304 = vunpack.c.h.b16 %v75
    %v305 = vunpack.c.l.b16 %v76
    %v306 = vunpack.c.h.b16 %v76
    %v307 = vunpack.c.l.b16 %v77
    %v308 = vunpack.c.h.b16 %v77
    %v309 = vunpack.c.l.b16 %v78
    %v310 = vunpack.c.h.b16 %v78
    %v311 = vunpack.c.l.b16 %v79
    %v312 = vunpack.c.h.b16 %v79
    %v313 = vunpack.c.l.b16 %v80
    %v314 = vunpack.c.h.b16 %v80
    %v315 = vunpack.c.l.b16 %v81
    %v316 = vunpack.c.h.b16 %v81
    %v317 = vunpack.c.l.b16 %v82
    %v318 = vunpack.c.h.b16 %v82
    %v319 = vunpack.c.l.b16 %v83
    %v320 = vunpack.c.h.b16 %v83
    %v321 = vunpack.c.l.b16 %v84
    %v322 = vunpack.c.h.b16 %v84
    %v323 = vunpack.c.l.b16 %v85
    %v324 = vunpack.c.h.b16 %v85
    %v325 = vunpack.c.l.b16 %v86
    %v326 = vunpack.c.h.b16 %v86
    %v327 = vunpack.c.l.b16 %v87
    %v328 = vunpack.c.h.b16 %v87
    %v329 = vunpack.c.l.b16 %v88
    %v330 = vunpack.c.h.b16 %v88
    %v331 = vunpack.c.l.b16 %v89
    %v332 = vunpack.c.h.b16 %v89
    %v333 = vunpack.c.l.b16 %v90
    %v334 = vunpack.c.h.b16 %v90
    %v335 = vunpack.c.l.b16 %v91
    %v336 = vunpack.c.h.b16 %v91
    %v337 = vunpack.c.l.b16 %v92
    %v338 = vunpack.c.h.b16 %v92
    %v339 = vunpack.c.l.b16 %v93
    %v340 = vunpack.c.h.b16 %v93
    %v341 = vunpack.c.l.b16 %v94
    %v342 = vunpack.c.h.b16 %v94
    %v343 = vunpack.c.l.b16 %v95
    %v344 = vunpack.c.h.b16 %v95
    %v345 = vunpack.c.l.b16 %v96
    %v346 = vunpack.c.h.b16 %v96
    %v347 = vunpack.c.l.b16 %v97
    %v348 = vunpack.c.h.b16 %v97
    %v349 = vunpack.c.l.b16 %v98
    %v350 = vunpack.c.h.b16 %v98
    %v351 = vunpack.c.l.b16 %v99
    %v352 = vunpack.c.h.b16 %v99
    %v353 = vunpack.c.l.b16 %v100
    %v354 = vunpack.c.h.b16 %v100
    %v355 = vunpack.c.l.b16 %v101
    %v356 = vunpack.c.h.b16 %v101
    %v357 = vunpack.c.l.b16 %v102
    %v358 = vunpack.c.h.b16 %v102
    %v359 = vunpack.c.l.b16 %v103
    %v360 = vunpack.c.h.b16 %v103
    %v361 = vunpack.c.l.b16 %v104
    %v362 = vunpack.c.h.b16 %v104
    %v363 = vunpack.c.l.b16 %v105
    %v364 = vunpack.c.h.b16 %v105
    %v365 = vunpack.c.l.b16 %v106
    %v366 = vunpack.c.h.b16 %v106
    %v367 = vunpack.c.l.b16 %v107
    %v368 = vunpack.c.h.b16 %v107
    %v369 = vunpack.c.l.b16 %v108
    %v370 = vunpack.c.h.b16 %v108
    %v371 = vunpack.c.l.b16 %v109
    %v372 = vunpack.c.h.b16 %v109
    %v373 = vunpack.c.l.b16 %v110
    %v374 = vunpack.c.h.b16 %v110
    %v375 = vunpack.c.l.b16 %v111
    %v376 = vunpack.c.h.b16 %v111
    %v377 = vunpack.c.l.b16 %v112
    %v378 = vunpack.c.h.b16 %v112
    %v379 = vunpack.c.l.b16 %v113
    %v380 = vunpack.c.h.b16 %v113
    %v381 = vunpack.c.l.b16 %v114
    %v382 = vunpack.c.h.b16 %v114
    %v383 = vpack.c.b16 %v235, %v231
    %v384 = vpack.c.b16 %v236, %v232
    %v385 = vpack.c.b16 %v237, %v233
    %v386 = vpack.c.b16 %v238, %v234
    %v387 = vpack.c.b16 %v243, %v239
    %v388 = vpack.c.b16 %v244, %v240
    %v389 = vpack.c.b16 %v245, %v241
    %v390 = vpack.c.b16 %v246, %v242
    %v391 = vpack.c.b16 %v251, %v247
    %v392 = vpack.c.b16 %v252, %v248
    %v393 = vpack.c.b16 %v253, %v249
    %v394 = vpack.c.b16 %v254, %v250
    %v395 = vpack.c.b16 %v259, %v255
    %v396 = vpack.c.b16 %v260, %v256
    %v397 = vpack.c.b16 %v261, %v257
    %v398 = vpack.c.b16 %v262, %v258
    %v399 = vpack.c.b16 %v267, %v263
    %v400 = vpack.c.b16 %v268, %v264
    %v401 = vpack.c.b16 %v269, %v265
    %v402 = vpack.c.b16 %v270, %v266
    %v403 = vpack.c.b16 %v275, %v271
    %v404 = vpack.c.b16 %v276, %v272
    %v405 = vpack.c.b16 %v277, %v273
    %v406 = vpack.c.b16 %v278, %v274
    %v407 = vpack.c.b16 %v283, %v279
    %v408 = vpack.c.b16 %v284, %v280
    %v409 = vpack.c.b16 %v285, %v281
    %v410 = vpack.c.b16 %v286, %v282
    %v411 = vpack.c.b16 %v291, %v287
    %v412 = vpack.c.b16 %v292, %v288
    %v413 = vpack.c.b16 %v293, %v289
    %v414 = vpack.c.b16 %v294, %v290
    %v415 = vpack.c.b16 %v299, %v295
    %v416 = vpack.c.b16 %v300, %v296
    %v417 = vpack.c.b16 %v301, %v297
    %v418 = vpack.c.b16 %v302, %v298
    %v419 = vpack.c.b16 %v307, %v303
    %v420 = vpack.c.b16 %v308, %v304
    %v421 = vpack.c.b16 %v309, %v305
    %v422 = vpack.c.b16 %v310, %v306
    %v423 = vpack.c.b16 %v315, %v311
    %v424 = vpack.c.b16 %v316, %v312
    %v425 = vpack.c.b16 %v317, %v313
    %v426 = vpack.c.b16 %v318, %v314
    %v427 = vpack.c.b16 %v323, %v319
    %v428 = vpack.c.b16 %v324, %v320
    %v429 = vpack.c.b16 %v325, %v321
    %v430 = vpack.c.b16 %v326, %v322
    %v431 = vpack.c.b16 %v331, %v327
    %v432 = vpack.c.b16 %v332, %v328
    %v433 = vpack.c.b16 %v333, %v329
    %v434 = vpack.c.b16 %v334, %v330
    %v435 = vpack.c.b16 %v339, %v335
    %v436 = vpack.c.b16 %v340, %v336
    %v437 = vpack.c.b16 %v341, %v337
    %v438 = vpack.c.b16 %v342, %v338
    %v439 = vpack.c.b16 %v347, %v343
    %v440 = vpack.c.b16 %v348, %v344
    %v441 = vpack.c.b16 %v349, %v345
    %v442 = vpack.c.b16 %v350, %v346
    %v443 = vpack.c.b16 %v355, %v351
    %v444 = vpack.c.b16 %v356, %v352
    %v445 = vpack.c.b16 %v357, %v353
    %v446 = vpack.c.b16 %v358, %v354
    %v447 = vpack.c.b16 %v363, %v359
    %v448 = vpack.c.b16 %v364, %v360
    %v449 = vpack.c.b16 %v365, %v361
    %v450 = vpack.c.b16 %v366, %v362
    %v451 = vpack.c.b16 %v371, %v367
    %v452 = vpack.c.b16 %v372, %v368
    %v453 = vpack.c.b16 %v373, %v369
    %v454 = vpack.c.b16 %v374, %v370
    %v455 = vpack.c.b16 %v379, %v375
    %v456 = vpack.c.b16 %v380, %v376
    %v457 = vpack.c.b16 %v381, %v377
    %v458 = vpack.c.b16 %v382, %v378
    %vm531 = vcmask 359424
    %v533 = vsel %vm531, %v147, 0
    %v536 = vsel %vm531, %v150, 0
    %vm538 = vcmask 1045504
    %v540 = vsel %vm538, %v455, 0
    %v543 = vsel %vm538, %v456, 0
    %v546 = vsel %vm538, %v457, 0
    %v549 = vsel %vm538, %v458, 0
    %551 = vmatpush.bf16.msra.mxu0 %v411
    %552 = vmatpush.bf16.msra.mxu0 %v407
    %553 = vmatpush.bf16.msra.mxu0 %v403
    %554 = vmatpush.bf16.msra.mxu0 %v399
    %555 = vmatpush.bf16.msra.mxu0 %v395
    %556 = vmatpush.bf16.msra.mxu0 %v391
    %557 = vmatpush.bf16.msra.mxu0 %v387
    %558 = vmatpush.bf16.msra.mxu0 %v383
    %559 = vmatmul.bf16.gmra.mxu0 %v145
    %v560 = vpop.f32.mrf.mxu0
    %v561 = vadd.f32 %v117, %v560
    %v562 = vpop.f32.mrf.mxu0
    %v563 = vadd.f32 %v117, %v562
    %564 = vmatmul.bf16.gmra.mxu0 %v148
    %v565 = vpop.f32.mrf.mxu0
    %v566 = vadd.f32 %v117, %v565
    %v567 = vpop.f32.mrf.mxu0
    %v568 = vadd.f32 %v117, %v567
    %569 = vdwg.mxu0
    %570 = vmatpush.bf16.msra.mxu0 %v443
    %571 = vmatpush.bf16.msra.mxu0 %v439
    %572 = vmatpush.bf16.msra.mxu0 %v435
    %573 = vmatpush.bf16.msra.mxu0 %v431
    %574 = vmatpush.bf16.msra.mxu0 %v427
    %575 = vmatpush.bf16.msra.mxu0 %v423
    %576 = vmatpush.bf16.msra.mxu0 %v419
    %577 = vmatpush.bf16.msra.mxu0 %v415
    %578 = vmatmul.bf16.gmra.mxu0 %v146
    %v579 = vpop.f32.mrf.mxu0
    %v580 = vadd.f32 %v561, %v579
    %v581 = vpop.f32.mrf.mxu0
    %v582 = vadd.f32 %v563, %v581
    %583 = vmatmul.bf16.gmra.mxu0 %v149
    %v584 = vpop.f32.mrf.mxu0
    %v585 = vadd.f32 %v566, %v584
    %v586 = vpop.f32.mrf.mxu0
    %v587 = vadd.f32 %v568, %v586
    %588 = vdwg.mxu0
    %589 = vmatpush.bf16.msra.mxu0 0
    %590 = vmatpush.bf16.msra.mxu0 0
    %591 = vmatpush.bf16.msra.mxu0 0
    %592 = vmatpush.bf16.msra.mxu0 0
    %593 = vmatpush.bf16.msra.mxu0 0
    %594 = vmatpush.bf16.msra.mxu0 %v540
    %595 = vmatpush.bf16.msra.mxu0 %v451
    %596 = vmatpush.bf16.msra.mxu0 %v447
    %597 = vmatmul.bf16.gmra.mxu0 %v533
    %v598 = vpop.f32.mrf.mxu0
    %v599 = vadd.f32 %v580, %v598
    %v600 = vpop.f32.mrf.mxu0
    %v601 = vadd.f32 %v582, %v600
    %602 = vmatmul.bf16.gmra.mxu0 %v536
    %v603 = vpop.f32.mrf.mxu0
    %v604 = vadd.f32 %v585, %v603
    %v605 = vpop.f32.mrf.mxu0
    %v606 = vadd.f32 %v587, %v605
    %607 = vdwg.mxu0
    %608 = vmatpush.bf16.msra.mxu0 %v412
    %609 = vmatpush.bf16.msra.mxu0 %v408
    %610 = vmatpush.bf16.msra.mxu0 %v404
    %611 = vmatpush.bf16.msra.mxu0 %v400
    %612 = vmatpush.bf16.msra.mxu0 %v396
    %613 = vmatpush.bf16.msra.mxu0 %v392
    %614 = vmatpush.bf16.msra.mxu0 %v388
    %615 = vmatpush.bf16.msra.mxu0 %v384
    %616 = vmatmul.bf16.gmra.mxu0 %v145
    %v617 = vpop.f32.mrf.mxu0
    %v618 = vadd.f32 %v118, %v617
    %v619 = vpop.f32.mrf.mxu0
    %v620 = vadd.f32 %v118, %v619
    %621 = vmatmul.bf16.gmra.mxu0 %v148
    %v622 = vpop.f32.mrf.mxu0
    %v623 = vadd.f32 %v118, %v622
    %v624 = vpop.f32.mrf.mxu0
    %v625 = vadd.f32 %v118, %v624
    %626 = vdwg.mxu0
    %627 = vmatpush.bf16.msra.mxu0 %v444
    %628 = vmatpush.bf16.msra.mxu0 %v440
    %629 = vmatpush.bf16.msra.mxu0 %v436
    %630 = vmatpush.bf16.msra.mxu0 %v432
    %631 = vmatpush.bf16.msra.mxu0 %v428
    %632 = vmatpush.bf16.msra.mxu0 %v424
    %633 = vmatpush.bf16.msra.mxu0 %v420
    %634 = vmatpush.bf16.msra.mxu0 %v416
    %635 = vmatmul.bf16.gmra.mxu0 %v146
    %v636 = vpop.f32.mrf.mxu0
    %v637 = vadd.f32 %v618, %v636
    %v638 = vpop.f32.mrf.mxu0
    %v639 = vadd.f32 %v620, %v638
    %640 = vmatmul.bf16.gmra.mxu0 %v149
    %v641 = vpop.f32.mrf.mxu0
    %v642 = vadd.f32 %v623, %v641
    %v643 = vpop.f32.mrf.mxu0
    %v644 = vadd.f32 %v625, %v643
    %645 = vdwg.mxu0
    %646 = vmatpush.bf16.msra.mxu0 0
    %647 = vmatpush.bf16.msra.mxu0 0
    %648 = vmatpush.bf16.msra.mxu0 0
    %649 = vmatpush.bf16.msra.mxu0 0
    %650 = vmatpush.bf16.msra.mxu0 0
    %651 = vmatpush.bf16.msra.mxu0 %v543
    %652 = vmatpush.bf16.msra.mxu0 %v452
    %653 = vmatpush.bf16.msra.mxu0 %v448
    %654 = vmatmul.bf16.gmra.mxu0 %v533
    %v655 = vpop.f32.mrf.mxu0
    %v656 = vadd.f32 %v637, %v655
    %v657 = vpop.f32.mrf.mxu0
    %v658 = vadd.f32 %v639, %v657
    %659 = vmatmul.bf16.gmra.mxu0 %v536
    %v660 = vpop.f32.mrf.mxu0
    %v661 = vadd.f32 %v642, %v660
    %v662 = vpop.f32.mrf.mxu0
    %v663 = vadd.f32 %v644, %v662
    %664 = vdwg.mxu0
    %665 = vmatpush.bf16.msra.mxu0 %v413
    %666 = vmatpush.bf16.msra.mxu0 %v409
    %667 = vmatpush.bf16.msra.mxu0 %v405
    %668 = vmatpush.bf16.msra.mxu0 %v401
    %669 = vmatpush.bf16.msra.mxu0 %v397
    %670 = vmatpush.bf16.msra.mxu0 %v393
    %671 = vmatpush.bf16.msra.mxu0 %v389
    %672 = vmatpush.bf16.msra.mxu0 %v385
    %673 = vmatmul.bf16.gmra.mxu0 %v145
    %v674 = vpop.f32.mrf.mxu0
    %v675 = vadd.f32 %v119, %v674
    %v676 = vpop.f32.mrf.mxu0
    %v677 = vadd.f32 %v119, %v676
    %678 = vmatmul.bf16.gmra.mxu0 %v148
    %v679 = vpop.f32.mrf.mxu0
    %v680 = vadd.f32 %v119, %v679
    %v681 = vpop.f32.mrf.mxu0
    %v682 = vadd.f32 %v119, %v681
    %683 = vdwg.mxu0
    %684 = vmatpush.bf16.msra.mxu0 %v445
    %685 = vmatpush.bf16.msra.mxu0 %v441
    %686 = vmatpush.bf16.msra.mxu0 %v437
    %687 = vmatpush.bf16.msra.mxu0 %v433
    %688 = vmatpush.bf16.msra.mxu0 %v429
    %689 = vmatpush.bf16.msra.mxu0 %v425
    %690 = vmatpush.bf16.msra.mxu0 %v421
    %691 = vmatpush.bf16.msra.mxu0 %v417
    %692 = vmatmul.bf16.gmra.mxu0 %v146
    %v693 = vpop.f32.mrf.mxu0
    %v694 = vadd.f32 %v675, %v693
    %v695 = vpop.f32.mrf.mxu0
    %v696 = vadd.f32 %v677, %v695
    %697 = vmatmul.bf16.gmra.mxu0 %v149
    %v698 = vpop.f32.mrf.mxu0
    %v699 = vadd.f32 %v680, %v698
    %v700 = vpop.f32.mrf.mxu0
    %v701 = vadd.f32 %v682, %v700
    %702 = vdwg.mxu0
    %703 = vmatpush.bf16.msra.mxu0 0
    %704 = vmatpush.bf16.msra.mxu0 0
    %705 = vmatpush.bf16.msra.mxu0 0
    %706 = vmatpush.bf16.msra.mxu0 0
    %707 = vmatpush.bf16.msra.mxu0 0
    %708 = vmatpush.bf16.msra.mxu0 %v546
    %709 = vmatpush.bf16.msra.mxu0 %v453
    %710 = vmatpush.bf16.msra.mxu0 %v449
    %711 = vmatmul.bf16.gmra.mxu0 %v533
    %v712 = vpop.f32.mrf.mxu0
    %v713 = vadd.f32 %v694, %v712
    %v714 = vpop.f32.mrf.mxu0
    %v715 = vadd.f32 %v696, %v714
    %716 = vmatmul.bf16.gmra.mxu0 %v536
    %v717 = vpop.f32.mrf.mxu0
    %v718 = vadd.f32 %v699, %v717
    %v719 = vpop.f32.mrf.mxu0
    %v720 = vadd.f32 %v701, %v719
    %721 = vdwg.mxu0
    %722 = vmatpush.bf16.msra.mxu0 %v414
    %723 = vmatpush.bf16.msra.mxu0 %v410
    %724 = vmatpush.bf16.msra.mxu0 %v406
    %725 = vmatpush.bf16.msra.mxu0 %v402
    %726 = vmatpush.bf16.msra.mxu0 %v398
    %727 = vmatpush.bf16.msra.mxu0 %v394
    %728 = vmatpush.bf16.msra.mxu0 %v390
    %729 = vmatpush.bf16.msra.mxu0 %v386
    %730 = vmatmul.bf16.gmra.mxu0 %v145
    %v731 = vpop.f32.mrf.mxu0
    %v732 = vadd.f32 %v120, %v731
    %v733 = vpop.f32.mrf.mxu0
    %v734 = vadd.f32 %v120, %v733
    %735 = vmatmul.bf16.gmra.mxu0 %v148
    %v736 = vpop.f32.mrf.mxu0
    %v737 = vadd.f32 %v120, %v736
    %v738 = vpop.f32.mrf.mxu0
    %v739 = vadd.f32 %v120, %v738
    %740 = vdwg.mxu0
    %741 = vmatpush.bf16.msra.mxu0 %v446
    %742 = vmatpush.bf16.msra.mxu0 %v442
    %743 = vmatpush.bf16.msra.mxu0 %v438
    %744 = vmatpush.bf16.msra.mxu0 %v434
    %745 = vmatpush.bf16.msra.mxu0 %v430
    %746 = vmatpush.bf16.msra.mxu0 %v426
    %747 = vmatpush.bf16.msra.mxu0 %v422
    %748 = vmatpush.bf16.msra.mxu0 %v418
    %749 = vmatmul.bf16.gmra.mxu0 %v146
    %v750 = vpop.f32.mrf.mxu0
    %v751 = vadd.f32 %v732, %v750
    %v752 = vpop.f32.mrf.mxu0
    %v753 = vadd.f32 %v734, %v752
    %754 = vmatmul.bf16.gmra.mxu0 %v149
    %v755 = vpop.f32.mrf.mxu0
    %v756 = vadd.f32 %v737, %v755
    %v757 = vpop.f32.mrf.mxu0
    %v758 = vadd.f32 %v739, %v757
    %759 = vdwg.mxu0
    %760 = vmatpush.bf16.msra.mxu0 0
    %761 = vmatpush.bf16.msra.mxu0 0
    %762 = vmatpush.bf16.msra.mxu0 0
    %763 = vmatpush.bf16.msra.mxu0 0
    %764 = vmatpush.bf16.msra.mxu0 0
    %765 = vmatpush.bf16.msra.mxu0 %v549
    %766 = vmatpush.bf16.msra.mxu0 %v454
    %767 = vmatpush.bf16.msra.mxu0 %v450
    %768 = vmatmul.bf16.gmra.mxu0 %v533
    %v769 = vpop.f32.mrf.mxu0
    %v770 = vadd.f32 %v751, %v769
    %v771 = vpop.f32.mrf.mxu0
    %v772 = vadd.f32 %v753, %v771
    %773 = vmatmul.bf16.gmra.mxu0 %v536
    %v774 = vpop.f32.mrf.mxu0
    %v775 = vadd.f32 %v756, %v774
    %v776 = vpop.f32.mrf.mxu0
    %v777 = vadd.f32 %v758, %v776
    %778 = vdwg.mxu0
    %779 = vst [vmem:[%s3] sm:$0xff] %v599
    %780 = vst [vmem:[%s3 + $0x8] sm:$0xff] %v656
    %781 = vst [vmem:[%s3 + $0x10] sm:$0xff] %v713
    %782 = vst [vmem:[%s3 + $0x18] sm:$0xff] %v770
    %783 = vst [vmem:[%s3 + $0x20] sm:$0xff] %v601
    %784 = vst [vmem:[%s3 + $0x28] sm:$0xff] %v658
    %785 = vst [vmem:[%s3 + $0x30] sm:$0xff] %v715
    %786 = vst [vmem:[%s3 + $0x38] sm:$0xff] %v772
    %787 = vst [vmem:[%s3 + $0x40] sm:$0xff] %v604
    %788 = vst [vmem:[%s3 + $0x48] sm:$0xff] %v661
    %789 = vst [vmem:[%s3 + $0x50] sm:$0xff] %v718
    %790 = vst [vmem:[%s3 + $0x58] sm:$0xff] %v775
    %791 = vst [vmem:[%s3 + $0x60] sm:$0xff] %v606
    %792 = vst [vmem:[%s3 + $0x68] sm:$0xff] %v663
    %793 = vst [vmem:[%s3 + $0x70] sm:$0xff] %v720
    %794 = vst [vmem:[%s3 + $0x78] sm:$0xff] %v777
    // Predicated region
    $region18: #{tnet_as_forward.5} parent=1 // pred_check
      _
    $region19: #{tnet_as_forward.5} parent=1 // pred_check_branch
      %796 = sbr.rel (0) target = $region21
    $region20: #{tnet_as_forward.5} parent=1 // pred_region
      _
    $region21: #{tnet_as_forward.5} parent=1 // pred_fallthru
      _
    // Predicated region
    $region22: #{tnet_as_forward.5} parent=1 // pred_check
      _
    $region23: #{tnet_as_forward.5} parent=1 // pred_check_branch
      %798 = sbr.rel (0) target = $region25
    $region24: #{tnet_as_forward.5} parent=1 // pred_region
      _
    $region25: #{tnet_as_forward.5} parent=1 // pred_fallthru
      _
    %799 = vsyncpa [#allocation3], 1

// kernel: tnet_as_forward.7
$region0: #{tnet_as_forward.7}
  #allocation0 [shape = 'u32[]', space=smem, size = 0x4, offset = 0x4, fixed_abs, tag = 'smem constant byte address 0x4 - core index']
  #allocation1 [shape = 'u32[72,128]{1,0:T(1,128)}', space=vmem, size = 0x9000, scoped, tag = 'internal scratch']
  %s0 = inlined_call_operand.vmem [shape: bf16[16,300], index: 0, kind: input, shape index: {}]
  %s1 = inlined_call_operand.vmem [shape: bf16[300,512], index: 1, kind: input, shape index: {}]
  %s2 = inlined_call_operand.vmem [shape: f32[1,512], index: 2, kind: input, shape index: {}]
  %s3 = inlined_call_operand.vmem [shape: f32[16,512], index: 3, kind: output, shape index: {}]
  %s4 = sld [smem:[#allocation0]]
  $region22: #{tnet_as_forward.7} parent=0
    _
  %s6 = ssub.s32 1, %s4
  %s7 = scalar_select 0, %s6, %s4
  // Predicated region
  $region2: #{tnet_as_forward.7} parent=0 // pred_check
    _
  $region3: #{tnet_as_forward.7} parent=0 // pred_check_branch
    %9 = sbr.rel (0) target = $region5
  $region4: #{tnet_as_forward.7} parent=0 // pred_region
    _
  $region5: #{tnet_as_forward.7} parent=0 // pred_fallthru
    _
  // Predicated region
  $region6: #{tnet_as_forward.7} parent=0 // pred_check
    _
  $region7: #{tnet_as_forward.7} parent=0 // pred_check_branch
    %11 = sbr.rel (0) target = $region9
  $region8: #{tnet_as_forward.7} parent=0 // pred_region
    _
  $region9: #{tnet_as_forward.7} parent=0 // pred_fallthru
    _
  // Predicated region
  $region10: #{tnet_as_forward.7} parent=0 // pred_check
    _
  $region11: #{tnet_as_forward.7} parent=0 // pred_check_branch
    %13 = sbr.rel (0) target = $region13
  $region12: #{tnet_as_forward.7} parent=0 // pred_region
    _
  $region13: #{tnet_as_forward.7} parent=0 // pred_fallthru
    _
  %v15 = vld [vmem:[%s0] sm:$0xff]
  %v16 = vld [vmem:[%s0 + $0x8] sm:$0xf]
  %v17 = vld [vmem:[%s0 + $0xc] sm:$0xff]
  %v18 = vld [vmem:[%s0 + $0x14] sm:$0xf]
  %v19 = vld [vmem:[%s1] sm:$0xff]
  %v20 = vld [vmem:[%s1 + $0x8] sm:$0xff]
  %v21 = vld [vmem:[%s1 + $0x10] sm:$0xff]
  %v22 = vld [vmem:[%s1 + $0x18] sm:$0xff]
  %v23 = vld [vmem:[%s1 + $0x20] sm:$0xff]
  %v24 = vld [vmem:[%s1 + $0x28] sm:$0xff]
  %v25 = vld [vmem:[%s1 + $0x30] sm:$0xff]
  %v26 = vld [vmem:[%s1 + $0x38] sm:$0xff]
  %v27 = vld [vmem:[%s1 + $0x40] sm:$0xff]
  %v28 = vld [vmem:[%s1 + $0x48] sm:$0xff]
  %v29 = vld [vmem:[%s1 + $0x50] sm:$0xff]
  %v30 = vld [vmem:[%s1 + $0x58] sm:$0xff]
  %v31 = vld [vmem:[%s1 + $0x60] sm:$0xff]
  %v32 = vld [vmem:[%s1 + $0x68] sm:$0xff]
  %v33 = vld [vmem:[%s1 + $0x70] sm:$0xff]
  %v34 = vld [vmem:[%s1 + $0x78] sm:$0xff]
  %v35 = vld [vmem:[%s1 + $0x80] sm:$0xff]
  %v36 = vld [vmem:[%s1 + $0x88] sm:$0xff]
  %v37 = vld [vmem:[%s1 + $0x90] sm:$0xff]
  %v38 = vld [vmem:[%s1 + $0x98] sm:$0xff]
  %v39 = vld [vmem:[%s1 + $0xa0] sm:$0xff]
  %v40 = vld [vmem:[%s1 + $0xa8] sm:$0xff]
  %v41 = vld [vmem:[%s1 + $0xb0] sm:$0xff]
  %v42 = vld [vmem:[%s1 + $0xb8] sm:$0xff]
  %v43 = vld [vmem:[%s1 + $0xc0] sm:$0xff]
  %v44 = vld [vmem:[%s1 + $0xc8] sm:$0xff]
  %v45 = vld [vmem:[%s1 + $0xd0] sm:$0xff]
  %v46 = vld [vmem:[%s1 + $0xd8] sm:$0xff]
  %v47 = vld [vmem:[%s1 + $0xe0] sm:$0xff]
  %v48 = vld [vmem:[%s1 + $0xe8] sm:$0xff]
  %v49 = vld [vmem:[%s1 + $0xf0] sm:$0xff]
  %v50 = vld [vmem:[%s1 + $0xf8] sm:$0xff]
  %v51 = vld [vmem:[%s1 + $0x100] sm:$0xff]
  %v52 = vld [vmem:[%s1 + $0x108] sm:$0xff]
  %v53 = vld [vmem:[%s1 + $0x110] sm:$0xff]
  %v54 = vld [vmem:[%s1 + $0x118] sm:$0xff]
  %v55 = vld [vmem:[%s1 + $0x120] sm:$0xff]
  %v56 = vld [vmem:[%s1 + $0x128] sm:$0xff]
  %v57 = vld [vmem:[%s1 + $0x130] sm:$0xff]
  %v58 = vld [vmem:[%s1 + $0x138] sm:$0xff]
  %v59 = vld [vmem:[%s1 + $0x140] sm:$0xff]
  %v60 = vld [vmem:[%s1 + $0x148] sm:$0xff]
  %v61 = vld [vmem:[%s1 + $0x150] sm:$0xff]
  %v62 = vld [vmem:[%s1 + $0x158] sm:$0xff]
  %v63 = vld [vmem:[%s1 + $0x160] sm:$0xff]
  %v64 = vld [vmem:[%s1 + $0x168] sm:$0xff]
  %v65 = vld [vmem:[%s1 + $0x170] sm:$0xff]
  %v66 = vld [vmem:[%s1 + $0x178] sm:$0xff]
  %v67 = vld [vmem:[%s1 + $0x180] sm:$0xff]
  %v68 = vld [vmem:[%s1 + $0x188] sm:$0xff]
  %v69 = vld [vmem:[%s1 + $0x190] sm:$0xff]
  %v70 = vld [vmem:[%s1 + $0x198] sm:$0xff]
  %v71 = vld [vmem:[%s1 + $0x1a0] sm:$0xff]
  %v72 = vld [vmem:[%s1 + $0x1a8] sm:$0xff]
  %v73 = vld [vmem:[%s1 + $0x1b0] sm:$0xff]
  %v74 = vld [vmem:[%s1 + $0x1b8] sm:$0xff]
  %v75 = vld [vmem:[%s1 + $0x1c0] sm:$0xff]
  %v76 = vld [vmem:[%s1 + $0x1c8] sm:$0xff]
  %v77 = vld [vmem:[%s1 + $0x1d0] sm:$0xff]
  %v78 = vld [vmem:[%s1 + $0x1d8] sm:$0xff]
  %v79 = vld [vmem:[%s1 + $0x1e0] sm:$0xff]
  %v80 = vld [vmem:[%s1 + $0x1e8] sm:$0xff]
  %v81 = vld [vmem:[%s1 + $0x1f0] sm:$0xff]
  %v82 = vld [vmem:[%s1 + $0x1f8] sm:$0xff]
  %v83 = vld [vmem:[%s1 + $0x200] sm:$0xff]
  %v84 = vld [vmem:[%s1 + $0x208] sm:$0xff]
  %v85 = vld [vmem:[%s1 + $0x210] sm:$0xff]
  %v86 = vld [vmem:[%s1 + $0x218] sm:$0xff]
  %v87 = vld [vmem:[%s1 + $0x220] sm:$0xff]
  %v88 = vld [vmem:[%s1 + $0x228] sm:$0xff]
  %v89 = vld [vmem:[%s1 + $0x230] sm:$0xff]
  %v90 = vld [vmem:[%s1 + $0x238] sm:$0xff]
  %v91 = vld [vmem:[%s1 + $0x240] sm:$0xff]
  %v92 = vld [vmem:[%s1 + $0x248] sm:$0xff]
  %v93 = vld [vmem:[%s1 + $0x250] sm:$0x33]
  %v94 = vld [vmem:[%s1 + $0x258] sm:$0x33]
  %v95 = vld [vmem:[%s2] sm:$0xf]
  %v97 = vperm.slane %v95, 0
  %v98 = vperm.slane %v95, 1
  %v99 = vperm.slane %v95, 2
  %v100 = vperm.slane %v95, 3
  %v109 = vunpack.c.l.b16 %v15
  %v110 = vunpack.c.h.b16 %v15
  %v111 = vunpack.c.l.b16 %v16
  %v112 = vunpack.c.l.b16 %v17
  %v113 = vunpack.c.h.b16 %v17
  %v114 = vunpack.c.l.b16 %v18
  %v115 = vpack.c.b16 %v112, %v109
  %v116 = vpack.c.b16 %v113, %v110
  %v117 = vpack.c.b16 %v114, %v111
  %v196 = vunpack.c.l.b16 %v19
  %v197 = vunpack.c.h.b16 %v19
  %v198 = vunpack.c.l.b16 %v20
  %v199 = vunpack.c.h.b16 %v20
  %v200 = vunpack.c.l.b16 %v21
  %v201 = vunpack.c.h.b16 %v21
  %v202 = vunpack.c.l.b16 %v22
  %v203 = vunpack.c.h.b16 %v22
  %v204 = vunpack.c.l.b16 %v23
  %v205 = vunpack.c.h.b16 %v23
  %v206 = vunpack.c.l.b16 %v24
  %v207 = vunpack.c.h.b16 %v24
  %v208 = vunpack.c.l.b16 %v25
  %v209 = vunpack.c.h.b16 %v25
  %v210 = vunpack.c.l.b16 %v26
  %v211 = vunpack.c.h.b16 %v26
  %v212 = vunpack.c.l.b16 %v27
  %v213 = vunpack.c.h.b16 %v27
  %v214 = vunpack.c.l.b16 %v28
  %v215 = vunpack.c.h.b16 %v28
  %v216 = vunpack.c.l.b16 %v29
  %v217 = vunpack.c.h.b16 %v29
  %v218 = vunpack.c.l.b16 %v30
  %v219 = vunpack.c.h.b16 %v30
  %v220 = vunpack.c.l.b16 %v31
  %v221 = vunpack.c.h.b16 %v31
  %v222 = vunpack.c.l.b16 %v32
  %v223 = vunpack.c.h.b16 %v32
  %v224 = vunpack.c.l.b16 %v33
  %v225 = vunpack.c.h.b16 %v33
  %v226 = vunpack.c.l.b16 %v34
  %v227 = vunpack.c.h.b16 %v34
  %v228 = vunpack.c.l.b16 %v35
  %v229 = vunpack.c.h.b16 %v35
  %v230 = vunpack.c.l.b16 %v36
  %v231 = vunpack.c.h.b16 %v36
  %v232 = vunpack.c.l.b16 %v37
  %v233 = vunpack.c.h.b16 %v37
  %v234 = vunpack.c.l.b16 %v38
  %v235 = vunpack.c.h.b16 %v38
  %v236 = vunpack.c.l.b16 %v39
  %v237 = vunpack.c.h.b16 %v39
  %v238 = vunpack.c.l.b16 %v40
  %v239 = vunpack.c.h.b16 %v40
  %v240 = vunpack.c.l.b16 %v41
  %v241 = vunpack.c.h.b16 %v41
  %v242 = vunpack.c.l.b16 %v42
  %v243 = vunpack.c.h.b16 %v42
  %v244 = vunpack.c.l.b16 %v43
  %v245 = vunpack.c.h.b16 %v43
  %v246 = vunpack.c.l.b16 %v44
  %v247 = vunpack.c.h.b16 %v44
  %v248 = vunpack.c.l.b16 %v45
  %v249 = vunpack.c.h.b16 %v45
  %v250 = vunpack.c.l.b16 %v46
  %v251 = vunpack.c.h.b16 %v46
  %v252 = vunpack.c.l.b16 %v47
  %v253 = vunpack.c.h.b16 %v47
  %v254 = vunpack.c.l.b16 %v48
  %v255 = vunpack.c.h.b16 %v48
  %v256 = vunpack.c.l.b16 %v49
  %v257 = vunpack.c.h.b16 %v49
  %v258 = vunpack.c.l.b16 %v50
  %v259 = vunpack.c.h.b16 %v50
  %v260 = vunpack.c.l.b16 %v51
  %v261 = vunpack.c.h.b16 %v51
  %v262 = vunpack.c.l.b16 %v52
  %v263 = vunpack.c.h.b16 %v52
  %v264 = vunpack.c.l.b16 %v53
  %v265 = vunpack.c.h.b16 %v53
  %v266 = vunpack.c.l.b16 %v54
  %v267 = vunpack.c.h.b16 %v54
  %v268 = vunpack.c.l.b16 %v55
  %v269 = vunpack.c.h.b16 %v55
  %v270 = vunpack.c.l.b16 %v56
  %v271 = vunpack.c.h.b16 %v56
  %v272 = vunpack.c.l.b16 %v57
  %v273 = vunpack.c.h.b16 %v57
  %v274 = vunpack.c.l.b16 %v58
  %v275 = vunpack.c.h.b16 %v58
  %v276 = vunpack.c.l.b16 %v59
  %v277 = vunpack.c.h.b16 %v59
  %v278 = vunpack.c.l.b16 %v60
  %v279 = vunpack.c.h.b16 %v60
  %v280 = vunpack.c.l.b16 %v61
  %v281 = vunpack.c.h.b16 %v61
  %v282 = vunpack.c.l.b16 %v62
  %v283 = vunpack.c.h.b16 %v62
  %v284 = vunpack.c.l.b16 %v63
  %v285 = vunpack.c.h.b16 %v63
  %v286 = vunpack.c.l.b16 %v64
  %v287 = vunpack.c.h.b16 %v64
  %v288 = vunpack.c.l.b16 %v65
  %v289 = vunpack.c.h.b16 %v65
  %v290 = vunpack.c.l.b16 %v66
  %v291 = vunpack.c.h.b16 %v66
  %v292 = vunpack.c.l.b16 %v67
  %v293 = vunpack.c.h.b16 %v67
  %v294 = vunpack.c.l.b16 %v68
  %v295 = vunpack.c.h.b16 %v68
  %v296 = vunpack.c.l.b16 %v69
  %v297 = vunpack.c.h.b16 %v69
  %v298 = vunpack.c.l.b16 %v70
  %v299 = vunpack.c.h.b16 %v70
  %v300 = vunpack.c.l.b16 %v71
  %v301 = vunpack.c.h.b16 %v71
  %v302 = vunpack.c.l.b16 %v72
  %v303 = vunpack.c.h.b16 %v72
  %v304 = vunpack.c.l.b16 %v73
  %v305 = vunpack.c.h.b16 %v73
  %v306 = vunpack.c.l.b16 %v74
  %v307 = vunpack.c.h.b16 %v74
  %v308 = vunpack.c.l.b16 %v75
  %v309 = vunpack.c.h.b16 %v75
  %v310 = vunpack.c.l.b16 %v76
  %v311 = vunpack.c.h.b16 %v76
  %v312 = vunpack.c.l.b16 %v77
  %v313 = vunpack.c.h.b16 %v77
  %v314 = vunpack.c.l.b16 %v78
  %v315 = vunpack.c.h.b16 %v78
  %v316 = vunpack.c.l.b16 %v79
  %v317 = vunpack.c.h.b16 %v79
  %v318 = vunpack.c.l.b16 %v80
  %v319 = vunpack.c.h.b16 %v80
  %v320 = vunpack.c.l.b16 %v81
  %v321 = vunpack.c.h.b16 %v81
  %v322 = vunpack.c.l.b16 %v82
  %v323 = vunpack.c.h.b16 %v82
  %v324 = vunpack.c.l.b16 %v83
  %v325 = vunpack.c.h.b16 %v83
  %v326 = vunpack.c.l.b16 %v84
  %v327 = vunpack.c.h.b16 %v84
  %v328 = vunpack.c.l.b16 %v85
  %v329 = vunpack.c.h.b16 %v85
  %v330 = vunpack.c.l.b16 %v86
  %v331 = vunpack.c.h.b16 %v86
  %v332 = vunpack.c.l.b16 %v87
  %v333 = vunpack.c.h.b16 %v87
  %v334 = vunpack.c.l.b16 %v88
  %v335 = vunpack.c.h.b16 %v88
  %v336 = vunpack.c.l.b16 %v89
  %v337 = vunpack.c.h.b16 %v89
  %v338 = vunpack.c.l.b16 %v90
  %v339 = vunpack.c.h.b16 %v90
  %v340 = vunpack.c.l.b16 %v91
  %v341 = vunpack.c.h.b16 %v91
  %v342 = vunpack.c.l.b16 %v92
  %v343 = vunpack.c.h.b16 %v92
  %v344 = vunpack.c.l.b16 %v93
  %v345 = vunpack.c.h.b16 %v93
  %v346 = vunpack.c.l.b16 %v94
  %v347 = vunpack.c.h.b16 %v94
  %v348 = vpack.c.b16 %v200, %v196
  %v349 = vpack.c.b16 %v201, %v197
  %v350 = vpack.c.b16 %v202, %v198
  %v351 = vpack.c.b16 %v203, %v199
  %v352 = vpack.c.b16 %v208, %v204
  %v353 = vpack.c.b16 %v209, %v205
  %v354 = vpack.c.b16 %v210, %v206
  %v355 = vpack.c.b16 %v211, %v207
  %v356 = vpack.c.b16 %v216, %v212
  %v357 = vpack.c.b16 %v217, %v213
  %v358 = vpack.c.b16 %v218, %v214
  %v359 = vpack.c.b16 %v219, %v215
  %v360 = vpack.c.b16 %v224, %v220
  %v361 = vpack.c.b16 %v225, %v221
  %v362 = vpack.c.b16 %v226, %v222
  %v363 = vpack.c.b16 %v227, %v223
  %v364 = vpack.c.b16 %v232, %v228
  %v365 = vpack.c.b16 %v233, %v229
  %v366 = vpack.c.b16 %v234, %v230
  %v367 = vpack.c.b16 %v235, %v231
  %v368 = vpack.c.b16 %v240, %v236
  %v369 = vpack.c.b16 %v241, %v237
  %v370 = vpack.c.b16 %v242, %v238
  %v371 = vpack.c.b16 %v243, %v239
  %v372 = vpack.c.b16 %v248, %v244
  %v373 = vpack.c.b16 %v249, %v245
  %v374 = vpack.c.b16 %v250, %v246
  %v375 = vpack.c.b16 %v251, %v247
  %v376 = vpack.c.b16 %v256, %v252
  %v377 = vpack.c.b16 %v257, %v253
  %v378 = vpack.c.b16 %v258, %v254
  %v379 = vpack.c.b16 %v259, %v255
  %v380 = vpack.c.b16 %v264, %v260
  %v381 = vpack.c.b16 %v265, %v261
  %v382 = vpack.c.b16 %v266, %v262
  %v383 = vpack.c.b16 %v267, %v263
  %v384 = vpack.c.b16 %v272, %v268
  %v385 = vpack.c.b16 %v273, %v269
  %v386 = vpack.c.b16 %v274, %v270
  %v387 = vpack.c.b16 %v275, %v271
  %v388 = vpack.c.b16 %v280, %v276
  %v389 = vpack.c.b16 %v281, %v277
  %v390 = vpack.c.b16 %v282, %v278
  %v391 = vpack.c.b16 %v283, %v279
  %v392 = vpack.c.b16 %v288, %v284
  %v393 = vpack.c.b16 %v289, %v285
  %v394 = vpack.c.b16 %v290, %v286
  %v395 = vpack.c.b16 %v291, %v287
  %v396 = vpack.c.b16 %v296, %v292
  %v397 = vpack.c.b16 %v297, %v293
  %v398 = vpack.c.b16 %v298, %v294
  %v399 = vpack.c.b16 %v299, %v295
  %v400 = vpack.c.b16 %v304, %v300
  %v401 = vpack.c.b16 %v305, %v301
  %v402 = vpack.c.b16 %v306, %v302
  %v403 = vpack.c.b16 %v307, %v303
  %v404 = vpack.c.b16 %v312, %v308
  %v405 = vpack.c.b16 %v313, %v309
  %v406 = vpack.c.b16 %v314, %v310
  %v407 = vpack.c.b16 %v315, %v311
  %v408 = vpack.c.b16 %v320, %v316
  %v409 = vpack.c.b16 %v321, %v317
  %v410 = vpack.c.b16 %v322, %v318
  %v411 = vpack.c.b16 %v323, %v319
  %v412 = vpack.c.b16 %v328, %v324
  %v413 = vpack.c.b16 %v329, %v325
  %v414 = vpack.c.b16 %v330, %v326
  %v415 = vpack.c.b16 %v331, %v327
  %v416 = vpack.c.b16 %v336, %v332
  %v417 = vpack.c.b16 %v337, %v333
  %v418 = vpack.c.b16 %v338, %v334
  %v419 = vpack.c.b16 %v339, %v335
  %v420 = vpack.c.b16 %v344, %v340
  %v421 = vpack.c.b16 %v345, %v341
  %v422 = vpack.c.b16 %v346, %v342
  %v423 = vpack.c.b16 %v347, %v343
  %vm496 = vcmask 359424
  %v498 = vsel %vm496, %v117, 0
  %vm500 = vcmask 1045504
  %v502 = vsel %vm500, %v420, 0
  %v505 = vsel %vm500, %v421, 0
  %v508 = vsel %vm500, %v422, 0
  %v511 = vsel %vm500, %v423, 0
  %513 = vmatpush.bf16.msra.mxu0 %v376
  %514 = vmatpush.bf16.msra.mxu0 %v372
  %515 = vmatpush.bf16.msra.mxu0 %v368
  %516 = vmatpush.bf16.msra.mxu0 %v364
  %517 = vmatpush.bf16.msra.mxu0 %v360
  %518 = vmatpush.bf16.msra.mxu0 %v356
  %519 = vmatpush.bf16.msra.mxu0 %v352
  %520 = vmatpush.bf16.msra.mxu0 %v348
  %521 = vmatmul.bf16.gmra.mxu0 %v115
  %v522 = vpop.f32.mrf.mxu0
  %v523 = vadd.f32 %v97, %v522
  %v524 = vpop.f32.mrf.mxu0
  %v525 = vadd.f32 %v97, %v524
  %526 = vdwg.mxu0
  %527 = vmatpush.bf16.msra.mxu0 %v408
  %528 = vmatpush.bf16.msra.mxu0 %v404
  %529 = vmatpush.bf16.msra.mxu0 %v400
  %530 = vmatpush.bf16.msra.mxu0 %v396
  %531 = vmatpush.bf16.msra.mxu0 %v392
  %532 = vmatpush.bf16.msra.mxu0 %v388
  %533 = vmatpush.bf16.msra.mxu0 %v384
  %534 = vmatpush.bf16.msra.mxu0 %v380
  %535 = vmatmul.bf16.gmra.mxu0 %v116
  %v536 = vpop.f32.mrf.mxu0
  %v537 = vadd.f32 %v523, %v536
  %v538 = vpop.f32.mrf.mxu0
  %v539 = vadd.f32 %v525, %v538
  %540 = vdwg.mxu0
  %541 = vmatpush.bf16.msra.mxu0 0
  %542 = vmatpush.bf16.msra.mxu0 0
  %543 = vmatpush.bf16.msra.mxu0 0
  %544 = vmatpush.bf16.msra.mxu0 0
  %545 = vmatpush.bf16.msra.mxu0 0
  %546 = vmatpush.bf16.msra.mxu0 %v502
  %547 = vmatpush.bf16.msra.mxu0 %v416
  %548 = vmatpush.bf16.msra.mxu0 %v412
  %549 = vmatmul.bf16.gmra.mxu0 %v498
  %v550 = vpop.f32.mrf.mxu0
  %v551 = vadd.f32 %v537, %v550
  %v552 = vpop.f32.mrf.mxu0
  %v553 = vadd.f32 %v539, %v552
  %554 = vdwg.mxu0
  %555 = vmatpush.bf16.msra.mxu0 %v377
  %556 = vmatpush.bf16.msra.mxu0 %v373
  %557 = vmatpush.bf16.msra.mxu0 %v369
  %558 = vmatpush.bf16.msra.mxu0 %v365
  %559 = vmatpush.bf16.msra.mxu0 %v361
  %560 = vmatpush.bf16.msra.mxu0 %v357
  %561 = vmatpush.bf16.msra.mxu0 %v353
  %562 = vmatpush.bf16.msra.mxu0 %v349
  %563 = vmatmul.bf16.gmra.mxu0 %v115
  %v564 = vpop.f32.mrf.mxu0
  %v565 = vadd.f32 %v98, %v564
  %v566 = vpop.f32.mrf.mxu0
  %v567 = vadd.f32 %v98, %v566
  %568 = vdwg.mxu0
  %569 = vmatpush.bf16.msra.mxu0 %v409
  %570 = vmatpush.bf16.msra.mxu0 %v405
  %571 = vmatpush.bf16.msra.mxu0 %v401
  %572 = vmatpush.bf16.msra.mxu0 %v397
  %573 = vmatpush.bf16.msra.mxu0 %v393
  %574 = vmatpush.bf16.msra.mxu0 %v389
  %575 = vmatpush.bf16.msra.mxu0 %v385
  %576 = vmatpush.bf16.msra.mxu0 %v381
  %577 = vmatmul.bf16.gmra.mxu0 %v116
  %v578 = vpop.f32.mrf.mxu0
  %v579 = vadd.f32 %v565, %v578
  %v580 = vpop.f32.mrf.mxu0
  %v581 = vadd.f32 %v567, %v580
  %582 = vdwg.mxu0
  %583 = vmatpush.bf16.msra.mxu0 0
  %584 = vmatpush.bf16.msra.mxu0 0
  %585 = vmatpush.bf16.msra.mxu0 0
  %586 = vmatpush.bf16.msra.mxu0 0
  %587 = vmatpush.bf16.msra.mxu0 0
  %588 = vmatpush.bf16.msra.mxu0 %v505
  %589 = vmatpush.bf16.msra.mxu0 %v417
  %590 = vmatpush.bf16.msra.mxu0 %v413
  %591 = vmatmul.bf16.gmra.mxu0 %v498
  %v592 = vpop.f32.mrf.mxu0
  %v593 = vadd.f32 %v579, %v592
  %v594 = vpop.f32.mrf.mxu0
  %v595 = vadd.f32 %v581, %v594
  %596 = vdwg.mxu0
  %597 = vmatpush.bf16.msra.mxu0 %v378
  %598 = vmatpush.bf16.msra.mxu0 %v374
  %599 = vmatpush.bf16.msra.mxu0 %v370
  %600 = vmatpush.bf16.msra.mxu0 %v366
  %601 = vmatpush.bf16.msra.mxu0 %v362
  %602 = vmatpush.bf16.msra.mxu0 %v358
  %603 = vmatpush.bf16.msra.mxu0 %v354
  %604 = vmatpush.bf16.msra.mxu0 %v350
  %605 = vmatmul.bf16.gmra.mxu0 %v115
  %v606 = vpop.f32.mrf.mxu0
  %v607 = vadd.f32 %v99, %v606
  %v608 = vpop.f32.mrf.mxu0
  %v609 = vadd.f32 %v99, %v608
  %610 = vdwg.mxu0
  %611 = vmatpush.bf16.msra.mxu0 %v410
  %612 = vmatpush.bf16.msra.mxu0 %v406
  %613 = vmatpush.bf16.msra.mxu0 %v402
  %614 = vmatpush.bf16.msra.mxu0 %v398
  %615 = vmatpush.bf16.msra.mxu0 %v394
  %616 = vmatpush.bf16.msra.mxu0 %v390
  %617 = vmatpush.bf16.msra.mxu0 %v386
  %618 = vmatpush.bf16.msra.mxu0 %v382
  %619 = vmatmul.bf16.gmra.mxu0 %v116
  %v620 = vpop.f32.mrf.mxu0
  %v621 = vadd.f32 %v607, %v620
  %v622 = vpop.f32.mrf.mxu0
  %v623 = vadd.f32 %v609, %v622
  %624 = vdwg.mxu0
  %625 = vmatpush.bf16.msra.mxu0 0
  %626 = vmatpush.bf16.msra.mxu0 0
  %627 = vmatpush.bf16.msra.mxu0 0
  %628 = vmatpush.bf16.msra.mxu0 0
  %629 = vmatpush.bf16.msra.mxu0 0
  %630 = vmatpush.bf16.msra.mxu0 %v508
  %631 = vmatpush.bf16.msra.mxu0 %v418
  %632 = vmatpush.bf16.msra.mxu0 %v414
  %633 = vmatmul.bf16.gmra.mxu0 %v498
  %v634 = vpop.f32.mrf.mxu0
  %v635 = vadd.f32 %v621, %v634
  %v636 = vpop.f32.mrf.mxu0
  %v637 = vadd.f32 %v623, %v636
  %638 = vdwg.mxu0
  %639 = vmatpush.bf16.msra.mxu0 %v379
  %640 = vmatpush.bf16.msra.mxu0 %v375
  %641 = vmatpush.bf16.msra.mxu0 %v371
  %642 = vmatpush.bf16.msra.mxu0 %v367
  %643 = vmatpush.bf16.msra.mxu0 %v363
  %644 = vmatpush.bf16.msra.mxu0 %v359
  %645 = vmatpush.bf16.msra.mxu0 %v355
  %646 = vmatpush.bf16.msra.mxu0 %v351
  %647 = vmatmul.bf16.gmra.mxu0 %v115
  %v648 = vpop.f32.mrf.mxu0
  %v649 = vadd.f32 %v100, %v648
  %v650 = vpop.f32.mrf.mxu0
  %v651 = vadd.f32 %v100, %v650
  %652 = vdwg.mxu0
  %653 = vmatpush.bf16.msra.mxu0 %v411
  %654 = vmatpush.bf16.msra.mxu0 %v407
  %655 = vmatpush.bf16.msra.mxu0 %v403
  %656 = vmatpush.bf16.msra.mxu0 %v399
  %657 = vmatpush.bf16.msra.mxu0 %v395
  %658 = vmatpush.bf16.msra.mxu0 %v391
  %659 = vmatpush.bf16.msra.mxu0 %v387
  %660 = vmatpush.bf16.msra.mxu0 %v383
  %661 = vmatmul.bf16.gmra.mxu0 %v116
  %v662 = vpop.f32.mrf.mxu0
  %v663 = vadd.f32 %v649, %v662
  %v664 = vpop.f32.mrf.mxu0
  %v665 = vadd.f32 %v651, %v664
  %666 = vdwg.mxu0
  %667 = vmatpush.bf16.msra.mxu0 0
  %668 = vmatpush.bf16.msra.mxu0 0
  %669 = vmatpush.bf16.msra.mxu0 0
  %670 = vmatpush.bf16.msra.mxu0 0
  %671 = vmatpush.bf16.msra.mxu0 0
  %672 = vmatpush.bf16.msra.mxu0 %v511
  %673 = vmatpush.bf16.msra.mxu0 %v419
  %674 = vmatpush.bf16.msra.mxu0 %v415
  %675 = vmatmul.bf16.gmra.mxu0 %v498
  %v676 = vpop.f32.mrf.mxu0
  %v677 = vadd.f32 %v663, %v676
  %v678 = vpop.f32.mrf.mxu0
  %v679 = vadd.f32 %v665, %v678
  %680 = vdwg.mxu0
  %681 = vst [vmem:[%s3] sm:$0xff] %v551
  %682 = vst [vmem:[%s3 + $0x8] sm:$0xff] %v593
  %683 = vst [vmem:[%s3 + $0x10] sm:$0xff] %v635
  %684 = vst [vmem:[%s3 + $0x18] sm:$0xff] %v677
  %685 = vst [vmem:[%s3 + $0x20] sm:$0xff] %v553
  %686 = vst [vmem:[%s3 + $0x28] sm:$0xff] %v595
  %687 = vst [vmem:[%s3 + $0x30] sm:$0xff] %v637
  %688 = vst [vmem:[%s3 + $0x38] sm:$0xff] %v679
  // Predicated region
  $region14: #{tnet_as_forward.7} parent=0 // pred_check
    _
  $region15: #{tnet_as_forward.7} parent=0 // pred_check_branch
    %690 = sbr.rel (0) target = $region17
  $region16: #{tnet_as_forward.7} parent=0 // pred_region
    _
  $region17: #{tnet_as_forward.7} parent=0 // pred_fallthru
    _
  // Predicated region
  $region18: #{tnet_as_forward.7} parent=0 // pred_check
    _
  $region19: #{tnet_as_forward.7} parent=0 // pred_check_branch
    %692 = sbr.rel (0) target = $region21
  $region20: #{tnet_as_forward.7} parent=0 // pred_region
    _
  $region21: #{tnet_as_forward.7} parent=0 // pred_fallthru
    _

// kernel: tnet_as_forward.8
$region0: #{tnet_as_forward.8}
  #allocation0 [shape = 'u32[]', space=smem, size = 0x4, offset = 0x4, fixed_abs, tag = 'smem constant byte address 0x4 - core index']
  #allocation1 [shape = 'u32[72,128]{1,0:T(1,128)}', space=vmem, size = 0x9000, scoped, tag = 'internal scratch']
  %s0 = inlined_call_operand.vmem [shape: f32[8,2,512], index: 0, kind: input, shape index: {}]
  %s1 = inlined_call_operand.vmem [shape: bf16[128,512], index: 1, kind: input, shape index: {}]
  %s2 = inlined_call_operand.vmem [shape: f32[8,2,128], index: 2, kind: output, shape index: {}]
  %s3 = sld [smem:[#allocation0]]
  $region25: #{tnet_as_forward.8} parent=0
    _
  %s5 = ssub.s32 1, %s3
  %s6 = scalar_select 0, %s5, %s3
  // Predicated region
  $region2: #{tnet_as_forward.8} parent=0 // pred_check
    _
  $region3: #{tnet_as_forward.8} parent=0 // pred_check_branch
    %8 = sbr.rel (0) target = $region5
  $region4: #{tnet_as_forward.8} parent=0 // pred_region
    _
  $region5: #{tnet_as_forward.8} parent=0 // pred_fallthru
    _
  // Predicated region
  $region6: #{tnet_as_forward.8} parent=0 // pred_check
    _
  $region7: #{tnet_as_forward.8} parent=0 // pred_check_branch
    %10 = sbr.rel (0) target = $region9
  $region8: #{tnet_as_forward.8} parent=0 // pred_region
    _
  $region9: #{tnet_as_forward.8} parent=0 // pred_fallthru
    _
  loop: start=0, step=1, limit=8
  $region10: #{tnet_as_forward.8} parent=0 // loop_pre_header
    _
  $region11: #{tnet_as_forward.8} parent=0 // loop_header
    %s12 = sphi 0, %s16
    %p13 = scmp.ge.s32.totalorder %s12, 8
    %v17 = vphi 0.0, %v354
    %v18 = vphi 0.0, %v348
    %v19 = vphi 0.0, %v413
    %v20 = vphi 0.0, %v407
  $region12: #{tnet_as_forward.8} parent=0 // loop_header_branch
    %15 = sbr.rel (%p13) target = $region16
  $region13: #{tnet_as_forward.8} parent=0 // loop_body
    %22 = vst [vmem:[#allocation1] ss:$4 sm:$0xff] %v19
    %v23 = vld.sshfl [vmem:[#allocation1] sm:$0xff pattern:$0x73625140]
    %24 = vrot.lane.b32.xlu0 %v23, 64
    %v25 = vpop.permute.xlu0 %24
    %vm27 = vcmask 523264
    %v28 = vsel %vm27, %v17, %v25
    %v29 = vpack.c.bf16 %v28, %v28
    %v30 = vld [vmem:[%s1] sm:$0xff]
    %v31 = vld [vmem:[%s1 + $0x8] sm:$0xff]
    %v32 = vld [vmem:[%s1 + $0x10] sm:$0xff]
    %v33 = vld [vmem:[%s1 + $0x18] sm:$0xff]
    %v34 = vld [vmem:[%s1 + $0x20] sm:$0xff]
    %v35 = vld [vmem:[%s1 + $0x28] sm:$0xff]
    %v36 = vld [vmem:[%s1 + $0x30] sm:$0xff]
    %v37 = vld [vmem:[%s1 + $0x38] sm:$0xff]
    %v38 = vld [vmem:[%s1 + $0x40] sm:$0xff]
    %v39 = vld [vmem:[%s1 + $0x48] sm:$0xff]
    %v40 = vld [vmem:[%s1 + $0x50] sm:$0xff]
    %v41 = vld [vmem:[%s1 + $0x58] sm:$0xff]
    %v42 = vld [vmem:[%s1 + $0x60] sm:$0xff]
    %v43 = vld [vmem:[%s1 + $0x68] sm:$0xff]
    %v44 = vld [vmem:[%s1 + $0x70] sm:$0xff]
    %v45 = vld [vmem:[%s1 + $0x78] sm:$0xff]
    %v46 = vld [vmem:[%s1 + $0x80] sm:$0xff]
    %v47 = vld [vmem:[%s1 + $0x88] sm:$0xff]
    %v48 = vld [vmem:[%s1 + $0x90] sm:$0xff]
    %v49 = vld [vmem:[%s1 + $0x98] sm:$0xff]
    %v50 = vld [vmem:[%s1 + $0xa0] sm:$0xff]
    %v51 = vld [vmem:[%s1 + $0xa8] sm:$0xff]
    %v52 = vld [vmem:[%s1 + $0xb0] sm:$0xff]
    %v53 = vld [vmem:[%s1 + $0xb8] sm:$0xff]
    %v54 = vld [vmem:[%s1 + $0xc0] sm:$0xff]
    %v55 = vld [vmem:[%s1 + $0xc8] sm:$0xff]
    %v56 = vld [vmem:[%s1 + $0xd0] sm:$0xff]
    %v57 = vld [vmem:[%s1 + $0xd8] sm:$0xff]
    %v58 = vld [vmem:[%s1 + $0xe0] sm:$0xff]
    %v59 = vld [vmem:[%s1 + $0xe8] sm:$0xff]
    %v60 = vld [vmem:[%s1 + $0xf0] sm:$0xff]
    %v61 = vld [vmem:[%s1 + $0xf8] sm:$0xff]
    %v94 = vunpack.c.l.b16 %v30
    %v95 = vunpack.c.h.b16 %v30
    %v96 = vunpack.c.l.b16 %v31
    %v97 = vunpack.c.h.b16 %v31
    %v98 = vunpack.c.l.b16 %v32
    %v99 = vunpack.c.h.b16 %v32
    %v100 = vunpack.c.l.b16 %v33
    %v101 = vunpack.c.h.b16 %v33
    %v102 = vunpack.c.l.b16 %v34
    %v103 = vunpack.c.h.b16 %v34
    %v104 = vunpack.c.l.b16 %v35
    %v105 = vunpack.c.h.b16 %v35
    %v106 = vunpack.c.l.b16 %v36
    %v107 = vunpack.c.h.b16 %v36
    %v108 = vunpack.c.l.b16 %v37
    %v109 = vunpack.c.h.b16 %v37
    %v110 = vunpack.c.l.b16 %v38
    %v111 = vunpack.c.h.b16 %v38
    %v112 = vunpack.c.l.b16 %v39
    %v113 = vunpack.c.h.b16 %v39
    %v114 = vunpack.c.l.b16 %v40
    %v115 = vunpack.c.h.b16 %v40
    %v116 = vunpack.c.l.b16 %v41
    %v117 = vunpack.c.h.b16 %v41
    %v118 = vunpack.c.l.b16 %v42
    %v119 = vunpack.c.h.b16 %v42
    %v120 = vunpack.c.l.b16 %v43
    %v121 = vunpack.c.h.b16 %v43
    %v122 = vunpack.c.l.b16 %v44
    %v123 = vunpack.c.h.b16 %v44
    %v124 = vunpack.c.l.b16 %v45
    %v125 = vunpack.c.h.b16 %v45
    %v126 = vunpack.c.l.b16 %v46
    %v127 = vunpack.c.h.b16 %v46
    %v128 = vunpack.c.l.b16 %v47
    %v129 = vunpack.c.h.b16 %v47
    %v130 = vunpack.c.l.b16 %v48
    %v131 = vunpack.c.h.b16 %v48
    %v132 = vunpack.c.l.b16 %v49
    %v133 = vunpack.c.h.b16 %v49
    %v134 = vunpack.c.l.b16 %v50
    %v135 = vunpack.c.h.b16 %v50
    %v136 = vunpack.c.l.b16 %v51
    %v137 = vunpack.c.h.b16 %v51
    %v138 = vunpack.c.l.b16 %v52
    %v139 = vunpack.c.h.b16 %v52
    %v140 = vunpack.c.l.b16 %v53
    %v141 = vunpack.c.h.b16 %v53
    %v142 = vunpack.c.l.b16 %v54
    %v143 = vunpack.c.h.b16 %v54
    %v144 = vunpack.c.l.b16 %v55
    %v145 = vunpack.c.h.b16 %v55
    %v146 = vunpack.c.l.b16 %v56
    %v147 = vunpack.c.h.b16 %v56
    %v148 = vunpack.c.l.b16 %v57
    %v149 = vunpack.c.h.b16 %v57
    %v150 = vunpack.c.l.b16 %v58
    %v151 = vunpack.c.h.b16 %v58
    %v152 = vunpack.c.l.b16 %v59
    %v153 = vunpack.c.h.b16 %v59
    %v154 = vunpack.c.l.b16 %v60
    %v155 = vunpack.c.h.b16 %v60
    %v156 = vunpack.c.l.b16 %v61
    %v157 = vunpack.c.h.b16 %v61
    %v158 = vpack.c.b16 %v98, %v94
    %v159 = vpack.c.b16 %v99, %v95
    %v160 = vpack.c.b16 %v100, %v96
    %v161 = vpack.c.b16 %v101, %v97
    %v162 = vpack.c.b16 %v106, %v102
    %v163 = vpack.c.b16 %v107, %v103
    %v164 = vpack.c.b16 %v108, %v104
    %v165 = vpack.c.b16 %v109, %v105
    %v166 = vpack.c.b16 %v114, %v110
    %v167 = vpack.c.b16 %v115, %v111
    %v168 = vpack.c.b16 %v116, %v112
    %v169 = vpack.c.b16 %v117, %v113
    %v170 = vpack.c.b16 %v122, %v118
    %v171 = vpack.c.b16 %v123, %v119
    %v172 = vpack.c.b16 %v124, %v120
    %v173 = vpack.c.b16 %v125, %v121
    %v174 = vpack.c.b16 %v130, %v126
    %v175 = vpack.c.b16 %v131, %v127
    %v176 = vpack.c.b16 %v132, %v128
    %v177 = vpack.c.b16 %v133, %v129
    %v178 = vpack.c.b16 %v138, %v134
    %v179 = vpack.c.b16 %v139, %v135
    %v180 = vpack.c.b16 %v140, %v136
    %v181 = vpack.c.b16 %v141, %v137
    %v182 = vpack.c.b16 %v146, %v142
    %v183 = vpack.c.b16 %v147, %v143
    %v184 = vpack.c.b16 %v148, %v144
    %v185 = vpack.c.b16 %v149, %v145
    %v186 = vpack.c.b16 %v154, %v150
    %v187 = vpack.c.b16 %v155, %v151
    %v188 = vpack.c.b16 %v156, %v152
    %v189 = vpack.c.b16 %v157, %v153
    %222 = vmatpush.bf16.msra.mxu0 %v186
    %223 = vmatpush.bf16.msra.mxu0 %v182
    %224 = vmatpush.bf16.msra.mxu0 %v178
    %225 = vmatpush.bf16.msra.mxu0 %v174
    %226 = vmatpush.bf16.msra.mxu0 %v170
    %227 = vmatpush.bf16.msra.mxu0 %v166
    %228 = vmatpush.bf16.msra.mxu0 %v162
    %229 = vmatpush.bf16.msra.mxu0 %v158
    %230 = vmatmul.bf16.gmra.mxu0 %v29
    %v231 = vpop.f32.mrf.mxu0
    %v232 = vadd.f32 0.0, %v231
    %v233 = vpop.f32.mrf.mxu0
    %234 = vdwg.mxu0
    %235 = vmatpush.bf16.msra.mxu0 %v187
    %236 = vmatpush.bf16.msra.mxu0 %v183
    %237 = vmatpush.bf16.msra.mxu0 %v179
    %238 = vmatpush.bf16.msra.mxu0 %v175
    %239 = vmatpush.bf16.msra.mxu0 %v171
    %240 = vmatpush.bf16.msra.mxu0 %v167
    %241 = vmatpush.bf16.msra.mxu0 %v163
    %242 = vmatpush.bf16.msra.mxu0 %v159
    %243 = vmatmul.bf16.gmra.mxu0 %v29
    %v244 = vpop.f32.mrf.mxu0
    %v245 = vadd.f32 0.0, %v244
    %v246 = vpop.f32.mrf.mxu0
    %247 = vdwg.mxu0
    %248 = vmatpush.bf16.msra.mxu0 %v188
    %249 = vmatpush.bf16.msra.mxu0 %v184
    %250 = vmatpush.bf16.msra.mxu0 %v180
    %251 = vmatpush.bf16.msra.mxu0 %v176
    %252 = vmatpush.bf16.msra.mxu0 %v172
    %253 = vmatpush.bf16.msra.mxu0 %v168
    %254 = vmatpush.bf16.msra.mxu0 %v164
    %255 = vmatpush.bf16.msra.mxu0 %v160
    %256 = vmatmul.bf16.gmra.mxu0 %v29
    %v257 = vpop.f32.mrf.mxu0
    %v258 = vadd.f32 0.0, %v257
    %v259 = vpop.f32.mrf.mxu0
    %260 = vdwg.mxu0
    %261 = vmatpush.bf16.msra.mxu0 %v189
    %262 = vmatpush.bf16.msra.mxu0 %v185
    %263 = vmatpush.bf16.msra.mxu0 %v181
    %264 = vmatpush.bf16.msra.mxu0 %v177
    %265 = vmatpush.bf16.msra.mxu0 %v173
    %266 = vmatpush.bf16.msra.mxu0 %v169
    %267 = vmatpush.bf16.msra.mxu0 %v165
    %268 = vmatpush.bf16.msra.mxu0 %v161
    %269 = vmatmul.bf16.gmra.mxu0 %v29
    %v270 = vpop.f32.mrf.mxu0
    %v271 = vadd.f32 0.0, %v270
    %v272 = vpop.f32.mrf.mxu0
    %273 = vdwg.mxu0
    %s274 = smul.u32 %s12, 4
    %s275 = smul.addr %s274, 2
    %s276 = scalar_lea.vmem %s0, %s275
    %v277 = vld [vmem:[%s276] sm:$0xf]
    %v280 = vrot.slane %v245, 6
    %vm281 = vcmask 1041408
    %v282 = vsel %vm281, %v232, %v280
    %v284 = vadd.f32 %v277, %v282
    %s285 = ssub.s32 7, %s12
    %s286 = smul.u32 %s285, 4
    %s287 = smul.addr %s286, 2
    %s288 = scalar_lea.vmem %s0, %s287
    %v289 = vld [vmem:[%s288 + $0x4] sm:$0xf]
    %v292 = vrot.slane %v271, 6
    %v293 = vsel %vm281, %v258, %v292
    %v295 = vadd.f32 %v289, %v293
    %v296 = vxor.u32 %v284, 2147483648
    %v297 = vmul.f32 %v296, 1.442695
    %v298 = vpow.pop %v297
    %v299 = vadd.f32 %v298, 1.0
    %v300 = vrcp.pop %v299
    %v301 = vmul.f32 %v299, %v300
    %v302 = vsub.f32 1.0, %v301
    %v303 = vmul.f32 %v300, %v302
    %v304 = vadd.f32 %v300, %v303
    %vm305 = vweird.f32 %v299
    %vm306 = vweird.f32 %v300
    %vm307 = vmor %vm305, %vm306
    %v308 = vsel %vm307, %v300, %v304
    %v309 = vand.u32 2147483647, %v299
    %vm310 = vcmp.eq.f32.partialorder %v309, 8.507059e+37
    %v311 = vand.u32 %v299, 2147483648
    %v312 = vor.u32 1.1754944e-38, %v311
    %v313 = vsel %vm310, %v312, %v308
    %v314 = vmul.f32 1.0, %v313
    %v316 = vrot.slane %v284, 2
    %v318 = vtanh.pop %v316
    %319 = vrot.lane.b32.xlu0 %v284, 64
    %v320 = vpop.permute.xlu0 %319
    %v321 = vrot.slane %v320, 2
    %v323 = vxor.u32 %v321, 2147483648
    %v324 = vmul.f32 %v323, 1.442695
    %v325 = vpow.pop %v324
    %v326 = vadd.f32 %v325, 1.0
    %v327 = vrcp.pop %v326
    %v328 = vmul.f32 %v326, %v327
    %v329 = vsub.f32 1.0, %v328
    %v330 = vmul.f32 %v327, %v329
    %v331 = vadd.f32 %v327, %v330
    %vm332 = vweird.f32 %v326
    %vm333 = vweird.f32 %v327
    %vm334 = vmor %vm332, %vm333
    %v335 = vsel %vm334, %v327, %v331
    %v336 = vand.u32 2147483647, %v326
    %vm337 = vcmp.eq.f32.partialorder %v336, 8.507059e+37
    %v338 = vand.u32 %v326, 2147483648
    %v339 = vor.u32 1.1754944e-38, %v338
    %v340 = vsel %vm337, %v339, %v335
    %v341 = vmul.f32 1.0, %v340
    %v342 = vmul.f32 %v314, %v18
    %v343 = vmul.f32 %v314, %v318
    %345 = vrot.lane.b32.xlu0 %v343, 64
    %v346 = vpop.permute.xlu0 %345
    %v348 = vadd.f32 %v342, %v346
    %v349 = vtanh.pop %v348
    %351 = vrot.lane.b32.xlu0 %v349, 64
    %v352 = vpop.permute.xlu0 %351
    %v354 = vmul.f32 %v341, %v352
    %v355 = vxor.u32 %v295, 2147483648
    %v356 = vmul.f32 %v355, 1.442695
    %v357 = vpow.pop %v356
    %v358 = vadd.f32 %v357, 1.0
    %v359 = vrcp.pop %v358
    %v360 = vmul.f32 %v358, %v359
    %v361 = vsub.f32 1.0, %v360
    %v362 = vmul.f32 %v359, %v361
    %v363 = vadd.f32 %v359, %v362
    %vm364 = vweird.f32 %v358
    %vm365 = vweird.f32 %v359
    %vm366 = vmor %vm364, %vm365
    %v367 = vsel %vm366, %v359, %v363
    %v368 = vand.u32 2147483647, %v358
    %vm369 = vcmp.eq.f32.partialorder %v368, 8.507059e+37
    %v370 = vand.u32 %v358, 2147483648
    %v371 = vor.u32 1.1754944e-38, %v370
    %v372 = vsel %vm369, %v371, %v367
    %v373 = vmul.f32 1.0, %v372
    %v375 = vrot.slane %v295, 2
    %v377 = vtanh.pop %v375
    %378 = vrot.lane.b32.xlu0 %v295, 64
    %v379 = vpop.permute.xlu0 %378
    %v380 = vrot.slane %v379, 2
    %v382 = vxor.u32 %v380, 2147483648
    %v383 = vmul.f32 %v382, 1.442695
    %v384 = vpow.pop %v383
    %v385 = vadd.f32 %v384, 1.0
    %v386 = vrcp.pop %v385
    %v387 = vmul.f32 %v385, %v386
    %v388 = vsub.f32 1.0, %v387
    %v389 = vmul.f32 %v386, %v388
    %v390 = vadd.f32 %v386, %v389
    %vm391 = vweird.f32 %v385
    %vm392 = vweird.f32 %v386
    %vm393 = vmor %vm391, %vm392
    %v394 = vsel %vm393, %v386, %v390
    %v395 = vand.u32 2147483647, %v385
    %vm396 = vcmp.eq.f32.partialorder %v395, 8.507059e+37
    %v397 = vand.u32 %v385, 2147483648
    %v398 = vor.u32 1.1754944e-38, %v397
    %v399 = vsel %vm396, %v398, %v394
    %v400 = vmul.f32 1.0, %v399
    %v401 = vmul.f32 %v373, %v20
    %v402 = vmul.f32 %v373, %v377
    %404 = vrot.lane.b32.xlu0 %v402, 64
    %v405 = vpop.permute.xlu0 %404
    %v407 = vadd.f32 %v401, %v405
    %v408 = vtanh.pop %v407
    %410 = vrot.lane.b32.xlu0 %v408, 64
    %v411 = vpop.permute.xlu0 %410
    %v413 = vmul.f32 %v400, %v411
    %s414 = smul.u32 %s12, 2
    %s415 = scalar_lea.vmem %s2, %s414
    %vm416 = vcmask 517120
    %417 = vst.msk [vmem:[%s415] sm:$0x3] %vm416, %v354
    %419 = vst [vmem:[#allocation1] ss:$4 sm:$0xff] %v413
    %v420 = vld.sshfl [vmem:[#allocation1] sm:$0xff pattern:$0x73625140]
    %421 = vrot.lane.b32.xlu0 %v420, 64
    %v422 = vpop.permute.xlu0 %421
    %s424 = smul.u32 %s285, 2
    %s425 = scalar_lea.vmem %s2, %s424
    %vm426 = vcmask 1041920
    %427 = vst.msk [vmem:[%s425] sm:$0x3] %vm426, %v422
  $region14: #{tnet_as_forward.8} parent=0 // loop_footer
    %s16 = sadd.s32 1, %s12
  $region15: #{tnet_as_forward.8} parent=0 // loop_footer_branch
    %11 = sbr.rel target = $region11
  $region16: #{tnet_as_forward.8} parent=0 // loop_exit
    _
  // Predicated region
  $region17: #{tnet_as_forward.8} parent=0 // pred_check
    _
  $region18: #{tnet_as_forward.8} parent=0 // pred_check_branch
    %429 = sbr.rel (0) target = $region20
  $region19: #{tnet_as_forward.8} parent=0 // pred_region
    _
  $region20: #{tnet_as_forward.8} parent=0 // pred_fallthru
    _
  // Predicated region
  $region21: #{tnet_as_forward.8} parent=0 // pred_check
    _
  $region22: #{tnet_as_forward.8} parent=0 // pred_check_branch
    %431 = sbr.rel (0) target = $region24
  $region23: #{tnet_as_forward.8} parent=0 // pred_region
    _
  $region24: #{tnet_as_forward.8} parent=0 // pred_fallthru
    _

// kernel: tnet_as_forward.9
$region0: #{tnet_as_forward.9}
  #allocation0 [shape = 'u32[]', space=smem, size = 0x4, offset = 0x4, fixed_abs, tag = 'smem constant byte address 0x4 - core index']
  #allocation1 [shape = 'u32[72,128]{1,0:T(1,128)}', space=vmem, size = 0x9000, scoped, tag = 'internal scratch']
  #allocation2 [shape = 'f32[32,128]{1,0:T(8,128)}', space=vmem, size = 0x4000, scoped, tag = 'scratch operand']
  #allocation3 [shape = 'f32[32,128]{1,0:T(8,128)}', space=vmem, size = 0x4000, scoped, tag = 'scratch operand']
  #allocation4 [shape = 'f32[1,1]{1,0:T(1,128)S(1)}', space=vmem, size = 0x200, scoped, tag = 'scoped memory for tnet_as_forward.9']
  %s0 = inlined_call_operand.vmem [shape: f32[2,16,128], index: 0, kind: input, shape index: {}]
  %s1 = inlined_call_operand.vmem [shape: f32[2,8,128], index: 1, kind: input, shape index: {}]
  %s2 = inlined_call_operand.vmem [shape: f32[2,1,1], index: 2, kind: input, shape index: {}]
  %s3 = inlined_call_operand.vmem [shape: f32[2,1,1], index: 3, kind: input, shape index: {}]
  %s4 = inlined_call_operand.vmem [shape: f32[2,1,1], index: 4, kind: input, shape index: {}]
  %s5 = inlined_call_operand.vmem [shape: bf16[128,128], index: 5, kind: input, shape index: {}]
  %s6 = inlined_call_operand.hbm [shape: bf16[128,128], index: 6, kind: input, shape index: {}]
  %s7 = inlined_call_operand.vmem [shape: f32[1,128], index: 7, kind: input, shape index: {}]
  %s8 = inlined_call_operand.vmem [shape: f32[1,128], index: 8, kind: input, shape index: {}]
  %s9 = inlined_call_operand.<no memory space> [shape: f32[1,1], index: 9, kind: input, shape index: {}]
  %s10 = inlined_call_operand.vmem [shape: bf16[3,128,128], index: 10, kind: input, shape index: {}]
  %s11 = inlined_call_operand.vmem [shape: f32[1,128], index: 11, kind: input, shape index: {}]
  %s12 = inlined_call_operand.hbm [shape: bf16[128,128], index: 12, kind: input, shape index: {}]
  %s13 = inlined_call_operand.vmem [shape: f32[1,128], index: 13, kind: input, shape index: {}]
  %s14 = inlined_call_operand.hbm [shape: f32[2,128], index: 14, kind: output, shape index: {}]
  %s15 = sld [smem:[#allocation0]]
  $region88: #{tnet_as_forward.9} parent=0
    _
  %s17 = ssub.s32 1, %s15
  %s18 = scalar_select 0, %s17, %s15
  %v19 = vstv %s9
  %20 = vst [vmem:[#allocation4] sm:$0x1] %v19
  $region1: #{tnet_as_forward.9} parent=0
    #allocation5 [shape = 'u8[32768]{0}', space=vmem, size = 0x8000, scoped, tag = 'input window, operand 6, single buffered']
    #allocation6 [shape = 's32[1]{0}', space=sflag, size = 0x4, scoped, tag = 'scoped memory for tnet_as_forward.9']
    #allocation7 [shape = 's32[1]{0}', space=sflag, size = 0x4, scoped, tag = 'scoped memory for tnet_as_forward.9']
    #allocation8 [shape = 'u8[32768]{0}', space=vmem, size = 0x8000, scoped, tag = 'input window, operand 12, single buffered']
    #allocation9 [shape = 's32[1]{0}', space=sflag, size = 0x4, scoped, tag = 'scoped memory for tnet_as_forward.9']
    #allocation10 [shape = 'u8[1024]{0}', space=vmem, size = 0x400, scoped, tag = 'output window, operand 0, single buffered']
    %21 = vsyncpa [#allocation6], 0
    %22 = vsyncpa [#allocation9], 0
    %23 = vsyncpa [#allocation7], 0
    // Predicated region
    $region2: #{tnet_as_forward.9} parent=1 // pred_check
      _
    $region3: #{tnet_as_forward.9} parent=1 // pred_check_branch
      %25 = sbr.rel (0) target = $region5
    $region4: #{tnet_as_forward.9} parent=1 // pred_region
      _
    $region5: #{tnet_as_forward.9} parent=1 // pred_fallthru
      _
    // Predicated region
    $region6: #{tnet_as_forward.9} parent=1 // pred_check
      _
    $region7: #{tnet_as_forward.9} parent=1 // pred_check_branch
      %27 = sbr.rel (0) target = $region9
    $region8: #{tnet_as_forward.9} parent=1 // pred_region
      _
    $region9: #{tnet_as_forward.9} parent=1 // pred_fallthru
      _
    // Predicated region
    $region10: #{tnet_as_forward.9} parent=1 // pred_check
      _
    $region11: #{tnet_as_forward.9} parent=1 // pred_check_branch
      %29 = sbr.rel (0) target = $region13
    $region12: #{tnet_as_forward.9} parent=1 // pred_region
      _
    $region13: #{tnet_as_forward.9} parent=1 // pred_fallthru
      _
    // Predicated region
    $region14: #{tnet_as_forward.9} parent=1 // pred_check
      _
    $region15: #{tnet_as_forward.9} parent=1 // pred_check_branch
      %31 = sbr.rel (0) target = $region17
    $region16: #{tnet_as_forward.9} parent=1 // pred_region
      _
    $region17: #{tnet_as_forward.9} parent=1 // pred_fallthru
      _
    // Predicated region
    $region18: #{tnet_as_forward.9} parent=1 // pred_check
      _
    $region19: #{tnet_as_forward.9} parent=1 // pred_check_branch
      %33 = sbr.rel (0) target = $region21
    $region20: #{tnet_as_forward.9} parent=1 // pred_region
      _
    $region21: #{tnet_as_forward.9} parent=1 // pred_fallthru
      _
    // Predicated region
    $region22: #{tnet_as_forward.9} parent=1 // pred_check
      _
    $region23: #{tnet_as_forward.9} parent=1 // pred_check_branch
      %35 = sbr.rel (0) target = $region25
    $region24: #{tnet_as_forward.9} parent=1 // pred_region
      _
    $region25: #{tnet_as_forward.9} parent=1 // pred_fallthru
      _
    // Predicated region
    $region26: #{tnet_as_forward.9} parent=1 // pred_check
      _
    $region27: #{tnet_as_forward.9} parent=1 // pred_check_branch
      %37 = sbr.rel (0) target = $region29
    $region28: #{tnet_as_forward.9} parent=1 // pred_region
      %39 = vsyncadd [#allocation6], 0
      %s40 = sshll.u32 %s6, 4
      %s41 = int_to_ptr.hbm [resolvable:$true] %s40
      %s42 = sshll.u32 [#allocation5], 4
      %s43 = int_to_ptr.vmem [resolvable:$true] %s42
      %48 = dma.hbm_to_vmem [thread:$0]  %s41, 1024, %s43, [#allocation6], 64, 64, 4
    $region29: #{tnet_as_forward.9} parent=1 // pred_fallthru
      _
    // Predicated region
    $region30: #{tnet_as_forward.9} parent=1 // pred_check
      _
    $region31: #{tnet_as_forward.9} parent=1 // pred_check_branch
      %50 = sbr.rel (0) target = $region33
    $region32: #{tnet_as_forward.9} parent=1 // pred_region
      _
    $region33: #{tnet_as_forward.9} parent=1 // pred_fallthru
      _
    // Predicated region
    $region34: #{tnet_as_forward.9} parent=1 // pred_check
      _
    $region35: #{tnet_as_forward.9} parent=1 // pred_check_branch
      %52 = sbr.rel (0) target = $region37
    $region36: #{tnet_as_forward.9} parent=1 // pred_region
      _
    $region37: #{tnet_as_forward.9} parent=1 // pred_fallthru
      _
    // Predicated region
    $region38: #{tnet_as_forward.9} parent=1 // pred_check
      _
    $region39: #{tnet_as_forward.9} parent=1 // pred_check_branch
      %54 = sbr.rel (0) target = $region41
    $region40: #{tnet_as_forward.9} parent=1 // pred_region
      _
    $region41: #{tnet_as_forward.9} parent=1 // pred_fallthru
      _
    // Predicated region
    $region42: #{tnet_as_forward.9} parent=1 // pred_check
      _
    $region43: #{tnet_as_forward.9} parent=1 // pred_check_branch
      %56 = sbr.rel (0) target = $region45
    $region44: #{tnet_as_forward.9} parent=1 // pred_region
      _
    $region45: #{tnet_as_forward.9} parent=1 // pred_fallthru
      _
    // Predicated region
    $region46: #{tnet_as_forward.9} parent=1 // pred_check
      _
    $region47: #{tnet_as_forward.9} parent=1 // pred_check_branch
      %58 = sbr.rel (0) target = $region49
    $region48: #{tnet_as_forward.9} parent=1 // pred_region
      _
    $region49: #{tnet_as_forward.9} parent=1 // pred_fallthru
      _
    // Predicated region
    $region50: #{tnet_as_forward.9} parent=1 // pred_check
      _
    $region51: #{tnet_as_forward.9} parent=1 // pred_check_branch
      %60 = sbr.rel (0) target = $region53
    $region52: #{tnet_as_forward.9} parent=1 // pred_region
      %62 = vsyncadd [#allocation9], 0
      %s63 = sshll.u32 %s12, 4
      %s64 = int_to_ptr.hbm [resolvable:$true] %s63
      %s65 = sshll.u32 [#allocation8], 4
      %s66 = int_to_ptr.vmem [resolvable:$true] %s65
      %71 = dma.hbm_to_vmem [thread:$0]  %s64, 1024, %s66, [#allocation9], 64, 64, 4
    $region53: #{tnet_as_forward.9} parent=1 // pred_fallthru
      _
    // Predicated region
    $region54: #{tnet_as_forward.9} parent=1 // pred_check
      _
    $region55: #{tnet_as_forward.9} parent=1 // pred_check_branch
      %73 = sbr.rel (0) target = $region57
    $region56: #{tnet_as_forward.9} parent=1 // pred_region
      _
    $region57: #{tnet_as_forward.9} parent=1 // pred_fallthru
      _
    // Predicated region
    $region58: #{tnet_as_forward.9} parent=1 // pred_check
      _
    $region59: #{tnet_as_forward.9} parent=1 // pred_check_branch
      %75 = sbr.rel (0) target = $region61
    $region60: #{tnet_as_forward.9} parent=1 // pred_region
      %77 = dma.done [#allocation6], 1024
    $region61: #{tnet_as_forward.9} parent=1 // pred_fallthru
      _
    // Predicated region
    $region62: #{tnet_as_forward.9} parent=1 // pred_check
      _
    $region63: #{tnet_as_forward.9} parent=1 // pred_check_branch
      %79 = sbr.rel (0) target = $region65
    $region64: #{tnet_as_forward.9} parent=1 // pred_region
      %81 = dma.done [#allocation9], 1024
    $region65: #{tnet_as_forward.9} parent=1 // pred_fallthru
      _
    %v83 = vld [vmem:[%s0] sm:$0xff]
    %v84 = vld [vmem:[%s0 + $0x8] sm:$0xff]
    %v85 = vld [vmem:[%s0 + $0x10] sm:$0xff]
    %v86 = vld [vmem:[%s0 + $0x18] sm:$0xff]
    %87 = vst [vmem:[#allocation2] sm:$0xff] %v83
    %88 = vst [vmem:[#allocation2 + $0x8] sm:$0xff] %v84
    %89 = vst [vmem:[#allocation2 + $0x10] sm:$0xff] %v85
    %90 = vst [vmem:[#allocation2 + $0x18] sm:$0xff] %v86
    %v91 = vlaneseq
    %v92 = vshrl.u32 %v91, 7
    %v93 = vadd.s32 %v92, 8
    %v94 = vcvt.s32.f32 %v92
    %v95 = vcvt.s32.f32 %v93
    %v96 = vld [vmem:[%s2] sm:$0x1]
    %v97 = vld [vmem:[%s2 + $0x1] sm:$0x1]
    %v98 = vld [vmem:[%s3] sm:$0x1]
    %v99 = vld [vmem:[%s3 + $0x1] sm:$0x1]
    %v100 = vadd.f32 %v96, %v98
    %v101 = vadd.f32 %v97, %v99
    %v102 = vld [vmem:[%s4] sm:$0x1]
    %v103 = vld [vmem:[%s4 + $0x1] sm:$0x1]
    %v106 = vperm.slane %v100, 0
    %v107 = vperm.slane %v101, 0
    %vm110 = vcmp.lt.f32.partialorder %v94, %v106
    %vm111 = vcmp.lt.f32.partialorder %v95, %v106
    %vm112 = vcmp.lt.f32.partialorder %v94, %v107
    %vm113 = vcmp.lt.f32.partialorder %v95, %v107
    %v114 = vsub.f32 %v106, %v94
    %v115 = vsub.f32 %v106, %v95
    %v116 = vsub.f32 %v107, %v94
    %v117 = vsub.f32 %v107, %v95
    %v118 = vrcp.pop 40.0
    %v119 = vmul.f32 40.0, %v118
    %v120 = vsub.f32 1.0, %v119
    %v121 = vmul.f32 %v118, %v120
    %v122 = vadd.f32 %v118, %v121
    %vm123 = vweird.f32 %v118
    %v124 = vsel %vm123, %v118, %v122
    %v125 = vmul.f32 %v114, %v124
    %v126 = vmul.f32 %v115, %v124
    %v127 = vmul.f32 %v116, %v124
    %v128 = vmul.f32 %v117, %v124
    %v129 = vsub.f32 1.0, %v125
    %v130 = vsub.f32 1.0, %v126
    %v131 = vsub.f32 1.0, %v127
    %v132 = vsub.f32 1.0, %v128
    %v135 = vperm.slane %v102, 0
    %v136 = vperm.slane %v103, 0
    %vm139 = vcmp.lt.f32.partialorder %v94, %v135
    %vm140 = vcmp.lt.f32.partialorder %v95, %v135
    %vm141 = vcmp.lt.f32.partialorder %v94, %v136
    %vm142 = vcmp.lt.f32.partialorder %v95, %v136
    %v145 = vperm.slane %v96, 0
    %v146 = vperm.slane %v97, 0
    %v149 = vsub.f32 %v94, %v145
    %v150 = vsub.f32 %v95, %v145
    %v151 = vsub.f32 %v94, %v146
    %v152 = vsub.f32 %v95, %v146
    %v153 = vmul.f32 %v149, %v124
    %v154 = vmul.f32 %v150, %v124
    %v155 = vmul.f32 %v151, %v124
    %v156 = vmul.f32 %v152, %v124
    %v157 = vsub.f32 1.0, %v153
    %v158 = vsub.f32 1.0, %v154
    %v159 = vsub.f32 1.0, %v155
    %v160 = vsub.f32 1.0, %v156
    %v161 = vsel %vm139, %v157, 0.0
    %v162 = vsel %vm140, %v158, 0.0
    %v163 = vsel %vm141, %v159, 0.0
    %v164 = vsel %vm142, %v160, 0.0
    %v165 = vsel %vm110, %v129, %v161
    %v166 = vsel %vm111, %v130, %v162
    %v167 = vsel %vm112, %v131, %v163
    %v168 = vsel %vm113, %v132, %v164
    %v169 = vld [vmem:[%s5] sm:$0xf]
    %v170 = vld [vmem:[%s5 + $0x4] sm:$0xf]
    %v171 = vld [vmem:[%s5 + $0x8] sm:$0xf]
    %v172 = vld [vmem:[%s5 + $0xc] sm:$0xf]
    %v173 = vld [vmem:[%s5 + $0x10] sm:$0xf]
    %v174 = vld [vmem:[%s5 + $0x14] sm:$0xf]
    %v175 = vld [vmem:[%s5 + $0x18] sm:$0xf]
    %v176 = vld [vmem:[%s5 + $0x1c] sm:$0xf]
    %v177 = vld [vmem:[%s5 + $0x20] sm:$0xf]
    %v178 = vld [vmem:[%s5 + $0x24] sm:$0xf]
    %v179 = vld [vmem:[%s5 + $0x28] sm:$0xf]
    %v180 = vld [vmem:[%s5 + $0x2c] sm:$0xf]
    %v181 = vld [vmem:[%s5 + $0x30] sm:$0xf]
    %v182 = vld [vmem:[%s5 + $0x34] sm:$0xf]
    %v183 = vld [vmem:[%s5 + $0x38] sm:$0xf]
    %v184 = vld [vmem:[%s5 + $0x3c] sm:$0xf]
    %v185 = vld [vmem:[#allocation5] sm:$0xf]
    %v186 = vld [vmem:[#allocation5 + $0x4] sm:$0xf]
    %v187 = vld [vmem:[#allocation5 + $0x8] sm:$0xf]
    %v188 = vld [vmem:[#allocation5 + $0xc] sm:$0xf]
    %v189 = vld [vmem:[#allocation5 + $0x10] sm:$0xf]
    %v190 = vld [vmem:[#allocation5 + $0x14] sm:$0xf]
    %v191 = vld [vmem:[#allocation5 + $0x18] sm:$0xf]
    %v192 = vld [vmem:[#allocation5 + $0x1c] sm:$0xf]
    %v193 = vld [vmem:[#allocation5 + $0x20] sm:$0xf]
    %v194 = vld [vmem:[#allocation5 + $0x24] sm:$0xf]
    %v195 = vld [vmem:[#allocation5 + $0x28] sm:$0xf]
    %v196 = vld [vmem:[#allocation5 + $0x2c] sm:$0xf]
    %v197 = vld [vmem:[#allocation5 + $0x30] sm:$0xf]
    %v198 = vld [vmem:[#allocation5 + $0x34] sm:$0xf]
    %v199 = vld [vmem:[#allocation5 + $0x38] sm:$0xf]
    %v200 = vld [vmem:[#allocation5 + $0x3c] sm:$0xf]
    %v201 = vld [vmem:[%s7] sm:$0x1]
    %v202 = vld [vmem:[%s8] sm:$0x1]
    %v203 = vld [vmem:[#allocation4] sm:$0x1]
    loop: start=0, step=1, limit=2
    $region66: #{tnet_as_forward.9} parent=1 // loop_pre_header
      _
    $region67: #{tnet_as_forward.9} parent=1 // loop_header
      %s205 = sphi 0, %s209
      %p206 = scmp.ge.s32.totalorder %s205, 2
    $region68: #{tnet_as_forward.9} parent=1 // loop_header_branch
      %208 = sbr.rel (%p206) target = $region72
    $region69: #{tnet_as_forward.9} parent=1 // loop_body
      %s210 = smul.u32 %s205, 16
      %s211 = scalar_lea.vmem [#allocation2], %s210
      %v212 = vld [vmem:[%s211] sm:$0xff]
      %v213 = vld [vmem:[%s211 + $0x8] sm:$0xff]
      %v214 = vpack.c.bf16 %v213, %v212
      %s215 = smul.u32 %s205, 8
      %s216 = scalar_lea.vmem %s1, %s215
      %v217 = vld [vmem:[%s216] sm:$0xff]
      %v218 = vpack.c.bf16 %v217, %v217
      %219 = vmatpush.bf16.xpose.msra.mxu0 0
      %220 = vmatpush.bf16.xpose.msra.mxu0 0
      %221 = vmatpush.bf16.xpose.msra.mxu0 0
      %222 = vmatpush.bf16.xpose.msra.mxu0 0
      %223 = vmatpush.bf16.xpose.msra.mxu0 0
      %224 = vmatpush.bf16.xpose.msra.mxu0 0
      %225 = vmatpush.bf16.xpose.msra.mxu0 0
      %226 = vmatpush.bf16.xpose.msra.mxu0 %v218
      %227 = vmatmul.bf16.gmra.mxu0 %v214
      %v228 = vpop.f32.mrf.mxu0
      %v229 = vadd.f32 0.0, %v228
      %v230 = vpop.f32.mrf.mxu0
      %v231 = vadd.f32 0.0, %v230
      %232 = vdwg.mxu0
      %vm233 = vcmask 64512
      %v234 = vsel %vm233, %v229, -inf
      %235 = vmax.xlane.f32.xlu0 %v234
      %v236 = vpop.xlane.xlu0 %235
      %v237 = vsel %vm233, %v231, -inf
      %238 = vmax.xlane.f32.xlu0 %v237
      %v239 = vpop.xlane.xlu0 %238
      %v240 = vsub.f32 %v229, %v236
      %v241 = vsub.f32 %v231, %v239
      %v242 = vmul.f32 %v240, 1.442695
      %v243 = vpow.pop %v242
      %v244 = vmul.f32 %v241, 1.442695
      %v245 = vpow.pop %v244
      %v246 = vsel %vm233, %v243, 0.0
      %247 = vadd.xlane.f32.xlu0 %v246
      %v248 = vpop.xlane.xlu0 %247
      %v249 = vsel %vm233, %v245, 0.0
      %250 = vadd.xlane.f32.xlu0 %v249
      %v251 = vpop.xlane.xlu0 %250
      %v252 = vrcp.pop %v248
      %v253 = vrcp.pop %v251
      %v254 = vmul.f32 %v243, %v252
      %v255 = vmul.f32 %v245, %v253
      %v256 = vpack.c.bf16 %v255, %v254
      %v258 = vsel %vm233, %v256, 0
      %vm260 = vcmask 1043456
      %v262 = vsel %vm260, %v218, 0
      %264 = vmatpush.bf16.msra.mxu0 0
      %265 = vmatpush.bf16.msra.mxu0 0
      %266 = vmatpush.bf16.msra.mxu0 0
      %267 = vmatpush.bf16.msra.mxu0 0
      %268 = vmatpush.bf16.msra.mxu0 0
      %269 = vmatpush.bf16.msra.mxu0 0
      %270 = vmatpush.bf16.msra.mxu0 0
      %271 = vmatpush.bf16.msra.mxu0 %v262
      %272 = vmatmul.bf16.gmra.mxu0 %v258
      %v273 = vpop.f32.mrf.mxu0
      %v274 = vadd.f32 0.0, %v273
      %v275 = vpop.f32.mrf.mxu0
      %v276 = vadd.f32 0.0, %v275
      %277 = vdwg.mxu0
      %s278 = scalar_lea.vmem [#allocation3], %s210
      %279 = vst [vmem:[%s278] sm:$0xff] %v274
      %280 = vst [vmem:[%s278 + $0x8] sm:$0xff] %v276
    $region70: #{tnet_as_forward.9} parent=1 // loop_footer
      %s209 = sadd.s32 1, %s205
    $region71: #{tnet_as_forward.9} parent=1 // loop_footer_branch
      %204 = sbr.rel target = $region67
    $region72: #{tnet_as_forward.9} parent=1 // loop_exit
      _
    %v281 = vld [vmem:[#allocation2] sm:$0xff]
    %v282 = vld [vmem:[#allocation2 + $0x8] sm:$0xff]
    %v283 = vld [vmem:[#allocation2 + $0x10] sm:$0xff]
    %v284 = vld [vmem:[#allocation2 + $0x18] sm:$0xff]
    %v285 = vpack.c.bf16 %v282, %v281
    %v286 = vpack.c.bf16 %v284, %v283
    %v287 = vld [vmem:[#allocation3] sm:$0xff]
    %v288 = vld [vmem:[#allocation3 + $0x8] sm:$0xff]
    %v289 = vld [vmem:[#allocation3 + $0x10] sm:$0xff]
    %v290 = vld [vmem:[#allocation3 + $0x18] sm:$0xff]
    %v291 = vpack.c.bf16 %v288, %v287
    %v292 = vpack.c.bf16 %v290, %v289
    %v309 = vunpack.c.l.b16 %v185
    %v310 = vunpack.c.l.b16 %v186
    %v311 = vunpack.c.l.b16 %v187
    %v312 = vunpack.c.l.b16 %v188
    %v313 = vunpack.c.l.b16 %v189
    %v314 = vunpack.c.l.b16 %v190
    %v315 = vunpack.c.l.b16 %v191
    %v316 = vunpack.c.l.b16 %v192
    %v317 = vunpack.c.l.b16 %v193
    %v318 = vunpack.c.l.b16 %v194
    %v319 = vunpack.c.l.b16 %v195
    %v320 = vunpack.c.l.b16 %v196
    %v321 = vunpack.c.l.b16 %v197
    %v322 = vunpack.c.l.b16 %v198
    %v323 = vunpack.c.l.b16 %v199
    %v324 = vunpack.c.l.b16 %v200
    %v325 = vpack.c.b16 %v310, %v309
    %v326 = vpack.c.b16 %v312, %v311
    %v327 = vpack.c.b16 %v314, %v313
    %v328 = vpack.c.b16 %v316, %v315
    %v329 = vpack.c.b16 %v318, %v317
    %v330 = vpack.c.b16 %v320, %v319
    %v331 = vpack.c.b16 %v322, %v321
    %v332 = vpack.c.b16 %v324, %v323
    %341 = vmatpush.bf16.msra.mxu0 %v332
    %342 = vmatpush.bf16.msra.mxu0 %v331
    %343 = vmatpush.bf16.msra.mxu0 %v330
    %344 = vmatpush.bf16.msra.mxu0 %v329
    %345 = vmatpush.bf16.msra.mxu0 %v328
    %346 = vmatpush.bf16.msra.mxu0 %v327
    %347 = vmatpush.bf16.msra.mxu0 %v326
    %348 = vmatpush.bf16.msra.mxu0 %v325
    %349 = vmatmul.bf16.gmra.mxu0 %v291
    %v350 = vpop.f32.mrf.mxu0
    %v351 = vadd.f32 0.0, %v350
    %v352 = vpop.f32.mrf.mxu0
    %v353 = vadd.f32 0.0, %v352
    %354 = vmatmul.bf16.gmra.mxu0 %v292
    %v355 = vpop.f32.mrf.mxu0
    %v356 = vadd.f32 0.0, %v355
    %v357 = vpop.f32.mrf.mxu0
    %v358 = vadd.f32 0.0, %v357
    %359 = vdwg.mxu0
    %v376 = vunpack.c.l.b16 %v169
    %v377 = vunpack.c.l.b16 %v170
    %v378 = vunpack.c.l.b16 %v171
    %v379 = vunpack.c.l.b16 %v172
    %v380 = vunpack.c.l.b16 %v173
    %v381 = vunpack.c.l.b16 %v174
    %v382 = vunpack.c.l.b16 %v175
    %v383 = vunpack.c.l.b16 %v176
    %v384 = vunpack.c.l.b16 %v177
    %v385 = vunpack.c.l.b16 %v178
    %v386 = vunpack.c.l.b16 %v179
    %v387 = vunpack.c.l.b16 %v180
    %v388 = vunpack.c.l.b16 %v181
    %v389 = vunpack.c.l.b16 %v182
    %v390 = vunpack.c.l.b16 %v183
    %v391 = vunpack.c.l.b16 %v184
    %v392 = vpack.c.b16 %v377, %v376
    %v393 = vpack.c.b16 %v379, %v378
    %v394 = vpack.c.b16 %v381, %v380
    %v395 = vpack.c.b16 %v383, %v382
    %v396 = vpack.c.b16 %v385, %v384
    %v397 = vpack.c.b16 %v387, %v386
    %v398 = vpack.c.b16 %v389, %v388
    %v399 = vpack.c.b16 %v391, %v390
    %408 = vmatpush.bf16.msra.mxu0 %v399
    %409 = vmatpush.bf16.msra.mxu0 %v398
    %410 = vmatpush.bf16.msra.mxu0 %v397
    %411 = vmatpush.bf16.msra.mxu0 %v396
    %412 = vmatpush.bf16.msra.mxu0 %v395
    %413 = vmatpush.bf16.msra.mxu0 %v394
    %414 = vmatpush.bf16.msra.mxu0 %v393
    %415 = vmatpush.bf16.msra.mxu0 %v392
    %416 = vmatmul.bf16.gmra.mxu0 %v285
    %v417 = vpop.f32.mrf.mxu0
    %v418 = vadd.f32 %v351, %v417
    %v419 = vpop.f32.mrf.mxu0
    %v420 = vadd.f32 %v353, %v419
    %421 = vmatmul.bf16.gmra.mxu0 %v286
    %v422 = vpop.f32.mrf.mxu0
    %v423 = vadd.f32 %v356, %v422
    %v424 = vpop.f32.mrf.mxu0
    %v425 = vadd.f32 %v358, %v424
    %426 = vdwg.mxu0
    %v428 = vperm.slane %v201, 0
    %v430 = vadd.f32 %v418, %v428
    %v431 = vadd.f32 %v420, %v428
    %v432 = vadd.f32 %v423, %v428
    %v433 = vadd.f32 %v425, %v428
    %v434 = vmax.f32 %v430, 0.0
    %v435 = vmax.f32 %v431, 0.0
    %v436 = vmax.f32 %v432, 0.0
    %v437 = vmax.f32 %v433, 0.0
    %v439 = vperm.slane %v202, 0
    %v441 = vmul.f32 %v281, %v439
    %v442 = vmul.f32 %v282, %v439
    %v443 = vmul.f32 %v283, %v439
    %v444 = vmul.f32 %v284, %v439
    %445 = vadd.xlane.f32.xlu0 %v441
    %v446 = vpop.xlane.xlu0 %445
    %447 = vadd.xlane.f32.xlu0 %v442
    %v448 = vpop.xlane.xlu0 %447
    %449 = vadd.xlane.f32.xlu0 %v443
    %v450 = vpop.xlane.xlu0 %449
    %451 = vadd.xlane.f32.xlu0 %v444
    %v452 = vpop.xlane.xlu0 %451
    %v454 = vperm.slane %v203, 0
    %v456 = vadd.f32 %v446, %v454
    %v457 = vadd.f32 %v448, %v454
    %v458 = vadd.f32 %v450, %v454
    %v459 = vadd.f32 %v452, %v454
    %v460 = vxor.u32 %v456, 2147483648
    %v461 = vxor.u32 %v457, 2147483648
    %v462 = vxor.u32 %v458, 2147483648
    %v463 = vxor.u32 %v459, 2147483648
    %v464 = vmul.f32 %v460, 1.442695
    %v465 = vpow.pop %v464
    %v466 = vmul.f32 %v461, 1.442695
    %v467 = vpow.pop %v466
    %v468 = vmul.f32 %v462, 1.442695
    %v469 = vpow.pop %v468
    %v470 = vmul.f32 %v463, 1.442695
    %v471 = vpow.pop %v470
    %v472 = vadd.f32 %v465, 1.0
    %v473 = vadd.f32 %v467, 1.0
    %v474 = vadd.f32 %v469, 1.0
    %v475 = vadd.f32 %v471, 1.0
    %v476 = vrcp.pop %v472
    %v477 = vmul.f32 %v472, %v476
    %v478 = vsub.f32 1.0, %v477
    %v479 = vmul.f32 %v476, %v478
    %v480 = vadd.f32 %v476, %v479
    %vm481 = vweird.f32 %v472
    %vm482 = vweird.f32 %v476
    %vm483 = vmor %vm481, %vm482
    %v484 = vsel %vm483, %v476, %v480
    %v485 = vand.u32 2147483647, %v472
    %vm486 = vcmp.eq.f32.partialorder %v485, 8.507059e+37
    %v487 = vand.u32 %v472, 2147483648
    %v488 = vor.u32 1.1754944e-38, %v487
    %v489 = vsel %vm486, %v488, %v484
    %v490 = vmul.f32 1.0, %v489
    %v491 = vrcp.pop %v473
    %v492 = vmul.f32 %v473, %v491
    %v493 = vsub.f32 1.0, %v492
    %v494 = vmul.f32 %v491, %v493
    %v495 = vadd.f32 %v491, %v494
    %vm496 = vweird.f32 %v473
    %vm497 = vweird.f32 %v491
    %vm498 = vmor %vm496, %vm497
    %v499 = vsel %vm498, %v491, %v495
    %v500 = vand.u32 2147483647, %v473
    %vm501 = vcmp.eq.f32.partialorder %v500, 8.507059e+37
    %v502 = vand.u32 %v473, 2147483648
    %v503 = vor.u32 1.1754944e-38, %v502
    %v504 = vsel %vm501, %v503, %v499
    %v505 = vmul.f32 1.0, %v504
    %v506 = vrcp.pop %v474
    %v507 = vmul.f32 %v474, %v506
    %v508 = vsub.f32 1.0, %v507
    %v509 = vmul.f32 %v506, %v508
    %v510 = vadd.f32 %v506, %v509
    %vm511 = vweird.f32 %v474
    %vm512 = vweird.f32 %v506
    %vm513 = vmor %vm511, %vm512
    %v514 = vsel %vm513, %v506, %v510
    %v515 = vand.u32 2147483647, %v474
    %vm516 = vcmp.eq.f32.partialorder %v515, 8.507059e+37
    %v517 = vand.u32 %v474, 2147483648
    %v518 = vor.u32 1.1754944e-38, %v517
    %v519 = vsel %vm516, %v518, %v514
    %v520 = vmul.f32 1.0, %v519
    %v521 = vrcp.pop %v475
    %v522 = vmul.f32 %v475, %v521
    %v523 = vsub.f32 1.0, %v522
    %v524 = vmul.f32 %v521, %v523
    %v525 = vadd.f32 %v521, %v524
    %vm526 = vweird.f32 %v475
    %vm527 = vweird.f32 %v521
    %vm528 = vmor %vm526, %vm527
    %v529 = vsel %vm528, %v521, %v525
    %v530 = vand.u32 2147483647, %v475
    %vm531 = vcmp.eq.f32.partialorder %v530, 8.507059e+37
    %v532 = vand.u32 %v475, 2147483648
    %v533 = vor.u32 1.1754944e-38, %v532
    %v534 = vsel %vm531, %v533, %v529
    %v535 = vmul.f32 1.0, %v534
    %v536 = vsub.f32 1.0, %v490
    %v537 = vsub.f32 1.0, %v505
    %v538 = vsub.f32 1.0, %v520
    %v539 = vsub.f32 1.0, %v535
    %541 = vset.pattern.permute.xlu0 0
    %542 = vperm.xlu0 %541, %v536
    %v543 = vpop.permute.xlu0 %542
    %546 = vset.pattern.permute.xlu0 0
    %547 = vperm.xlu0 %546, %v537
    %v548 = vpop.permute.xlu0 %547
    %551 = vset.pattern.permute.xlu0 0
    %552 = vperm.xlu0 %551, %v538
    %v553 = vpop.permute.xlu0 %552
    %556 = vset.pattern.permute.xlu0 0
    %557 = vperm.xlu0 %556, %v539
    %v558 = vpop.permute.xlu0 %557
    %v560 = vmul.f32 %v281, %v543
    %v561 = vmul.f32 %v282, %v548
    %v562 = vmul.f32 %v283, %v553
    %v563 = vmul.f32 %v284, %v558
    %565 = vset.pattern.permute.xlu0 0
    %566 = vperm.xlu0 %565, %v490
    %v567 = vpop.permute.xlu0 %566
    %570 = vset.pattern.permute.xlu0 0
    %571 = vperm.xlu0 %570, %v505
    %v572 = vpop.permute.xlu0 %571
    %575 = vset.pattern.permute.xlu0 0
    %576 = vperm.xlu0 %575, %v520
    %v577 = vpop.permute.xlu0 %576
    %580 = vset.pattern.permute.xlu0 0
    %581 = vperm.xlu0 %580, %v535
    %v582 = vpop.permute.xlu0 %581
    %v584 = vmul.f32 %v434, %v567
    %v585 = vmul.f32 %v435, %v572
    %v586 = vmul.f32 %v436, %v577
    %v587 = vmul.f32 %v437, %v582
    %v588 = vadd.f32 %v560, %v584
    %v589 = vadd.f32 %v561, %v585
    %v590 = vadd.f32 %v562, %v586
    %v591 = vadd.f32 %v563, %v587
    %593 = vset.pattern.permute.xlu0 0
    %594 = vperm.xlu0 %593, %v165
    %v595 = vpop.permute.xlu0 %594
    %598 = vset.pattern.permute.xlu0 0
    %599 = vperm.xlu0 %598, %v166
    %v600 = vpop.permute.xlu0 %599
    %603 = vset.pattern.permute.xlu0 0
    %604 = vperm.xlu0 %603, %v167
    %v605 = vpop.permute.xlu0 %604
    %608 = vset.pattern.permute.xlu0 0
    %609 = vperm.xlu0 %608, %v168
    %v610 = vpop.permute.xlu0 %609
    %v612 = vmul.f32 %v588, %v595
    %v613 = vmul.f32 %v589, %v600
    %v614 = vmul.f32 %v590, %v605
    %v615 = vmul.f32 %v591, %v610
    %616 = vst [vmem:[#allocation2] sm:$0xff] %v612
    %617 = vst [vmem:[#allocation2 + $0x8] sm:$0xff] %v613
    %618 = vst [vmem:[#allocation2 + $0x10] sm:$0xff] %v614
    %619 = vst [vmem:[#allocation2 + $0x18] sm:$0xff] %v615
    loop: start=0, step=1, limit=2
    $region73: #{tnet_as_forward.9} parent=1 // loop_pre_header
      _
    $region74: #{tnet_as_forward.9} parent=1 // loop_header
      %s621 = sphi 0, %s625
      %p622 = scmp.ge.s32.totalorder %s621, 2
    $region75: #{tnet_as_forward.9} parent=1 // loop_header_branch
      %624 = sbr.rel (%p622) target = $region79
    $region76: #{tnet_as_forward.9} parent=1 // loop_body
      %s626 = smul.u32 %s621, 16
      %s627 = scalar_lea.vmem [#allocation2], %s626
      %v628 = vld [vmem:[%s627] sm:$0xff]
      %v629 = vld [vmem:[%s627 + $0x8] sm:$0xff]
      %v630 = vpack.c.bf16 %v629, %v628
      %s631 = smul.u32 %s621, 8
      %s632 = scalar_lea.vmem %s1, %s631
      %v633 = vld [vmem:[%s632] sm:$0xff]
      %v634 = vpack.c.bf16 %v633, %v633
      %635 = vmatpush.bf16.xpose.msra.mxu0 0
      %636 = vmatpush.bf16.xpose.msra.mxu0 0
      %637 = vmatpush.bf16.xpose.msra.mxu0 0
      %638 = vmatpush.bf16.xpose.msra.mxu0 0
      %639 = vmatpush.bf16.xpose.msra.mxu0 0
      %640 = vmatpush.bf16.xpose.msra.mxu0 0
      %641 = vmatpush.bf16.xpose.msra.mxu0 0
      %642 = vmatpush.bf16.xpose.msra.mxu0 %v634
      %643 = vmatmul.bf16.gmra.mxu0 %v630
      %v644 = vpop.f32.mrf.mxu0
      %v645 = vadd.f32 0.0, %v644
      %v646 = vpop.f32.mrf.mxu0
      %v647 = vadd.f32 0.0, %v646
      %648 = vdwg.mxu0
      %vm649 = vcmask 64512
      %v650 = vsel %vm649, %v645, -inf
      %651 = vmax.xlane.f32.xlu0 %v650
      %v652 = vpop.xlane.xlu0 %651
      %v653 = vsel %vm649, %v647, -inf
      %654 = vmax.xlane.f32.xlu0 %v653
      %v655 = vpop.xlane.xlu0 %654
      %v656 = vsub.f32 %v645, %v652
      %v657 = vsub.f32 %v647, %v655
      %v658 = vmul.f32 %v656, 1.442695
      %v659 = vpow.pop %v658
      %v660 = vmul.f32 %v657, 1.442695
      %v661 = vpow.pop %v660
      %v662 = vsel %vm649, %v659, 0.0
      %663 = vadd.xlane.f32.xlu0 %v662
      %v664 = vpop.xlane.xlu0 %663
      %v665 = vsel %vm649, %v661, 0.0
      %666 = vadd.xlane.f32.xlu0 %v665
      %v667 = vpop.xlane.xlu0 %666
      %v668 = vrcp.pop %v664
      %v669 = vrcp.pop %v667
      %v670 = vmul.f32 %v659, %v668
      %v671 = vmul.f32 %v661, %v669
      %v672 = vpack.c.bf16 %v671, %v670
      %v674 = vsel %vm649, %v672, 0
      %vm676 = vcmask 1043456
      %v678 = vsel %vm676, %v634, 0
      %680 = vmatpush.bf16.msra.mxu0 0
      %681 = vmatpush.bf16.msra.mxu0 0
      %682 = vmatpush.bf16.msra.mxu0 0
      %683 = vmatpush.bf16.msra.mxu0 0
      %684 = vmatpush.bf16.msra.mxu0 0
      %685 = vmatpush.bf16.msra.mxu0 0
      %686 = vmatpush.bf16.msra.mxu0 0
      %687 = vmatpush.bf16.msra.mxu0 %v678
      %688 = vmatmul.bf16.gmra.mxu0 %v674
      %v689 = vpop.f32.mrf.mxu0
      %v690 = vadd.f32 0.0, %v689
      %v691 = vpop.f32.mrf.mxu0
      %v692 = vadd.f32 0.0, %v691
      %693 = vdwg.mxu0
      %s694 = scalar_lea.vmem [#allocation3], %s626
      %695 = vst [vmem:[%s694] sm:$0xff] %v690
      %696 = vst [vmem:[%s694 + $0x8] sm:$0xff] %v692
    $region77: #{tnet_as_forward.9} parent=1 // loop_footer
      %s625 = sadd.s32 1, %s621
    $region78: #{tnet_as_forward.9} parent=1 // loop_footer_branch
      %620 = sbr.rel target = $region74
    $region79: #{tnet_as_forward.9} parent=1 // loop_exit
      _
    %v697 = vld [vmem:[#allocation2] sm:$0xff]
    %v698 = vld [vmem:[#allocation2 + $0x8] sm:$0xff]
    %v699 = vld [vmem:[#allocation2 + $0x10] sm:$0xff]
    %v700 = vld [vmem:[#allocation2 + $0x18] sm:$0xff]
    %v701 = vpack.c.bf16 %v698, %v697
    %v702 = vpack.c.bf16 %v700, %v699
    %v703 = vld [vmem:[#allocation3] sm:$0xff]
    %v704 = vld [vmem:[#allocation3 + $0x8] sm:$0xff]
    %v705 = vld [vmem:[#allocation3 + $0x10] sm:$0xff]
    %v706 = vld [vmem:[#allocation3 + $0x18] sm:$0xff]
    %v707 = vpack.c.bf16 %v704, %v703
    %v708 = vpack.c.bf16 %v706, %v705
    %709 = vmatpush.bf16.msra.mxu0 %v332
    %710 = vmatpush.bf16.msra.mxu0 %v331
    %711 = vmatpush.bf16.msra.mxu0 %v330
    %712 = vmatpush.bf16.msra.mxu0 %v329
    %713 = vmatpush.bf16.msra.mxu0 %v328
    %714 = vmatpush.bf16.msra.mxu0 %v327
    %715 = vmatpush.bf16.msra.mxu0 %v326
    %716 = vmatpush.bf16.msra.mxu0 %v325
    %717 = vmatmul.bf16.gmra.mxu0 %v707
    %v718 = vpop.f32.mrf.mxu0
    %v719 = vadd.f32 0.0, %v718
    %v720 = vpop.f32.mrf.mxu0
    %v721 = vadd.f32 0.0, %v720
    %722 = vmatmul.bf16.gmra.mxu0 %v708
    %v723 = vpop.f32.mrf.mxu0
    %v724 = vadd.f32 0.0, %v723
    %v725 = vpop.f32.mrf.mxu0
    %v726 = vadd.f32 0.0, %v725
    %727 = vdwg.mxu0
    %728 = vmatpush.bf16.msra.mxu0 %v399
    %729 = vmatpush.bf16.msra.mxu0 %v398
    %730 = vmatpush.bf16.msra.mxu0 %v397
    %731 = vmatpush.bf16.msra.mxu0 %v396
    %732 = vmatpush.bf16.msra.mxu0 %v395
    %733 = vmatpush.bf16.msra.mxu0 %v394
    %734 = vmatpush.bf16.msra.mxu0 %v393
    %735 = vmatpush.bf16.msra.mxu0 %v392
    %736 = vmatmul.bf16.gmra.mxu0 %v701
    %v737 = vpop.f32.mrf.mxu0
    %v738 = vadd.f32 %v719, %v737
    %v739 = vpop.f32.mrf.mxu0
    %v740 = vadd.f32 %v721, %v739
    %741 = vmatmul.bf16.gmra.mxu0 %v702
    %v742 = vpop.f32.mrf.mxu0
    %v743 = vadd.f32 %v724, %v742
    %v744 = vpop.f32.mrf.mxu0
    %v745 = vadd.f32 %v726, %v744
    %746 = vdwg.mxu0
    %v747 = vadd.f32 %v738, %v428
    %v748 = vadd.f32 %v740, %v428
    %v749 = vadd.f32 %v743, %v428
    %v750 = vadd.f32 %v745, %v428
    %v751 = vmax.f32 %v747, 0.0
    %v752 = vmax.f32 %v748, 0.0
    %v753 = vmax.f32 %v749, 0.0
    %v754 = vmax.f32 %v750, 0.0
    %v755 = vmul.f32 %v697, %v439
    %v756 = vmul.f32 %v698, %v439
    %v757 = vmul.f32 %v699, %v439
    %v758 = vmul.f32 %v700, %v439
    %759 = vadd.xlane.f32.xlu0 %v755
    %v760 = vpop.xlane.xlu0 %759
    %761 = vadd.xlane.f32.xlu0 %v756
    %v762 = vpop.xlane.xlu0 %761
    %763 = vadd.xlane.f32.xlu0 %v757
    %v764 = vpop.xlane.xlu0 %763
    %765 = vadd.xlane.f32.xlu0 %v758
    %v766 = vpop.xlane.xlu0 %765
    %v767 = vadd.f32 %v760, %v454
    %v768 = vadd.f32 %v762, %v454
    %v769 = vadd.f32 %v764, %v454
    %v770 = vadd.f32 %v766, %v454
    %v771 = vxor.u32 %v767, 2147483648
    %v772 = vxor.u32 %v768, 2147483648
    %v773 = vxor.u32 %v769, 2147483648
    %v774 = vxor.u32 %v770, 2147483648
    %v775 = vmul.f32 %v771, 1.442695
    %v776 = vpow.pop %v775
    %v777 = vmul.f32 %v772, 1.442695
    %v778 = vpow.pop %v777
    %v779 = vmul.f32 %v773, 1.442695
    %v780 = vpow.pop %v779
    %v781 = vmul.f32 %v774, 1.442695
    %v782 = vpow.pop %v781
    %v783 = vadd.f32 %v776, 1.0
    %v784 = vadd.f32 %v778, 1.0
    %v785 = vadd.f32 %v780, 1.0
    %v786 = vadd.f32 %v782, 1.0
    %v787 = vrcp.pop %v783
    %v788 = vmul.f32 %v783, %v787
    %v789 = vsub.f32 1.0, %v788
    %v790 = vmul.f32 %v787, %v789
    %v791 = vadd.f32 %v787, %v790
    %vm792 = vweird.f32 %v783
    %vm793 = vweird.f32 %v787
    %vm794 = vmor %vm792, %vm793
    %v795 = vsel %vm794, %v787, %v791
    %v796 = vand.u32 2147483647, %v783
    %vm797 = vcmp.eq.f32.partialorder %v796, 8.507059e+37
    %v798 = vand.u32 %v783, 2147483648
    %v799 = vor.u32 1.1754944e-38, %v798
    %v800 = vsel %vm797, %v799, %v795
    %v801 = vmul.f32 1.0, %v800
    %v802 = vrcp.pop %v784
    %v803 = vmul.f32 %v784, %v802
    %v804 = vsub.f32 1.0, %v803
    %v805 = vmul.f32 %v802, %v804
    %v806 = vadd.f32 %v802, %v805
    %vm807 = vweird.f32 %v784
    %vm808 = vweird.f32 %v802
    %vm809 = vmor %vm807, %vm808
    %v810 = vsel %vm809, %v802, %v806
    %v811 = vand.u32 2147483647, %v784
    %vm812 = vcmp.eq.f32.partialorder %v811, 8.507059e+37
    %v813 = vand.u32 %v784, 2147483648
    %v814 = vor.u32 1.1754944e-38, %v813
    %v815 = vsel %vm812, %v814, %v810
    %v816 = vmul.f32 1.0, %v815
    %v817 = vrcp.pop %v785
    %v818 = vmul.f32 %v785, %v817
    %v819 = vsub.f32 1.0, %v818
    %v820 = vmul.f32 %v817, %v819
    %v821 = vadd.f32 %v817, %v820
    %vm822 = vweird.f32 %v785
    %vm823 = vweird.f32 %v817
    %vm824 = vmor %vm822, %vm823
    %v825 = vsel %vm824, %v817, %v821
    %v826 = vand.u32 2147483647, %v785
    %vm827 = vcmp.eq.f32.partialorder %v826, 8.507059e+37
    %v828 = vand.u32 %v785, 2147483648
    %v829 = vor.u32 1.1754944e-38, %v828
    %v830 = vsel %vm827, %v829, %v825
    %v831 = vmul.f32 1.0, %v830
    %v832 = vrcp.pop %v786
    %v833 = vmul.f32 %v786, %v832
    %v834 = vsub.f32 1.0, %v833
    %v835 = vmul.f32 %v832, %v834
    %v836 = vadd.f32 %v832, %v835
    %vm837 = vweird.f32 %v786
    %vm838 = vweird.f32 %v832
    %vm839 = vmor %vm837, %vm838
    %v840 = vsel %vm839, %v832, %v836
    %v841 = vand.u32 2147483647, %v786
    %vm842 = vcmp.eq.f32.partialorder %v841, 8.507059e+37
    %v843 = vand.u32 %v786, 2147483648
    %v844 = vor.u32 1.1754944e-38, %v843
    %v845 = vsel %vm842, %v844, %v840
    %v846 = vmul.f32 1.0, %v845
    %v847 = vsub.f32 1.0, %v801
    %v848 = vsub.f32 1.0, %v816
    %v849 = vsub.f32 1.0, %v831
    %v850 = vsub.f32 1.0, %v846
    %852 = vset.pattern.permute.xlu0 0
    %853 = vperm.xlu0 %852, %v847
    %v854 = vpop.permute.xlu0 %853
    %857 = vset.pattern.permute.xlu0 0
    %858 = vperm.xlu0 %857, %v848
    %v859 = vpop.permute.xlu0 %858
    %862 = vset.pattern.permute.xlu0 0
    %863 = vperm.xlu0 %862, %v849
    %v864 = vpop.permute.xlu0 %863
    %867 = vset.pattern.permute.xlu0 0
    %868 = vperm.xlu0 %867, %v850
    %v869 = vpop.permute.xlu0 %868
    %v871 = vmul.f32 %v697, %v854
    %v872 = vmul.f32 %v698, %v859
    %v873 = vmul.f32 %v699, %v864
    %v874 = vmul.f32 %v700, %v869
    %876 = vset.pattern.permute.xlu0 0
    %877 = vperm.xlu0 %876, %v801
    %v878 = vpop.permute.xlu0 %877
    %881 = vset.pattern.permute.xlu0 0
    %882 = vperm.xlu0 %881, %v816
    %v883 = vpop.permute.xlu0 %882
    %886 = vset.pattern.permute.xlu0 0
    %887 = vperm.xlu0 %886, %v831
    %v888 = vpop.permute.xlu0 %887
    %891 = vset.pattern.permute.xlu0 0
    %892 = vperm.xlu0 %891, %v846
    %v893 = vpop.permute.xlu0 %892
    %v895 = vmul.f32 %v751, %v878
    %v896 = vmul.f32 %v752, %v883
    %v897 = vmul.f32 %v753, %v888
    %v898 = vmul.f32 %v754, %v893
    %v899 = vadd.f32 %v871, %v895
    %v900 = vadd.f32 %v872, %v896
    %v901 = vadd.f32 %v873, %v897
    %v902 = vadd.f32 %v874, %v898
    %v903 = vmul.f32 %v899, %v595
    %v904 = vmul.f32 %v900, %v600
    %v905 = vmul.f32 %v901, %v605
    %v906 = vmul.f32 %v902, %v610
    %907 = vst [vmem:[#allocation2] sm:$0xff] %v903
    %908 = vst [vmem:[#allocation2 + $0x8] sm:$0xff] %v904
    %909 = vst [vmem:[#allocation2 + $0x10] sm:$0xff] %v905
    %910 = vst [vmem:[#allocation2 + $0x18] sm:$0xff] %v906
    %v911 = vld [vmem:[#allocation2] sm:$0xff]
    %v912 = vld [vmem:[#allocation2 + $0x8] sm:$0xff]
    %v913 = vld [vmem:[#allocation2 + $0x10] sm:$0xff]
    %v914 = vld [vmem:[#allocation2 + $0x18] sm:$0xff]
    %v915 = vpack.c.bf16 %v912, %v911
    %v916 = vpack.c.bf16 %v914, %v913
    %v917 = vld [vmem:[%s10] sm:$0xf]
    %v918 = vld [vmem:[%s10 + $0x4] sm:$0xf]
    %v919 = vld [vmem:[%s10 + $0x8] sm:$0xf]
    %v920 = vld [vmem:[%s10 + $0xc] sm:$0xf]
    %v921 = vld [vmem:[%s10 + $0x10] sm:$0xf]
    %v922 = vld [vmem:[%s10 + $0x14] sm:$0xf]
    %v923 = vld [vmem:[%s10 + $0x18] sm:$0xf]
    %v924 = vld [vmem:[%s10 + $0x1c] sm:$0xf]
    %v925 = vld [vmem:[%s10 + $0x20] sm:$0xf]
    %v926 = vld [vmem:[%s10 + $0x24] sm:$0xf]
    %v927 = vld [vmem:[%s10 + $0x28] sm:$0xf]
    %v928 = vld [vmem:[%s10 + $0x2c] sm:$0xf]
    %v929 = vld [vmem:[%s10 + $0x30] sm:$0xf]
    %v930 = vld [vmem:[%s10 + $0x34] sm:$0xf]
    %v931 = vld [vmem:[%s10 + $0x38] sm:$0xf]
    %v932 = vld [vmem:[%s10 + $0x3c] sm:$0xf]
    %v949 = vunpack.c.l.b16 %v917
    %v950 = vunpack.c.l.b16 %v918
    %v951 = vunpack.c.l.b16 %v919
    %v952 = vunpack.c.l.b16 %v920
    %v953 = vunpack.c.l.b16 %v921
    %v954 = vunpack.c.l.b16 %v922
    %v955 = vunpack.c.l.b16 %v923
    %v956 = vunpack.c.l.b16 %v924
    %v957 = vunpack.c.l.b16 %v925
    %v958 = vunpack.c.l.b16 %v926
    %v959 = vunpack.c.l.b16 %v927
    %v960 = vunpack.c.l.b16 %v928
    %v961 = vunpack.c.l.b16 %v929
    %v962 = vunpack.c.l.b16 %v930
    %v963 = vunpack.c.l.b16 %v931
    %v964 = vunpack.c.l.b16 %v932
    %v965 = vpack.c.b16 %v950, %v949
    %v966 = vpack.c.b16 %v952, %v951
    %v967 = vpack.c.b16 %v954, %v953
    %v968 = vpack.c.b16 %v956, %v955
    %v969 = vpack.c.b16 %v958, %v957
    %v970 = vpack.c.b16 %v960, %v959
    %v971 = vpack.c.b16 %v962, %v961
    %v972 = vpack.c.b16 %v964, %v963
    %981 = vmatpush.bf16.msra.mxu0 %v972
    %982 = vmatpush.bf16.msra.mxu0 %v971
    %983 = vmatpush.bf16.msra.mxu0 %v970
    %984 = vmatpush.bf16.msra.mxu0 %v969
    %985 = vmatpush.bf16.msra.mxu0 %v968
    %986 = vmatpush.bf16.msra.mxu0 %v967
    %987 = vmatpush.bf16.msra.mxu0 %v966
    %988 = vmatpush.bf16.msra.mxu0 %v965
    %989 = vmatmul.bf16.gmra.mxu0 %v915
    %v990 = vpop.f32.mrf.mxu0
    %v991 = vadd.f32 0.0, %v990
    %v992 = vpop.f32.mrf.mxu0
    %v993 = vadd.f32 0.0, %v992
    %994 = vmatmul.bf16.gmra.mxu0 %v916
    %v995 = vpop.f32.mrf.mxu0
    %v996 = vadd.f32 0.0, %v995
    %v997 = vpop.f32.mrf.mxu0
    %v998 = vadd.f32 0.0, %v997
    %999 = vdwg.mxu0
    %s1000 = scalar_lea.vmem %s10, 64
    %v1001 = vld [vmem:[%s1000] sm:$0xf]
    %v1002 = vld [vmem:[%s1000 + $0x4] sm:$0xf]
    %v1003 = vld [vmem:[%s1000 + $0x8] sm:$0xf]
    %v1004 = vld [vmem:[%s1000 + $0xc] sm:$0xf]
    %v1005 = vld [vmem:[%s1000 + $0x10] sm:$0xf]
    %v1006 = vld [vmem:[%s1000 + $0x14] sm:$0xf]
    %v1007 = vld [vmem:[%s1000 + $0x18] sm:$0xf]
    %v1008 = vld [vmem:[%s1000 + $0x1c] sm:$0xf]
    %v1009 = vld [vmem:[%s1000 + $0x20] sm:$0xf]
    %v1010 = vld [vmem:[%s1000 + $0x24] sm:$0xf]
    %v1011 = vld [vmem:[%s1000 + $0x28] sm:$0xf]
    %v1012 = vld [vmem:[%s1000 + $0x2c] sm:$0xf]
    %v1013 = vld [vmem:[%s1000 + $0x30] sm:$0xf]
    %v1014 = vld [vmem:[%s1000 + $0x34] sm:$0xf]
    %v1015 = vld [vmem:[%s1000 + $0x38] sm:$0xf]
    %v1016 = vld [vmem:[%s1000 + $0x3c] sm:$0xf]
    %v1033 = vunpack.c.l.b16 %v1001
    %v1034 = vunpack.c.l.b16 %v1002
    %v1035 = vunpack.c.l.b16 %v1003
    %v1036 = vunpack.c.l.b16 %v1004
    %v1037 = vunpack.c.l.b16 %v1005
    %v1038 = vunpack.c.l.b16 %v1006
    %v1039 = vunpack.c.l.b16 %v1007
    %v1040 = vunpack.c.l.b16 %v1008
    %v1041 = vunpack.c.l.b16 %v1009
    %v1042 = vunpack.c.l.b16 %v1010
    %v1043 = vunpack.c.l.b16 %v1011
    %v1044 = vunpack.c.l.b16 %v1012
    %v1045 = vunpack.c.l.b16 %v1013
    %v1046 = vunpack.c.l.b16 %v1014
    %v1047 = vunpack.c.l.b16 %v1015
    %v1048 = vunpack.c.l.b16 %v1016
    %v1049 = vpack.c.b16 %v1034, %v1033
    %v1050 = vpack.c.b16 %v1036, %v1035
    %v1051 = vpack.c.b16 %v1038, %v1037
    %v1052 = vpack.c.b16 %v1040, %v1039
    %v1053 = vpack.c.b16 %v1042, %v1041
    %v1054 = vpack.c.b16 %v1044, %v1043
    %v1055 = vpack.c.b16 %v1046, %v1045
    %v1056 = vpack.c.b16 %v1048, %v1047
    %1065 = vmatpush.bf16.msra.mxu0 %v1056
    %1066 = vmatpush.bf16.msra.mxu0 %v1055
    %1067 = vmatpush.bf16.msra.mxu0 %v1054
    %1068 = vmatpush.bf16.msra.mxu0 %v1053
    %1069 = vmatpush.bf16.msra.mxu0 %v1052
    %1070 = vmatpush.bf16.msra.mxu0 %v1051
    %1071 = vmatpush.bf16.msra.mxu0 %v1050
    %1072 = vmatpush.bf16.msra.mxu0 %v1049
    %1073 = vmatmul.bf16.gmra.mxu0 %v915
    %v1074 = vpop.f32.mrf.mxu0
    %v1075 = vadd.f32 0.0, %v1074
    %v1076 = vpop.f32.mrf.mxu0
    %v1077 = vadd.f32 0.0, %v1076
    %1078 = vmatmul.bf16.gmra.mxu0 %v916
    %v1079 = vpop.f32.mrf.mxu0
    %v1080 = vadd.f32 0.0, %v1079
    %v1081 = vpop.f32.mrf.mxu0
    %v1082 = vadd.f32 0.0, %v1081
    %1083 = vdwg.mxu0
    %s1084 = scalar_lea.vmem %s10, 128
    %v1085 = vld [vmem:[%s1084] sm:$0xf]
    %v1086 = vld [vmem:[%s1084 + $0x4] sm:$0xf]
    %v1087 = vld [vmem:[%s1084 + $0x8] sm:$0xf]
    %v1088 = vld [vmem:[%s1084 + $0xc] sm:$0xf]
    %v1089 = vld [vmem:[%s1084 + $0x10] sm:$0xf]
    %v1090 = vld [vmem:[%s1084 + $0x14] sm:$0xf]
    %v1091 = vld [vmem:[%s1084 + $0x18] sm:$0xf]
    %v1092 = vld [vmem:[%s1084 + $0x1c] sm:$0xf]
    %v1093 = vld [vmem:[%s1084 + $0x20] sm:$0xf]
    %v1094 = vld [vmem:[%s1084 + $0x24] sm:$0xf]
    %v1095 = vld [vmem:[%s1084 + $0x28] sm:$0xf]
    %v1096 = vld [vmem:[%s1084 + $0x2c] sm:$0xf]
    %v1097 = vld [vmem:[%s1084 + $0x30] sm:$0xf]
    %v1098 = vld [vmem:[%s1084 + $0x34] sm:$0xf]
    %v1099 = vld [vmem:[%s1084 + $0x38] sm:$0xf]
    %v1100 = vld [vmem:[%s1084 + $0x3c] sm:$0xf]
    %v1117 = vunpack.c.l.b16 %v1085
    %v1118 = vunpack.c.l.b16 %v1086
    %v1119 = vunpack.c.l.b16 %v1087
    %v1120 = vunpack.c.l.b16 %v1088
    %v1121 = vunpack.c.l.b16 %v1089
    %v1122 = vunpack.c.l.b16 %v1090
    %v1123 = vunpack.c.l.b16 %v1091
    %v1124 = vunpack.c.l.b16 %v1092
    %v1125 = vunpack.c.l.b16 %v1093
    %v1126 = vunpack.c.l.b16 %v1094
    %v1127 = vunpack.c.l.b16 %v1095
    %v1128 = vunpack.c.l.b16 %v1096
    %v1129 = vunpack.c.l.b16 %v1097
    %v1130 = vunpack.c.l.b16 %v1098
    %v1131 = vunpack.c.l.b16 %v1099
    %v1132 = vunpack.c.l.b16 %v1100
    %v1133 = vpack.c.b16 %v1118, %v1117
    %v1134 = vpack.c.b16 %v1120, %v1119
    %v1135 = vpack.c.b16 %v1122, %v1121
    %v1136 = vpack.c.b16 %v1124, %v1123
    %v1137 = vpack.c.b16 %v1126, %v1125
    %v1138 = vpack.c.b16 %v1128, %v1127
    %v1139 = vpack.c.b16 %v1130, %v1129
    %v1140 = vpack.c.b16 %v1132, %v1131
    %1149 = vmatpush.bf16.msra.mxu0 %v1140
    %1150 = vmatpush.bf16.msra.mxu0 %v1139
    %1151 = vmatpush.bf16.msra.mxu0 %v1138
    %1152 = vmatpush.bf16.msra.mxu0 %v1137
    %1153 = vmatpush.bf16.msra.mxu0 %v1136
    %1154 = vmatpush.bf16.msra.mxu0 %v1135
    %1155 = vmatpush.bf16.msra.mxu0 %v1134
    %1156 = vmatpush.bf16.msra.mxu0 %v1133
    %1157 = vmatmul.bf16.gmra.mxu0 %v915
    %v1158 = vpop.f32.mrf.mxu0
    %v1159 = vadd.f32 0.0, %v1158
    %v1160 = vpop.f32.mrf.mxu0
    %v1161 = vadd.f32 0.0, %v1160
    %1162 = vmatmul.bf16.gmra.mxu0 %v916
    %v1163 = vpop.f32.mrf.mxu0
    %v1164 = vadd.f32 0.0, %v1163
    %v1165 = vpop.f32.mrf.mxu0
    %v1166 = vadd.f32 0.0, %v1165
    %1167 = vdwg.mxu0
    %vm1168 = vcmp.eq.s32.totalorder %v92, 0
    %vm1169 = vcmp.eq.s32.totalorder %v93, 0
    %v1170 = vsel %vm1168, 0.0, 1.0
    %v1171 = vsel %vm1169, 0.0, 1.0
    %vm1172 = vcmp.eq.s32.totalorder %v92, 15
    %vm1173 = vcmp.eq.s32.totalorder %v93, 15
    %v1174 = vsel %vm1172, 0.0, 1.0
    %v1175 = vsel %vm1173, 0.0, 1.0
    %v1176 = vrot.slane %v991, 7
    %v1177 = vrot.slane %v993, 7
    %v1178 = vrot.slane %v996, 7
    %v1179 = vrot.slane %v998, 7
    %vm1180 = vcmp.lt.s32.totalorder %v92, 1
    %v1181 = vsel %vm1180, %v1178, %v1179
    %v1182 = vsel %vm1180, %v1177, %v1178
    %v1183 = vsel %vm1180, %v1176, %v1177
    %v1184 = vsel %vm1180, %v1179, %v1176
    %v1185 = vmul.f32 %v1184, %v1170
    %v1186 = vmul.f32 %v1183, %v1171
    %v1187 = vmul.f32 %v1182, %v1170
    %v1188 = vmul.f32 %v1181, %v1171
    %v1189 = vadd.f32 %v1185, %v1075
    %v1190 = vadd.f32 %v1186, %v1077
    %v1191 = vadd.f32 %v1187, %v1080
    %v1192 = vadd.f32 %v1188, %v1082
    %v1193 = vrot.slane %v1159, 1
    %v1194 = vrot.slane %v1161, 1
    %v1195 = vrot.slane %v1164, 1
    %v1196 = vrot.slane %v1166, 1
    %vm1197 = vcmp.lt.s32.totalorder %v92, 7
    %v1198 = vsel %vm1197, %v1195, %v1196
    %v1199 = vsel %vm1197, %v1194, %v1195
    %v1200 = vsel %vm1197, %v1193, %v1194
    %v1201 = vsel %vm1197, %v1196, %v1193
    %v1202 = vmul.f32 %v1200, %v1174
    %v1203 = vmul.f32 %v1199, %v1175
    %v1204 = vmul.f32 %v1198, %v1174
    %v1205 = vmul.f32 %v1201, %v1175
    %v1206 = vadd.f32 %v1189, %v1202
    %v1207 = vadd.f32 %v1190, %v1203
    %v1208 = vadd.f32 %v1191, %v1204
    %v1209 = vadd.f32 %v1192, %v1205
    %v1210 = vld [vmem:[%s11] sm:$0x1]
    %v1212 = vperm.slane %v1210, 0
    %v1214 = vadd.f32 %v1206, %v1212
    %v1215 = vadd.f32 %v1207, %v1212
    %v1216 = vadd.f32 %v1208, %v1212
    %v1217 = vadd.f32 %v1209, %v1212
    %v1218 = vmax.f32 %v1214, %v1215
    %v1219 = vrot.slane %v1218, 4
    %v1220 = vmax.f32 %v1218, %v1219
    %v1221 = vrot.slane %v1220, 2
    %v1222 = vmax.f32 %v1220, %v1221
    %v1223 = vrot.slane %v1222, 1
    %v1224 = vmax.f32 %v1222, %v1223
    %v1225 = vmax.f32 %v1216, %v1217
    %v1226 = vrot.slane %v1225, 4
    %v1227 = vmax.f32 %v1225, %v1226
    %v1228 = vrot.slane %v1227, 2
    %v1229 = vmax.f32 %v1227, %v1228
    %v1230 = vrot.slane %v1229, 1
    %v1231 = vmax.f32 %v1229, %v1230
    %v1232 = vpack.c.bf16 %v1224, %v1224
    %v1233 = vpack.c.bf16 %v1231, %v1231
    %v1234 = vld [vmem:[#allocation8] sm:$0xf]
    %v1235 = vld [vmem:[#allocation8 + $0x4] sm:$0xf]
    %v1236 = vld [vmem:[#allocation8 + $0x8] sm:$0xf]
    %v1237 = vld [vmem:[#allocation8 + $0xc] sm:$0xf]
    %v1238 = vld [vmem:[#allocation8 + $0x10] sm:$0xf]
    %v1239 = vld [vmem:[#allocation8 + $0x14] sm:$0xf]
    %v1240 = vld [vmem:[#allocation8 + $0x18] sm:$0xf]
    %v1241 = vld [vmem:[#allocation8 + $0x1c] sm:$0xf]
    %v1242 = vld [vmem:[#allocation8 + $0x20] sm:$0xf]
    %v1243 = vld [vmem:[#allocation8 + $0x24] sm:$0xf]
    %v1244 = vld [vmem:[#allocation8 + $0x28] sm:$0xf]
    %v1245 = vld [vmem:[#allocation8 + $0x2c] sm:$0xf]
    %v1246 = vld [vmem:[#allocation8 + $0x30] sm:$0xf]
    %v1247 = vld [vmem:[#allocation8 + $0x34] sm:$0xf]
    %v1248 = vld [vmem:[#allocation8 + $0x38] sm:$0xf]
    %v1249 = vld [vmem:[#allocation8 + $0x3c] sm:$0xf]
    %v1250 = vld [vmem:[%s13] sm:$0x1]
    %v1252 = vperm.slane %v1250, 0
    %v1256 = vunpack.c.l.b16 %v1232
    %v1257 = vunpack.c.l.b16 %v1233
    %vm1258 = vcmask 1041409
    %v1259 = vsel %vm1258, %v1257, %v1256
    %v1260 = vpack.c.b16 %v1259, %v1259
    %v1278 = vunpack.c.l.b16 %v1234
    %v1279 = vunpack.c.l.b16 %v1235
    %v1280 = vunpack.c.l.b16 %v1236
    %v1281 = vunpack.c.l.b16 %v1237
    %v1282 = vunpack.c.l.b16 %v1238
    %v1283 = vunpack.c.l.b16 %v1239
    %v1284 = vunpack.c.l.b16 %v1240
    %v1285 = vunpack.c.l.b16 %v1241
    %v1286 = vunpack.c.l.b16 %v1242
    %v1287 = vunpack.c.l.b16 %v1243
    %v1288 = vunpack.c.l.b16 %v1244
    %v1289 = vunpack.c.l.b16 %v1245
    %v1290 = vunpack.c.l.b16 %v1246
    %v1291 = vunpack.c.l.b16 %v1247
    %v1292 = vunpack.c.l.b16 %v1248
    %v1293 = vunpack.c.l.b16 %v1249
    %v1294 = vpack.c.b16 %v1279, %v1278
    %v1295 = vpack.c.b16 %v1281, %v1280
    %v1296 = vpack.c.b16 %v1283, %v1282
    %v1297 = vpack.c.b16 %v1285, %v1284
    %v1298 = vpack.c.b16 %v1287, %v1286
    %v1299 = vpack.c.b16 %v1289, %v1288
    %v1300 = vpack.c.b16 %v1291, %v1290
    %v1301 = vpack.c.b16 %v1293, %v1292
    %1310 = vmatpush.bf16.msra.mxu0 %v1301
    %1311 = vmatpush.bf16.msra.mxu0 %v1300
    %1312 = vmatpush.bf16.msra.mxu0 %v1299
    %1313 = vmatpush.bf16.msra.mxu0 %v1298
    %1314 = vmatpush.bf16.msra.mxu0 %v1297
    %1315 = vmatpush.bf16.msra.mxu0 %v1296
    %1316 = vmatpush.bf16.msra.mxu0 %v1295
    %1317 = vmatpush.bf16.msra.mxu0 %v1294
    %1318 = vmatmul.bf16.gmra.mxu0 %v1260
    %v1319 = vpop.f32.mrf.mxu0
    %v1320 = vadd.f32 %v1252, %v1319
    %v1321 = vpop.f32.mrf.mxu0
    %1322 = vdwg.mxu0
    %1323 = vst [vmem:[#allocation10] sm:$0x3] %v1320
    // Predicated region
    $region80: #{tnet_as_forward.9} parent=1 // pred_check
      _
    $region81: #{tnet_as_forward.9} parent=1 // pred_check_branch
      %1325 = sbr.rel (0) target = $region83
    $region82: #{tnet_as_forward.9} parent=1 // pred_region
      %1327 = vsyncadd [#allocation7], 0
      %s1329 = sshll.u32 [#allocation10], 4
      %s1330 = int_to_ptr.vmem [resolvable:$true] %s1329
      %s1331 = sshll.u32 %s14, 4
      %s1332 = int_to_ptr.hbm [resolvable:$true] %s1331
      %1334 = dma.vmem_to_hbm [thread:$0]  %s1330, 32, %s1332, [#allocation7]
    $region83: #{tnet_as_forward.9} parent=1 // pred_fallthru
      _
    // Predicated region
    $region84: #{tnet_as_forward.9} parent=1 // pred_check
      _
    $region85: #{tnet_as_forward.9} parent=1 // pred_check_branch
      %1336 = sbr.rel (0) target = $region87
    $region86: #{tnet_as_forward.9} parent=1 // pred_region
      %1338 = dma.done [#allocation7], 32
    $region87: #{tnet_as_forward.9} parent=1 // pred_fallthru
      _
    %1339 = vsyncpa [#allocation6], 1
    %1340 = vsyncpa [#allocation9], 1
    %1341 = vsyncpa [#allocation7], 1

</llo_original>
